<compile_context>
chip_gen: v6e
topology: v6e:2x2x1
jax: 0.10.0
libtpu: 0.0.40
codegen_flags: <defaults>
</compile_context>

<pallas_src>
import jax
import jax.numpy as jnp
import numpy as np
from jax.experimental import pallas as pl
from jax.experimental.pallas import tpu as pltpu


def _lstm_classifier_kernel(x_ref, len_ref, wih_ref, whh_ref, b_ref,
                            w2_ref, b2_ref, out_ref,
                            gates_sc, h_sc, c_sc, hfin_sc):
    """One grid step = one (batch block, time chunk)."""
    c_idx = pl.program_id(1)
    n_chunks = pl.num_programs(1)

    Bb = out_ref.shape[0]
    H = whh_ref.shape[1]
    TcBb = x_ref.shape[2]
    Tc = TcBb // Bb

    # ---- init recurrent state at the first time chunk of each batch block ----
    @pl.when(c_idx == 0)
    def _():
        h_sc[...] = jnp.zeros_like(h_sc)
        c_sc[...] = jnp.zeros_like(c_sc)
        hfin_sc[...] = jnp.zeros_like(hfin_sc)

    # ---- Phase 0: input projection for the whole chunk, gate-major ----
    # (Tc*Bb, E) bf16 @ (E, H) bf16 -> f32, one matmul per gate, off the
    # sequential critical path.  Bias fused here (once per chunk).
    x2d = x_ref[0, 0]                                     # (Tc*Bb, E) bf16
    for g in range(4):
        gates_sc[g] = (
            jnp.dot(x2d, wih_ref[g], preferred_element_type=jnp.float32)
            + b_ref[g])                                   # (Tc*Bb, H) f32

    len_m1 = len_ref[...] - 1                             # (Bb, 1) int32
    t_base = c_idx * Tc

    # ---- Recurrence: only h @ W_hh (bf16 -> f32) + f32 gate math per step ----
    def step(l, carry):
        h, c, h_fin = carry
        row = pl.multiple_of(l * Bb, Bb)                  # sublane-aligned start
        hb = h.astype(jnp.bfloat16)

        g_i = gates_sc[0, pl.ds(row, Bb), :] + jnp.dot(
            hb, whh_ref[0], preferred_element_type=jnp.float32)
        g_f = gates_sc[1, pl.ds(row, Bb), :] + jnp.dot(
            hb, whh_ref[1], preferred_element_type=jnp.float32)
        g_g = gates_sc[2, pl.ds(row, Bb), :] + jnp.dot(
            hb, whh_ref[2], preferred_element_type=jnp.float32)
        g_o = gates_sc[3, pl.ds(row, Bb), :] + jnp.dot(
            hb, whh_ref[3], preferred_element_type=jnp.float32)

        # PyTorch LSTM gate order: i, f, g, o  (f32 nonlinearity + cell math)
        i_g = jax.nn.sigmoid(g_i)
        f_g = jax.nn.sigmoid(g_f)
        gg = jnp.tanh(g_g)
        o_g = jax.nn.sigmoid(g_o)

        c_new = f_g * c + i_g * gg
        h_new = o_g * jnp.tanh(c_new)

        # pack_padded_sequence semantics: keep h at global t == length - 1
        t_glob = t_base + l
        h_fin = jnp.where(len_m1 == t_glob, h_new, h_fin)
        return h_new, c_new, h_fin

    unroll = True if Tc <= 16 else 8
    h, c, h_fin = jax.lax.fori_loop(
        0, Tc, step, (h_sc[...], c_sc[...], hfin_sc[...]), unroll=unroll)
    h_sc[...] = h
    c_sc[...] = c
    hfin_sc[...] = h_fin

    # ---- Head at the last time chunk: ReLU -> hidden2tag -> log_softmax(2) ----
    @pl.when(c_idx == n_chunks - 1)
    def _():
        hr = jnp.maximum(hfin_sc[...], 0.0)
        logits = (jnp.dot(hr, w2_ref[...], preferred_element_type=jnp.float32)
                  + b2_ref[...])                           # (Bb, 2) f32
        # 2-class log_softmax without a cross-lane reduce.
        l0 = logits[:, 0:1]
        l1 = logits[:, 1:2]
        m = jnp.maximum(l0, l1)
        lse = m + jnp.log(jnp.exp(l0 - m) + jnp.exp(l1 - m))
        out_ref[...] = logits - lse


def _pick_block(n, cap, align=8):
    """Largest divisor of n that is <= cap and a multiple of `align`, else n."""
    if n <= cap:
        return n
    d = (min(n, cap) // align) * align
    while d >= align:
        if n % d == 0:
            return d
        d -= align
    return n


def lstm_classifier_forward(sentence, lengths, params, *,
                            b_blk_max=128, gates_vmem_budget=2 << 20):
    """sentence: (B, T) int32, lengths: (B,) int32. Returns (B, 2) f32 log-probs."""
    B, T = sentence.shape
    E = params["emb"].shape[1]
    H = params["whh"].shape[1]            # W_hh is (4H, H) -> H is dim 1

    # Batch block (outer, "parallel" -> v7x 2-TC sharding) and time chunk
    # (inner, "arbitrary" -> streamed, VMEM-bounded, double-buffered).
    b_blk = _pick_block(B, b_blk_max, align=8)
    nb = B // b_blk
    tc_cap = max(1, gates_vmem_budget // (4 * b_blk * H * 4))
    tc = _pick_block(T, tc_cap, align=1)
    nc = T // tc

    # Embedding lookup directly into the chunked, time-major layout:
    # block (i, c) row l*b_blk + j  <->  time t = c*tc + l, batch b = i*b_blk + j.
    # (Only the int32 ids get transposed; no (T,B,E) transpose materialization.)
    # TODO(synk): fuse the embedding gather into the kernel (per-chunk DMA gather).
    ids = (sentence.T.reshape(nc, tc, nb, b_blk)
           .transpose(2, 0, 1, 3)
           .reshape(nb, nc, tc * b_blk))
    x = jnp.take(params["emb"], ids, axis=0).astype(jnp.bfloat16)   # (nb,nc,tc*b_blk,E)

    # Gate-major weights, bf16 MXU operands, f32 bias.
    wih_g = params["wih"].reshape(4, H, E).transpose(0, 2, 1).astype(jnp.bfloat16)  # (4,E,H)
    whh_g = params["whh"].reshape(4, H, H).transpose(0, 2, 1).astype(jnp.bfloat16)  # (4,H,H)
    bias_g = (params["bih"] + params["bhh"]).reshape(4, 1, H).astype(jnp.float32)   # (4,1,H)
    w2_t = params["w2"].T.astype(jnp.float32)                                        # (H,2)
    b2 = params["b2"].reshape(1, 2).astype(jnp.float32)                              # (1,2)
    len_col = lengths.astype(jnp.int32).reshape(B, 1)                                # (B,1)

    # Explicit VMEM budget (chunked slabs + weights + state), generous headroom.
    x_blk_bytes = tc * b_blk * E * 2
    gates_bytes = 4 * tc * b_blk * H * 4
    weights_bytes = (4 * E * H + 4 * H * H) * 2 + 4 * H * 4 + H * 2 * 4 + 2 * 4
    state_bytes = 3 * b_blk * H * 4 + b_blk * 2 * 4
    need = 2 * x_blk_bytes + gates_bytes + weights_bytes + state_bytes + (1 << 20)
    vmem_limit = int(min(max(2 * need, 32 << 20), 96 << 20))

    return pl.pallas_call(
        _lstm_classifier_kernel,
        out_shape=jax.ShapeDtypeStruct((B, 2), jnp.float32),
        grid=(nb, nc),
        in_specs=[
            pl.BlockSpec((1, 1, tc * b_blk, E), lambda i, c: (i, c, 0, 0)),  # x chunk
            pl.BlockSpec((b_blk, 1), lambda i, c: (i, 0)),                    # lengths
            pl.BlockSpec((4, E, H), lambda i, c: (0, 0, 0)),                  # W_ih (gate-major)
            pl.BlockSpec((4, H, H), lambda i, c: (0, 0, 0)),                  # W_hh (gate-major)
            pl.BlockSpec((4, 1, H), lambda i, c: (0, 0, 0)),                  # bias
            pl.BlockSpec((H, 2), lambda i, c: (0, 0)),                        # hidden2tag W^T
            pl.BlockSpec((1, 2), lambda i, c: (0, 0)),                        # hidden2tag b
        ],
        out_specs=pl.BlockSpec((b_blk, 2), lambda i, c: (i, 0)),
        scratch_shapes=[
            pltpu.VMEM((4, tc * b_blk, H), jnp.float32),   # gates_x for current chunk
            pltpu.VMEM((b_blk, H), jnp.float32),           # h
            pltpu.VMEM((b_blk, H), jnp.float32),           # c
            pltpu.VMEM((b_blk, H), jnp.float32),           # h at t = length-1
        ],
        compiler_params=pltpu.CompilerParams(
            dimension_semantics=("parallel", "arbitrary"),
            vmem_limit_bytes=vmem_limit),
    )(x, len_col, wih_g, whh_g, bias_g, w2_t, b2)


def reference_forward(sentence, lengths, params):
    """Pure-JAX f32 reference replicating the PyTorch module semantics."""
    emb = jnp.take(params["emb"], sentence, axis=0)   # (B, T, E)
    B, T, _ = emb.shape
    H = params["whh"].shape[1]
    h = jnp.zeros((B, H), jnp.float32)
    c = jnp.zeros((B, H), jnp.float32)

    def step(carry, x_t):
        h, c = carry
        gates = (x_t @ params["wih"].T + params["bih"]
                 + h @ params["whh"].T + params["bhh"])
        i, f, g, o = jnp.split(gates, 4, axis=1)
        i = jax.nn.sigmoid(i)
        f = jax.nn.sigmoid(f)
        g = jnp.tanh(g)
        o = jax.nn.sigmoid(o)
        c = f * c + i * g
        h = o * jnp.tanh(c)
        return (h, c), h

    _, hs = jax.lax.scan(step, (h, c), jnp.transpose(emb, (1, 0, 2)))
    hs = jnp.transpose(hs, (1, 0, 2))                 # (B, T, H)
    out = hs[jnp.arange(B), lengths - 1, :]
    out = jnp.maximum(out, 0.0)
    logits = out @ params["w2"].T + params["b2"]
    return jax.nn.log_softmax(logits, axis=1)


def init_params(key, vocab_size, embedding_dim, hidden_dim):
    ks = jax.random.split(key, 7)
    scale = 1.0 / np.sqrt(hidden_dim)
    return {
        "emb": jax.random.normal(ks[0], (vocab_size, embedding_dim), jnp.float32),
        "wih": jax.random.uniform(ks[1], (4 * hidden_dim, embedding_dim),
                                  jnp.float32, -scale, scale),
        "whh": jax.random.uniform(ks[2], (4 * hidden_dim, hidden_dim),
                                  jnp.float32, -scale, scale),
        "bih": jax.random.uniform(ks[3], (4 * hidden_dim,), jnp.float32, -scale, scale),
        "bhh": jax.random.uniform(ks[4], (4 * hidden_dim,), jnp.float32, -scale, scale),
        "w2": jax.random.uniform(ks[5], (2, hidden_dim), jnp.float32, -scale, scale),
        "b2": jax.random.uniform(ks[6], (2,), jnp.float32, -scale, scale),
    }


if __name__ == "__main__":
    B, T = 8, 8
    VOCAB, E, H = 50, 16, 32

    key = jax.random.PRNGKey(0)
    k_params, k_sent = jax.random.split(key)
    params = init_params(k_params, VOCAB, E, H)

    sentence = jax.random.randint(k_sent, (B, T), 0, VOCAB, dtype=jnp.int32)
    # sorted-descending lengths in [1, T], matching pack_padded_sequence defaults
    lengths = jnp.array(sorted([T, T - 1, T - 2, 6, 5, 4, 3, 2], reverse=True),
                        dtype=jnp.int32)

    out = jax.block_until_ready(lstm_classifier_forward(sentence, lengths, params))
    ref = jax.block_until_ready(reference_forward(sentence, lengths, params))
    # bf16 MXU operands vs. the f32 reference: loose tolerance.
    np.testing.assert_allclose(np.asarray(out), np.asarray(ref), rtol=5e-2, atol=5e-2)

    print("KERNEL_OK")
</pallas_src>

<mosaic_0001>
module attributes {stable_mosaic.version = 11 : i64} {
  func.func @_lstm_classifier_kernel(%arg0: i32, %arg1: i32, %arg2: memref<1x1x64x16xbf16, #tpu.memory_space<vmem>>, %arg3: memref<8x1xi32, #tpu.memory_space<vmem>>, %arg4: memref<4x16x32xbf16, #tpu.memory_space<vmem>>, %arg5: memref<4x32x32xbf16, #tpu.memory_space<vmem>>, %arg6: memref<4x1x32xf32, #tpu.memory_space<vmem>>, %arg7: memref<32x2xf32, #tpu.memory_space<vmem>>, %arg8: memref<1x2xf32, #tpu.memory_space<vmem>>, %arg9: memref<8x2xf32, #tpu.memory_space<vmem>>, %arg10: memref<4x64x32xf32, #tpu.memory_space<vmem>>, %arg11: memref<8x32xf32, #tpu.memory_space<vmem>>, %arg12: memref<8x32xf32, #tpu.memory_space<vmem>>, %arg13: memref<8x32xf32, #tpu.memory_space<vmem>>) attributes {dimension_semantics = [#tpu.dimension_semantics<parallel>, #tpu.dimension_semantics<arbitrary>], iteration_bounds = array<i64: 1, 1>, scalar_prefetch = 0 : i64, scratch_operands = 4 : i64, tpu.core_type = #tpu.core_type<tc>, window_params = [{transform_indices = @transform_0, window_bounds = array<i64: 1, 1, 64, 16>}, {transform_indices = @transform_1, window_bounds = array<i64: 8, 1>}, {pipeline_mode = #tpu.pipeline_mode<synchronous>, transform_indices = @transform_2, window_bounds = array<i64: 4, 16, 32>}, {pipeline_mode = #tpu.pipeline_mode<synchronous>, transform_indices = @transform_3, window_bounds = array<i64: 4, 32, 32>}, {pipeline_mode = #tpu.pipeline_mode<synchronous>, transform_indices = @transform_4, window_bounds = array<i64: 4, 1, 32>}, {pipeline_mode = #tpu.pipeline_mode<synchronous>, transform_indices = @transform_5, window_bounds = array<i64: 32, 2>}, {pipeline_mode = #tpu.pipeline_mode<synchronous>, transform_indices = @transform_6, window_bounds = array<i64: 1, 2>}, {transform_indices = @transform_7, window_bounds = array<i64: 8, 2>}]} {
    %c0_i32 = arith.constant 0 : i32
    %0 = arith.cmpi eq, %arg1, %c0_i32 : i32
    %1 = arith.extui %0 : i1 to i32
    %c0_i32_0 = arith.constant 0 : i32
    %2 = arith.cmpi ne, %1, %c0_i32_0 : i32
    scf.if %2 {
      %cst_283 = arith.constant 0.000000e+00 : f32
      %522 = vector.broadcast %cst_283 : f32 to vector<8x32xf32>
      %c0_284 = arith.constant 0 : index
      %c0_285 = arith.constant 0 : index
      %523 = vector.load %arg11[%c0_284, %c0_285] : memref<8x32xf32, #tpu.memory_space<vmem>>, vector<8x32xf32>
      tpu.vector_store %arg11[%c0_284, %c0_285], %522 {strides = array<i32>} : memref<8x32xf32, #tpu.memory_space<vmem>>, vector<8x32xf32>,
      %cst_286 = arith.constant 0.000000e+00 : f32
      %524 = vector.broadcast %cst_286 : f32 to vector<8x32xf32>
      %c0_287 = arith.constant 0 : index
      %c0_288 = arith.constant 0 : index
      %525 = vector.load %arg12[%c0_287, %c0_288] : memref<8x32xf32, #tpu.memory_space<vmem>>, vector<8x32xf32>
      tpu.vector_store %arg12[%c0_287, %c0_288], %524 {strides = array<i32>} : memref<8x32xf32, #tpu.memory_space<vmem>>, vector<8x32xf32>,
      %cst_289 = arith.constant 0.000000e+00 : f32
      %526 = vector.broadcast %cst_289 : f32 to vector<8x32xf32>
      %c0_290 = arith.constant 0 : index
      %c0_291 = arith.constant 0 : index
      %527 = vector.load %arg13[%c0_290, %c0_291] : memref<8x32xf32, #tpu.memory_space<vmem>>, vector<8x32xf32>
      tpu.vector_store %arg13[%c0_290, %c0_291], %526 {strides = array<i32>} : memref<8x32xf32, #tpu.memory_space<vmem>>, vector<8x32xf32>,
    } else {
    }
    %c0 = arith.constant 0 : index
    %c0_1 = arith.constant 0 : index
    %c0_2 = arith.constant 0 : index
    %c0_3 = arith.constant 0 : index
    %3 = vector.load %arg2[%c0, %c0_1, %c0_2, %c0_3] : memref<1x1x64x16xbf16, #tpu.memory_space<vmem>>, vector<1x1x64x16xbf16>
    %4 = vector.shape_cast %3 : vector<1x1x64x16xbf16> to vector<64x16xbf16>
    %c0_4 = arith.constant 0 : index
    %c0_5 = arith.constant 0 : index
    %c0_6 = arith.constant 0 : index
    %5 = vector.load %arg4[%c0_4, %c0_5, %c0_6] : memref<4x16x32xbf16, #tpu.memory_space<vmem>>, vector<1x16x32xbf16>
    %6 = vector.shape_cast %5 : vector<1x16x32xbf16> to vector<16x32xbf16>
    %cst = arith.constant dense<0.000000e+00> : vector<64x32xf32>
    %7 = tpu.matmul %4, %6, %cst {dimension_numbers = #tpu.dot_dimension_numbers<[1], [0], [0], [1], [0, 0, 1, 1], [], []>} : vector<64x16xbf16>, vector<16x32xbf16>, vector<64x32xf32> -> vector<64x32xf32>
    %c0_7 = arith.constant 0 : index
    %c0_8 = arith.constant 0 : index
    %c0_9 = arith.constant 0 : index
    %8 = vector.load %arg6[%c0_7, %c0_8, %c0_9] : memref<4x1x32xf32, #tpu.memory_space<vmem>>, vector<1x1x32xf32>
    %9 = vector.shape_cast %8 : vector<1x1x32xf32> to vector<1x32xf32>
    %10 = vector.broadcast %9 : vector<1x32xf32> to vector<64x32xf32>
    %11 = arith.addf %7, %10 : vector<64x32xf32>
    %c0_10 = arith.constant 0 : index
    %c0_11 = arith.constant 0 : index
    %c0_12 = arith.constant 0 : index
    %12 = vector.load %arg10[%c0_10, %c0_11, %c0_12] : memref<4x64x32xf32, #tpu.memory_space<vmem>>, vector<1x64x32xf32>
    %13 = vector.shape_cast %12 : vector<1x64x32xf32> to vector<64x32xf32>
    %14 = vector.shape_cast %11 : vector<64x32xf32> to vector<1x64x32xf32>
    tpu.vector_store %arg10[%c0_10, %c0_11, %c0_12], %14 {strides = array<i32>} : memref<4x64x32xf32, #tpu.memory_space<vmem>>, vector<1x64x32xf32>,
    %c1 = arith.constant 1 : index
    %c0_13 = arith.constant 0 : index
    %c0_14 = arith.constant 0 : index
    %15 = vector.load %arg4[%c1, %c0_13, %c0_14] : memref<4x16x32xbf16, #tpu.memory_space<vmem>>, vector<1x16x32xbf16>
    %16 = vector.shape_cast %15 : vector<1x16x32xbf16> to vector<16x32xbf16>
    %cst_15 = arith.constant dense<0.000000e+00> : vector<64x32xf32>
    %17 = tpu.matmul %4, %16, %cst_15 {dimension_numbers = #tpu.dot_dimension_numbers<[1], [0], [0], [1], [0, 0, 1, 1], [], []>} : vector<64x16xbf16>, vector<16x32xbf16>, vector<64x32xf32> -> vector<64x32xf32>
    %c1_16 = arith.constant 1 : index
    %c0_17 = arith.constant 0 : index
    %c0_18 = arith.constant 0 : index
    %18 = vector.load %arg6[%c1_16, %c0_17, %c0_18] : memref<4x1x32xf32, #tpu.memory_space<vmem>>, vector<1x1x32xf32>
    %19 = vector.shape_cast %18 : vector<1x1x32xf32> to vector<1x32xf32>
    %20 = vector.broadcast %19 : vector<1x32xf32> to vector<64x32xf32>
    %21 = arith.addf %17, %20 : vector<64x32xf32>
    %c1_19 = arith.constant 1 : index
    %c0_20 = arith.constant 0 : index
    %c0_21 = arith.constant 0 : index
    %22 = vector.load %arg10[%c1_19, %c0_20, %c0_21] : memref<4x64x32xf32, #tpu.memory_space<vmem>>, vector<1x64x32xf32>
    %23 = vector.shape_cast %22 : vector<1x64x32xf32> to vector<64x32xf32>
    %24 = vector.shape_cast %21 : vector<64x32xf32> to vector<1x64x32xf32>
    tpu.vector_store %arg10[%c1_19, %c0_20, %c0_21], %24 {strides = array<i32>} : memref<4x64x32xf32, #tpu.memory_space<vmem>>, vector<1x64x32xf32>,
    %c2 = arith.constant 2 : index
    %c0_22 = arith.constant 0 : index
    %c0_23 = arith.constant 0 : index
    %25 = vector.load %arg4[%c2, %c0_22, %c0_23] : memref<4x16x32xbf16, #tpu.memory_space<vmem>>, vector<1x16x32xbf16>
    %26 = vector.shape_cast %25 : vector<1x16x32xbf16> to vector<16x32xbf16>
    %cst_24 = arith.constant dense<0.000000e+00> : vector<64x32xf32>
    %27 = tpu.matmul %4, %26, %cst_24 {dimension_numbers = #tpu.dot_dimension_numbers<[1], [0], [0], [1], [0, 0, 1, 1], [], []>} : vector<64x16xbf16>, vector<16x32xbf16>, vector<64x32xf32> -> vector<64x32xf32>
    %c2_25 = arith.constant 2 : index
    %c0_26 = arith.constant 0 : index
    %c0_27 = arith.constant 0 : index
    %28 = vector.load %arg6[%c2_25, %c0_26, %c0_27] : memref<4x1x32xf32, #tpu.memory_space<vmem>>, vector<1x1x32xf32>
    %29 = vector.shape_cast %28 : vector<1x1x32xf32> to vector<1x32xf32>
    %30 = vector.broadcast %29 : vector<1x32xf32> to vector<64x32xf32>
    %31 = arith.addf %27, %30 : vector<64x32xf32>
    %c2_28 = arith.constant 2 : index
    %c0_29 = arith.constant 0 : index
    %c0_30 = arith.constant 0 : index
    %32 = vector.load %arg10[%c2_28, %c0_29, %c0_30] : memref<4x64x32xf32, #tpu.memory_space<vmem>>, vector<1x64x32xf32>
    %33 = vector.shape_cast %32 : vector<1x64x32xf32> to vector<64x32xf32>
    %34 = vector.shape_cast %31 : vector<64x32xf32> to vector<1x64x32xf32>
    tpu.vector_store %arg10[%c2_28, %c0_29, %c0_30], %34 {strides = array<i32>} : memref<4x64x32xf32, #tpu.memory_space<vmem>>, vector<1x64x32xf32>,
    %c3 = arith.constant 3 : index
    %c0_31 = arith.constant 0 : index
    %c0_32 = arith.constant 0 : index
    %35 = vector.load %arg4[%c3, %c0_31, %c0_32] : memref<4x16x32xbf16, #tpu.memory_space<vmem>>, vector<1x16x32xbf16>
    %36 = vector.shape_cast %35 : vector<1x16x32xbf16> to vector<16x32xbf16>
    %cst_33 = arith.constant dense<0.000000e+00> : vector<64x32xf32>
    %37 = tpu.matmul %4, %36, %cst_33 {dimension_numbers = #tpu.dot_dimension_numbers<[1], [0], [0], [1], [0, 0, 1, 1], [], []>} : vector<64x16xbf16>, vector<16x32xbf16>, vector<64x32xf32> -> vector<64x32xf32>
    %c3_34 = arith.constant 3 : index
    %c0_35 = arith.constant 0 : index
    %c0_36 = arith.constant 0 : index
    %38 = vector.load %arg6[%c3_34, %c0_35, %c0_36] : memref<4x1x32xf32, #tpu.memory_space<vmem>>, vector<1x1x32xf32>
    %39 = vector.shape_cast %38 : vector<1x1x32xf32> to vector<1x32xf32>
    %40 = vector.broadcast %39 : vector<1x32xf32> to vector<64x32xf32>
    %41 = arith.addf %37, %40 : vector<64x32xf32>
    %c3_37 = arith.constant 3 : index
    %c0_38 = arith.constant 0 : index
    %c0_39 = arith.constant 0 : index
    %42 = vector.load %arg10[%c3_37, %c0_38, %c0_39] : memref<4x64x32xf32, #tpu.memory_space<vmem>>, vector<1x64x32xf32>
    %43 = vector.shape_cast %42 : vector<1x64x32xf32> to vector<64x32xf32>
    %44 = vector.shape_cast %41 : vector<64x32xf32> to vector<1x64x32xf32>
    tpu.vector_store %arg10[%c3_37, %c0_38, %c0_39], %44 {strides = array<i32>} : memref<4x64x32xf32, #tpu.memory_space<vmem>>, vector<1x64x32xf32>,
    %c0_40 = arith.constant 0 : index
    %c0_41 = arith.constant 0 : index
    %45 = vector.load %arg3[%c0_40, %c0_41] : memref<8x1xi32, #tpu.memory_space<vmem>>, vector<8x1xi32>
    %c1_i32 = arith.constant 1 : i32
    %46 = vector.broadcast %c1_i32 : i32 to vector<8x1xi32>
    %47 = arith.subi %45, %46 : vector<8x1xi32>
    %c8_i32 = arith.constant 8 : i32
    %48 = arith.muli %arg1, %c8_i32 : i32
    %c0_42 = arith.constant 0 : index
    %c0_43 = arith.constant 0 : index
    %49 = vector.load %arg11[%c0_42, %c0_43] : memref<8x32xf32, #tpu.memory_space<vmem>>, vector<8x32xf32>
    %c0_44 = arith.constant 0 : index
    %c0_45 = arith.constant 0 : index
    %50 = vector.load %arg12[%c0_44, %c0_45] : memref<8x32xf32, #tpu.memory_space<vmem>>, vector<8x32xf32>
    %c0_46 = arith.constant 0 : index
    %c0_47 = arith.constant 0 : index
    %51 = vector.load %arg13[%c0_46, %c0_47] : memref<8x32xf32, #tpu.memory_space<vmem>>, vector<8x32xf32>
    %c0_i32_48 = arith.constant 0 : i32
    %c8_i32_49 = arith.constant 8 : i32
    %52 = arith.muli %c0_i32_48, %c8_i32_49 : i32
    %53 = tpu.assume_multiple %52, 8 : i32
    %54 = arith.truncf %49 : vector<8x32xf32> to vector<8x32xbf16>
    %c0_50 = arith.constant 0 : index
    %55 = arith.index_cast %53 : i32 to index
    %c0_51 = arith.constant 0 : index
    %56 = vector.load %arg10[%c0_50, %55, %c0_51] : memref<4x64x32xf32, #tpu.memory_space<vmem>>, vector<1x8x32xf32>
    %57 = vector.shape_cast %56 : vector<1x8x32xf32> to vector<8x32xf32>
    %c0_52 = arith.constant 0 : index
    %c0_53 = arith.constant 0 : index
    %c0_54 = arith.constant 0 : index
    %58 = vector.load %arg5[%c0_52, %c0_53, %c0_54] : memref<4x32x32xbf16, #tpu.memory_space<vmem>>, vector<1x32x32xbf16>
    %59 = vector.shape_cast %58 : vector<1x32x32xbf16> to vector<32x32xbf16>
    %cst_55 = arith.constant dense<0.000000e+00> : vector<8x32xf32>
    %60 = tpu.matmul %54, %59, %cst_55 {dimension_numbers = #tpu.dot_dimension_numbers<[1], [0], [0], [1], [0, 0, 1, 1], [], []>} : vector<8x32xbf16>, vector<32x32xbf16>, vector<8x32xf32> -> vector<8x32xf32>
    %61 = arith.addf %57, %60 : vector<8x32xf32>
    %c1_56 = arith.constant 1 : index
    %62 = arith.index_cast %53 : i32 to index
    %c0_57 = arith.constant 0 : index
    %63 = vector.load %arg10[%c1_56, %62, %c0_57] : memref<4x64x32xf32, #tpu.memory_space<vmem>>, vector<1x8x32xf32>
    %64 = vector.shape_cast %63 : vector<1x8x32xf32> to vector<8x32xf32>
    %c1_58 = arith.constant 1 : index
    %c0_59 = arith.constant 0 : index
    %c0_60 = arith.constant 0 : index
    %65 = vector.load %arg5[%c1_58, %c0_59, %c0_60] : memref<4x32x32xbf16, #tpu.memory_space<vmem>>, vector<1x32x32xbf16>
    %66 = vector.shape_cast %65 : vector<1x32x32xbf16> to vector<32x32xbf16>
    %cst_61 = arith.constant dense<0.000000e+00> : vector<8x32xf32>
    %67 = tpu.matmul %54, %66, %cst_61 {dimension_numbers = #tpu.dot_dimension_numbers<[1], [0], [0], [1], [0, 0, 1, 1], [], []>} : vector<8x32xbf16>, vector<32x32xbf16>, vector<8x32xf32> -> vector<8x32xf32>
    %68 = arith.addf %64, %67 : vector<8x32xf32>
    %c2_62 = arith.constant 2 : index
    %69 = arith.index_cast %53 : i32 to index
    %c0_63 = arith.constant 0 : index
    %70 = vector.load %arg10[%c2_62, %69, %c0_63] : memref<4x64x32xf32, #tpu.memory_space<vmem>>, vector<1x8x32xf32>
    %71 = vector.shape_cast %70 : vector<1x8x32xf32> to vector<8x32xf32>
    %c2_64 = arith.constant 2 : index
    %c0_65 = arith.constant 0 : index
    %c0_66 = arith.constant 0 : index
    %72 = vector.load %arg5[%c2_64, %c0_65, %c0_66] : memref<4x32x32xbf16, #tpu.memory_space<vmem>>, vector<1x32x32xbf16>
    %73 = vector.shape_cast %72 : vector<1x32x32xbf16> to vector<32x32xbf16>
    %cst_67 = arith.constant dense<0.000000e+00> : vector<8x32xf32>
    %74 = tpu.matmul %54, %73, %cst_67 {dimension_numbers = #tpu.dot_dimension_numbers<[1], [0], [0], [1], [0, 0, 1, 1], [], []>} : vector<8x32xbf16>, vector<32x32xbf16>, vector<8x32xf32> -> vector<8x32xf32>
    %75 = arith.addf %71, %74 : vector<8x32xf32>
    %c3_68 = arith.constant 3 : index
    %76 = arith.index_cast %53 : i32 to index
    %c0_69 = arith.constant 0 : index
    %77 = vector.load %arg10[%c3_68, %76, %c0_69] : memref<4x64x32xf32, #tpu.memory_space<vmem>>, vector<1x8x32xf32>
    %78 = vector.shape_cast %77 : vector<1x8x32xf32> to vector<8x32xf32>
    %c3_70 = arith.constant 3 : index
    %c0_71 = arith.constant 0 : index
    %c0_72 = arith.constant 0 : index
    %79 = vector.load %arg5[%c3_70, %c0_71, %c0_72] : memref<4x32x32xbf16, #tpu.memory_space<vmem>>, vector<1x32x32xbf16>
    %80 = vector.shape_cast %79 : vector<1x32x32xbf16> to vector<32x32xbf16>
    %cst_73 = arith.constant dense<0.000000e+00> : vector<8x32xf32>
    %81 = tpu.matmul %54, %80, %cst_73 {dimension_numbers = #tpu.dot_dimension_numbers<[1], [0], [0], [1], [0, 0, 1, 1], [], []>} : vector<8x32xbf16>, vector<32x32xbf16>, vector<8x32xf32> -> vector<8x32xf32>
    %82 = arith.addf %78, %81 : vector<8x32xf32>
    %83 = arith.negf %61 : vector<8x32xf32>
    %84 = math.exp %83 : vector<8x32xf32>
    %cst_74 = arith.constant 1.000000e+00 : f32
    %85 = vector.broadcast %cst_74 : f32 to vector<8x32xf32>
    %86 = arith.addf %85, %84 : vector<8x32xf32>
    %87 = arith.divf %85, %86 : vector<8x32xf32>
    %88 = arith.negf %68 : vector<8x32xf32>
    %89 = math.exp %88 : vector<8x32xf32>
    %cst_75 = arith.constant 1.000000e+00 : f32
    %90 = vector.broadcast %cst_75 : f32 to vector<8x32xf32>
    %91 = arith.addf %90, %89 : vector<8x32xf32>
    %92 = arith.divf %90, %91 : vector<8x32xf32>
    %93 = math.tanh %75 : vector<8x32xf32>
    %94 = arith.negf %82 : vector<8x32xf32>
    %95 = math.exp %94 : vector<8x32xf32>
    %cst_76 = arith.constant 1.000000e+00 : f32
    %96 = vector.broadcast %cst_76 : f32 to vector<8x32xf32>
    %97 = arith.addf %96, %95 : vector<8x32xf32>
    %98 = arith.divf %96, %97 : vector<8x32xf32>
    %99 = arith.mulf %92, %50 : vector<8x32xf32>
    %100 = arith.mulf %87, %93 : vector<8x32xf32>
    %101 = arith.addf %99, %100 : vector<8x32xf32>
    %102 = math.tanh %101 : vector<8x32xf32>
    %103 = arith.mulf %98, %102 : vector<8x32xf32>
    %104 = arith.addi %48, %c0_i32_48 : i32
    %105 = vector.broadcast %104 : i32 to vector<8x1xi32>
    %106 = arith.cmpi eq, %47, %105 : vector<8x1xi32>
    %107 = vector.shape_cast %106 : vector<8x1xi1> to vector<8x1xi1>
    %108 = vector.broadcast %107 : vector<8x1xi1> to vector<8x32xi1>
    %109 = arith.select %108, %103, %51 : vector<8x32xi1>, vector<8x32xf32>
    %c1_i32_77 = arith.constant 1 : i32
    %c8_i32_78 = arith.constant 8 : i32
    %110 = arith.muli %c1_i32_77, %c8_i32_78 : i32
    %111 = tpu.assume_multiple %110, 8 : i32
    %112 = arith.truncf %103 : vector<8x32xf32> to vector<8x32xbf16>
    %c0_79 = arith.constant 0 : index
    %113 = arith.index_cast %111 : i32 to index
    %c0_80 = arith.constant 0 : index
    %114 = vector.load %arg10[%c0_79, %113, %c0_80] : memref<4x64x32xf32, #tpu.memory_space<vmem>>, vector<1x8x32xf32>
    %115 = vector.shape_cast %114 : vector<1x8x32xf32> to vector<8x32xf32>
    %c0_81 = arith.constant 0 : index
    %c0_82 = arith.constant 0 : index
    %c0_83 = arith.constant 0 : index
    %116 = vector.load %arg5[%c0_81, %c0_82, %c0_83] : memref<4x32x32xbf16, #tpu.memory_space<vmem>>, vector<1x32x32xbf16>
    %117 = vector.shape_cast %116 : vector<1x32x32xbf16> to vector<32x32xbf16>
    %cst_84 = arith.constant dense<0.000000e+00> : vector<8x32xf32>
    %118 = tpu.matmul %112, %117, %cst_84 {dimension_numbers = #tpu.dot_dimension_numbers<[1], [0], [0], [1], [0, 0, 1, 1], [], []>} : vector<8x32xbf16>, vector<32x32xbf16>, vector<8x32xf32> -> vector<8x32xf32>
    %119 = arith.addf %115, %118 : vector<8x32xf32>
    %c1_85 = arith.constant 1 : index
    %120 = arith.index_cast %111 : i32 to index
    %c0_86 = arith.constant 0 : index
    %121 = vector.load %arg10[%c1_85, %120, %c0_86] : memref<4x64x32xf32, #tpu.memory_space<vmem>>, vector<1x8x32xf32>
    %122 = vector.shape_cast %121 : vector<1x8x32xf32> to vector<8x32xf32>
    %c1_87 = arith.constant 1 : index
    %c0_88 = arith.constant 0 : index
    %c0_89 = arith.constant 0 : index
    %123 = vector.load %arg5[%c1_87, %c0_88, %c0_89] : memref<4x32x32xbf16, #tpu.memory_space<vmem>>, vector<1x32x32xbf16>
    %124 = vector.shape_cast %123 : vector<1x32x32xbf16> to vector<32x32xbf16>
    %cst_90 = arith.constant dense<0.000000e+00> : vector<8x32xf32>
    %125 = tpu.matmul %112, %124, %cst_90 {dimension_numbers = #tpu.dot_dimension_numbers<[1], [0], [0], [1], [0, 0, 1, 1], [], []>} : vector<8x32xbf16>, vector<32x32xbf16>, vector<8x32xf32> -> vector<8x32xf32>
    %126 = arith.addf %122, %125 : vector<8x32xf32>
    %c2_91 = arith.constant 2 : index
    %127 = arith.index_cast %111 : i32 to index
    %c0_92 = arith.constant 0 : index
    %128 = vector.load %arg10[%c2_91, %127, %c0_92] : memref<4x64x32xf32, #tpu.memory_space<vmem>>, vector<1x8x32xf32>
    %129 = vector.shape_cast %128 : vector<1x8x32xf32> to vector<8x32xf32>
    %c2_93 = arith.constant 2 : index
    %c0_94 = arith.constant 0 : index
    %c0_95 = arith.constant 0 : index
    %130 = vector.load %arg5[%c2_93, %c0_94, %c0_95] : memref<4x32x32xbf16, #tpu.memory_space<vmem>>, vector<1x32x32xbf16>
    %131 = vector.shape_cast %130 : vector<1x32x32xbf16> to vector<32x32xbf16>
    %cst_96 = arith.constant dense<0.000000e+00> : vector<8x32xf32>
    %132 = tpu.matmul %112, %131, %cst_96 {dimension_numbers = #tpu.dot_dimension_numbers<[1], [0], [0], [1], [0, 0, 1, 1], [], []>} : vector<8x32xbf16>, vector<32x32xbf16>, vector<8x32xf32> -> vector<8x32xf32>
    %133 = arith.addf %129, %132 : vector<8x32xf32>
    %c3_97 = arith.constant 3 : index
    %134 = arith.index_cast %111 : i32 to index
    %c0_98 = arith.constant 0 : index
    %135 = vector.load %arg10[%c3_97, %134, %c0_98] : memref<4x64x32xf32, #tpu.memory_space<vmem>>, vector<1x8x32xf32>
    %136 = vector.shape_cast %135 : vector<1x8x32xf32> to vector<8x32xf32>
    %c3_99 = arith.constant 3 : index
    %c0_100 = arith.constant 0 : index
    %c0_101 = arith.constant 0 : index
    %137 = vector.load %arg5[%c3_99, %c0_100, %c0_101] : memref<4x32x32xbf16, #tpu.memory_space<vmem>>, vector<1x32x32xbf16>
    %138 = vector.shape_cast %137 : vector<1x32x32xbf16> to vector<32x32xbf16>
    %cst_102 = arith.constant dense<0.000000e+00> : vector<8x32xf32>
    %139 = tpu.matmul %112, %138, %cst_102 {dimension_numbers = #tpu.dot_dimension_numbers<[1], [0], [0], [1], [0, 0, 1, 1], [], []>} : vector<8x32xbf16>, vector<32x32xbf16>, vector<8x32xf32> -> vector<8x32xf32>
    %140 = arith.addf %136, %139 : vector<8x32xf32>
    %141 = arith.negf %119 : vector<8x32xf32>
    %142 = math.exp %141 : vector<8x32xf32>
    %cst_103 = arith.constant 1.000000e+00 : f32
    %143 = vector.broadcast %cst_103 : f32 to vector<8x32xf32>
    %144 = arith.addf %143, %142 : vector<8x32xf32>
    %145 = arith.divf %143, %144 : vector<8x32xf32>
    %146 = arith.negf %126 : vector<8x32xf32>
    %147 = math.exp %146 : vector<8x32xf32>
    %cst_104 = arith.constant 1.000000e+00 : f32
    %148 = vector.broadcast %cst_104 : f32 to vector<8x32xf32>
    %149 = arith.addf %148, %147 : vector<8x32xf32>
    %150 = arith.divf %148, %149 : vector<8x32xf32>
    %151 = math.tanh %133 : vector<8x32xf32>
    %152 = arith.negf %140 : vector<8x32xf32>
    %153 = math.exp %152 : vector<8x32xf32>
    %cst_105 = arith.constant 1.000000e+00 : f32
    %154 = vector.broadcast %cst_105 : f32 to vector<8x32xf32>
    %155 = arith.addf %154, %153 : vector<8x32xf32>
    %156 = arith.divf %154, %155 : vector<8x32xf32>
    %157 = arith.mulf %150, %101 : vector<8x32xf32>
    %158 = arith.mulf %145, %151 : vector<8x32xf32>
    %159 = arith.addf %157, %158 : vector<8x32xf32>
    %160 = math.tanh %159 : vector<8x32xf32>
    %161 = arith.mulf %156, %160 : vector<8x32xf32>
    %162 = arith.addi %48, %c1_i32_77 : i32
    %163 = vector.broadcast %162 : i32 to vector<8x1xi32>
    %164 = arith.cmpi eq, %47, %163 : vector<8x1xi32>
    %165 = vector.shape_cast %164 : vector<8x1xi1> to vector<8x1xi1>
    %166 = vector.broadcast %165 : vector<8x1xi1> to vector<8x32xi1>
    %167 = arith.select %166, %161, %109 : vector<8x32xi1>, vector<8x32xf32>
    %c2_i32 = arith.constant 2 : i32
    %c8_i32_106 = arith.constant 8 : i32
    %168 = arith.muli %c2_i32, %c8_i32_106 : i32
    %169 = tpu.assume_multiple %168, 8 : i32
    %170 = arith.truncf %161 : vector<8x32xf32> to vector<8x32xbf16>
    %c0_107 = arith.constant 0 : index
    %171 = arith.index_cast %169 : i32 to index
    %c0_108 = arith.constant 0 : index
    %172 = vector.load %arg10[%c0_107, %171, %c0_108] : memref<4x64x32xf32, #tpu.memory_space<vmem>>, vector<1x8x32xf32>
    %173 = vector.shape_cast %172 : vector<1x8x32xf32> to vector<8x32xf32>
    %c0_109 = arith.constant 0 : index
    %c0_110 = arith.constant 0 : index
    %c0_111 = arith.constant 0 : index
    %174 = vector.load %arg5[%c0_109, %c0_110, %c0_111] : memref<4x32x32xbf16, #tpu.memory_space<vmem>>, vector<1x32x32xbf16>
    %175 = vector.shape_cast %174 : vector<1x32x32xbf16> to vector<32x32xbf16>
    %cst_112 = arith.constant dense<0.000000e+00> : vector<8x32xf32>
    %176 = tpu.matmul %170, %175, %cst_112 {dimension_numbers = #tpu.dot_dimension_numbers<[1], [0], [0], [1], [0, 0, 1, 1], [], []>} : vector<8x32xbf16>, vector<32x32xbf16>, vector<8x32xf32> -> vector<8x32xf32>
    %177 = arith.addf %173, %176 : vector<8x32xf32>
    %c1_113 = arith.constant 1 : index
    %178 = arith.index_cast %169 : i32 to index
    %c0_114 = arith.constant 0 : index
    %179 = vector.load %arg10[%c1_113, %178, %c0_114] : memref<4x64x32xf32, #tpu.memory_space<vmem>>, vector<1x8x32xf32>
    %180 = vector.shape_cast %179 : vector<1x8x32xf32> to vector<8x32xf32>
    %c1_115 = arith.constant 1 : index
    %c0_116 = arith.constant 0 : index
    %c0_117 = arith.constant 0 : index
    %181 = vector.load %arg5[%c1_115, %c0_116, %c0_117] : memref<4x32x32xbf16, #tpu.memory_space<vmem>>, vector<1x32x32xbf16>
    %182 = vector.shape_cast %181 : vector<1x32x32xbf16> to vector<32x32xbf16>
    %cst_118 = arith.constant dense<0.000000e+00> : vector<8x32xf32>
    %183 = tpu.matmul %170, %182, %cst_118 {dimension_numbers = #tpu.dot_dimension_numbers<[1], [0], [0], [1], [0, 0, 1, 1], [], []>} : vector<8x32xbf16>, vector<32x32xbf16>, vector<8x32xf32> -> vector<8x32xf32>
    %184 = arith.addf %180, %183 : vector<8x32xf32>
    %c2_119 = arith.constant 2 : index
    %185 = arith.index_cast %169 : i32 to index
    %c0_120 = arith.constant 0 : index
    %186 = vector.load %arg10[%c2_119, %185, %c0_120] : memref<4x64x32xf32, #tpu.memory_space<vmem>>, vector<1x8x32xf32>
    %187 = vector.shape_cast %186 : vector<1x8x32xf32> to vector<8x32xf32>
    %c2_121 = arith.constant 2 : index
    %c0_122 = arith.constant 0 : index
    %c0_123 = arith.constant 0 : index
    %188 = vector.load %arg5[%c2_121, %c0_122, %c0_123] : memref<4x32x32xbf16, #tpu.memory_space<vmem>>, vector<1x32x32xbf16>
    %189 = vector.shape_cast %188 : vector<1x32x32xbf16> to vector<32x32xbf16>
    %cst_124 = arith.constant dense<0.000000e+00> : vector<8x32xf32>
    %190 = tpu.matmul %170, %189, %cst_124 {dimension_numbers = #tpu.dot_dimension_numbers<[1], [0], [0], [1], [0, 0, 1, 1], [], []>} : vector<8x32xbf16>, vector<32x32xbf16>, vector<8x32xf32> -> vector<8x32xf32>
    %191 = arith.addf %187, %190 : vector<8x32xf32>
    %c3_125 = arith.constant 3 : index
    %192 = arith.index_cast %169 : i32 to index
    %c0_126 = arith.constant 0 : index
    %193 = vector.load %arg10[%c3_125, %192, %c0_126] : memref<4x64x32xf32, #tpu.memory_space<vmem>>, vector<1x8x32xf32>
    %194 = vector.shape_cast %193 : vector<1x8x32xf32> to vector<8x32xf32>
    %c3_127 = arith.constant 3 : index
    %c0_128 = arith.constant 0 : index
    %c0_129 = arith.constant 0 : index
    %195 = vector.load %arg5[%c3_127, %c0_128, %c0_129] : memref<4x32x32xbf16, #tpu.memory_space<vmem>>, vector<1x32x32xbf16>
    %196 = vector.shape_cast %195 : vector<1x32x32xbf16> to vector<32x32xbf16>
    %cst_130 = arith.constant dense<0.000000e+00> : vector<8x32xf32>
    %197 = tpu.matmul %170, %196, %cst_130 {dimension_numbers = #tpu.dot_dimension_numbers<[1], [0], [0], [1], [0, 0, 1, 1], [], []>} : vector<8x32xbf16>, vector<32x32xbf16>, vector<8x32xf32> -> vector<8x32xf32>
    %198 = arith.addf %194, %197 : vector<8x32xf32>
    %199 = arith.negf %177 : vector<8x32xf32>
    %200 = math.exp %199 : vector<8x32xf32>
    %cst_131 = arith.constant 1.000000e+00 : f32
    %201 = vector.broadcast %cst_131 : f32 to vector<8x32xf32>
    %202 = arith.addf %201, %200 : vector<8x32xf32>
    %203 = arith.divf %201, %202 : vector<8x32xf32>
    %204 = arith.negf %184 : vector<8x32xf32>
    %205 = math.exp %204 : vector<8x32xf32>
    %cst_132 = arith.constant 1.000000e+00 : f32
    %206 = vector.broadcast %cst_132 : f32 to vector<8x32xf32>
    %207 = arith.addf %206, %205 : vector<8x32xf32>
    %208 = arith.divf %206, %207 : vector<8x32xf32>
    %209 = math.tanh %191 : vector<8x32xf32>
    %210 = arith.negf %198 : vector<8x32xf32>
    %211 = math.exp %210 : vector<8x32xf32>
    %cst_133 = arith.constant 1.000000e+00 : f32
    %212 = vector.broadcast %cst_133 : f32 to vector<8x32xf32>
    %213 = arith.addf %212, %211 : vector<8x32xf32>
    %214 = arith.divf %212, %213 : vector<8x32xf32>
    %215 = arith.mulf %208, %159 : vector<8x32xf32>
    %216 = arith.mulf %203, %209 : vector<8x32xf32>
    %217 = arith.addf %215, %216 : vector<8x32xf32>
    %218 = math.tanh %217 : vector<8x32xf32>
    %219 = arith.mulf %214, %218 : vector<8x32xf32>
    %220 = arith.addi %48, %c2_i32 : i32
    %221 = vector.broadcast %220 : i32 to vector<8x1xi32>
    %222 = arith.cmpi eq, %47, %221 : vector<8x1xi32>
    %223 = vector.shape_cast %222 : vector<8x1xi1> to vector<8x1xi1>
    %224 = vector.broadcast %223 : vector<8x1xi1> to vector<8x32xi1>
    %225 = arith.select %224, %219, %167 : vector<8x32xi1>, vector<8x32xf32>
    %c3_i32 = arith.constant 3 : i32
    %c8_i32_134 = arith.constant 8 : i32
    %226 = arith.muli %c3_i32, %c8_i32_134 : i32
    %227 = tpu.assume_multiple %226, 8 : i32
    %228 = arith.truncf %219 : vector<8x32xf32> to vector<8x32xbf16>
    %c0_135 = arith.constant 0 : index
    %229 = arith.index_cast %227 : i32 to index
    %c0_136 = arith.constant 0 : index
    %230 = vector.load %arg10[%c0_135, %229, %c0_136] : memref<4x64x32xf32, #tpu.memory_space<vmem>>, vector<1x8x32xf32>
    %231 = vector.shape_cast %230 : vector<1x8x32xf32> to vector<8x32xf32>
    %c0_137 = arith.constant 0 : index
    %c0_138 = arith.constant 0 : index
    %c0_139 = arith.constant 0 : index
    %232 = vector.load %arg5[%c0_137, %c0_138, %c0_139] : memref<4x32x32xbf16, #tpu.memory_space<vmem>>, vector<1x32x32xbf16>
    %233 = vector.shape_cast %232 : vector<1x32x32xbf16> to vector<32x32xbf16>
    %cst_140 = arith.constant dense<0.000000e+00> : vector<8x32xf32>
    %234 = tpu.matmul %228, %233, %cst_140 {dimension_numbers = #tpu.dot_dimension_numbers<[1], [0], [0], [1], [0, 0, 1, 1], [], []>} : vector<8x32xbf16>, vector<32x32xbf16>, vector<8x32xf32> -> vector<8x32xf32>
    %235 = arith.addf %231, %234 : vector<8x32xf32>
    %c1_141 = arith.constant 1 : index
    %236 = arith.index_cast %227 : i32 to index
    %c0_142 = arith.constant 0 : index
    %237 = vector.load %arg10[%c1_141, %236, %c0_142] : memref<4x64x32xf32, #tpu.memory_space<vmem>>, vector<1x8x32xf32>
    %238 = vector.shape_cast %237 : vector<1x8x32xf32> to vector<8x32xf32>
    %c1_143 = arith.constant 1 : index
    %c0_144 = arith.constant 0 : index
    %c0_145 = arith.constant 0 : index
    %239 = vector.load %arg5[%c1_143, %c0_144, %c0_145] : memref<4x32x32xbf16, #tpu.memory_space<vmem>>, vector<1x32x32xbf16>
    %240 = vector.shape_cast %239 : vector<1x32x32xbf16> to vector<32x32xbf16>
    %cst_146 = arith.constant dense<0.000000e+00> : vector<8x32xf32>
    %241 = tpu.matmul %228, %240, %cst_146 {dimension_numbers = #tpu.dot_dimension_numbers<[1], [0], [0], [1], [0, 0, 1, 1], [], []>} : vector<8x32xbf16>, vector<32x32xbf16>, vector<8x32xf32> -> vector<8x32xf32>
    %242 = arith.addf %238, %241 : vector<8x32xf32>
    %c2_147 = arith.constant 2 : index
    %243 = arith.index_cast %227 : i32 to index
    %c0_148 = arith.constant 0 : index
    %244 = vector.load %arg10[%c2_147, %243, %c0_148] : memref<4x64x32xf32, #tpu.memory_space<vmem>>, vector<1x8x32xf32>
    %245 = vector.shape_cast %244 : vector<1x8x32xf32> to vector<8x32xf32>
    %c2_149 = arith.constant 2 : index
    %c0_150 = arith.constant 0 : index
    %c0_151 = arith.constant 0 : index
    %246 = vector.load %arg5[%c2_149, %c0_150, %c0_151] : memref<4x32x32xbf16, #tpu.memory_space<vmem>>, vector<1x32x32xbf16>
    %247 = vector.shape_cast %246 : vector<1x32x32xbf16> to vector<32x32xbf16>
    %cst_152 = arith.constant dense<0.000000e+00> : vector<8x32xf32>
    %248 = tpu.matmul %228, %247, %cst_152 {dimension_numbers = #tpu.dot_dimension_numbers<[1], [0], [0], [1], [0, 0, 1, 1], [], []>} : vector<8x32xbf16>, vector<32x32xbf16>, vector<8x32xf32> -> vector<8x32xf32>
    %249 = arith.addf %245, %248 : vector<8x32xf32>
    %c3_153 = arith.constant 3 : index
    %250 = arith.index_cast %227 : i32 to index
    %c0_154 = arith.constant 0 : index
    %251 = vector.load %arg10[%c3_153, %250, %c0_154] : memref<4x64x32xf32, #tpu.memory_space<vmem>>, vector<1x8x32xf32>
    %252 = vector.shape_cast %251 : vector<1x8x32xf32> to vector<8x32xf32>
    %c3_155 = arith.constant 3 : index
    %c0_156 = arith.constant 0 : index
    %c0_157 = arith.constant 0 : index
    %253 = vector.load %arg5[%c3_155, %c0_156, %c0_157] : memref<4x32x32xbf16, #tpu.memory_space<vmem>>, vector<1x32x32xbf16>
    %254 = vector.shape_cast %253 : vector<1x32x32xbf16> to vector<32x32xbf16>
    %cst_158 = arith.constant dense<0.000000e+00> : vector<8x32xf32>
    %255 = tpu.matmul %228, %254, %cst_158 {dimension_numbers = #tpu.dot_dimension_numbers<[1], [0], [0], [1], [0, 0, 1, 1], [], []>} : vector<8x32xbf16>, vector<32x32xbf16>, vector<8x32xf32> -> vector<8x32xf32>
    %256 = arith.addf %252, %255 : vector<8x32xf32>
    %257 = arith.negf %235 : vector<8x32xf32>
    %258 = math.exp %257 : vector<8x32xf32>
    %cst_159 = arith.constant 1.000000e+00 : f32
    %259 = vector.broadcast %cst_159 : f32 to vector<8x32xf32>
    %260 = arith.addf %259, %258 : vector<8x32xf32>
    %261 = arith.divf %259, %260 : vector<8x32xf32>
    %262 = arith.negf %242 : vector<8x32xf32>
    %263 = math.exp %262 : vector<8x32xf32>
    %cst_160 = arith.constant 1.000000e+00 : f32
    %264 = vector.broadcast %cst_160 : f32 to vector<8x32xf32>
    %265 = arith.addf %264, %263 : vector<8x32xf32>
    %266 = arith.divf %264, %265 : vector<8x32xf32>
    %267 = math.tanh %249 : vector<8x32xf32>
    %268 = arith.negf %256 : vector<8x32xf32>
    %269 = math.exp %268 : vector<8x32xf32>
    %cst_161 = arith.constant 1.000000e+00 : f32
    %270 = vector.broadcast %cst_161 : f32 to vector<8x32xf32>
    %271 = arith.addf %270, %269 : vector<8x32xf32>
    %272 = arith.divf %270, %271 : vector<8x32xf32>
    %273 = arith.mulf %266, %217 : vector<8x32xf32>
    %274 = arith.mulf %261, %267 : vector<8x32xf32>
    %275 = arith.addf %273, %274 : vector<8x32xf32>
    %276 = math.tanh %275 : vector<8x32xf32>
    %277 = arith.mulf %272, %276 : vector<8x32xf32>
    %278 = arith.addi %48, %c3_i32 : i32
    %279 = vector.broadcast %278 : i32 to vector<8x1xi32>
    %280 = arith.cmpi eq, %47, %279 : vector<8x1xi32>
    %281 = vector.shape_cast %280 : vector<8x1xi1> to vector<8x1xi1>
    %282 = vector.broadcast %281 : vector<8x1xi1> to vector<8x32xi1>
    %283 = arith.select %282, %277, %225 : vector<8x32xi1>, vector<8x32xf32>
    %c4_i32 = arith.constant 4 : i32
    %c8_i32_162 = arith.constant 8 : i32
    %284 = arith.muli %c4_i32, %c8_i32_162 : i32
    %285 = tpu.assume_multiple %284, 8 : i32
    %286 = arith.truncf %277 : vector<8x32xf32> to vector<8x32xbf16>
    %c0_163 = arith.constant 0 : index
    %287 = arith.index_cast %285 : i32 to index
    %c0_164 = arith.constant 0 : index
    %288 = vector.load %arg10[%c0_163, %287, %c0_164] : memref<4x64x32xf32, #tpu.memory_space<vmem>>, vector<1x8x32xf32>
    %289 = vector.shape_cast %288 : vector<1x8x32xf32> to vector<8x32xf32>
    %c0_165 = arith.constant 0 : index
    %c0_166 = arith.constant 0 : index
    %c0_167 = arith.constant 0 : index
    %290 = vector.load %arg5[%c0_165, %c0_166, %c0_167] : memref<4x32x32xbf16, #tpu.memory_space<vmem>>, vector<1x32x32xbf16>
    %291 = vector.shape_cast %290 : vector<1x32x32xbf16> to vector<32x32xbf16>
    %cst_168 = arith.constant dense<0.000000e+00> : vector<8x32xf32>
    %292 = tpu.matmul %286, %291, %cst_168 {dimension_numbers = #tpu.dot_dimension_numbers<[1], [0], [0], [1], [0, 0, 1, 1], [], []>} : vector<8x32xbf16>, vector<32x32xbf16>, vector<8x32xf32> -> vector<8x32xf32>
    %293 = arith.addf %289, %292 : vector<8x32xf32>
    %c1_169 = arith.constant 1 : index
    %294 = arith.index_cast %285 : i32 to index
    %c0_170 = arith.constant 0 : index
    %295 = vector.load %arg10[%c1_169, %294, %c0_170] : memref<4x64x32xf32, #tpu.memory_space<vmem>>, vector<1x8x32xf32>
    %296 = vector.shape_cast %295 : vector<1x8x32xf32> to vector<8x32xf32>
    %c1_171 = arith.constant 1 : index
    %c0_172 = arith.constant 0 : index
    %c0_173 = arith.constant 0 : index
    %297 = vector.load %arg5[%c1_171, %c0_172, %c0_173] : memref<4x32x32xbf16, #tpu.memory_space<vmem>>, vector<1x32x32xbf16>
    %298 = vector.shape_cast %297 : vector<1x32x32xbf16> to vector<32x32xbf16>
    %cst_174 = arith.constant dense<0.000000e+00> : vector<8x32xf32>
    %299 = tpu.matmul %286, %298, %cst_174 {dimension_numbers = #tpu.dot_dimension_numbers<[1], [0], [0], [1], [0, 0, 1, 1], [], []>} : vector<8x32xbf16>, vector<32x32xbf16>, vector<8x32xf32> -> vector<8x32xf32>
    %300 = arith.addf %296, %299 : vector<8x32xf32>
    %c2_175 = arith.constant 2 : index
    %301 = arith.index_cast %285 : i32 to index
    %c0_176 = arith.constant 0 : index
    %302 = vector.load %arg10[%c2_175, %301, %c0_176] : memref<4x64x32xf32, #tpu.memory_space<vmem>>, vector<1x8x32xf32>
    %303 = vector.shape_cast %302 : vector<1x8x32xf32> to vector<8x32xf32>
    %c2_177 = arith.constant 2 : index
    %c0_178 = arith.constant 0 : index
    %c0_179 = arith.constant 0 : index
    %304 = vector.load %arg5[%c2_177, %c0_178, %c0_179] : memref<4x32x32xbf16, #tpu.memory_space<vmem>>, vector<1x32x32xbf16>
    %305 = vector.shape_cast %304 : vector<1x32x32xbf16> to vector<32x32xbf16>
    %cst_180 = arith.constant dense<0.000000e+00> : vector<8x32xf32>
    %306 = tpu.matmul %286, %305, %cst_180 {dimension_numbers = #tpu.dot_dimension_numbers<[1], [0], [0], [1], [0, 0, 1, 1], [], []>} : vector<8x32xbf16>, vector<32x32xbf16>, vector<8x32xf32> -> vector<8x32xf32>
    %307 = arith.addf %303, %306 : vector<8x32xf32>
    %c3_181 = arith.constant 3 : index
    %308 = arith.index_cast %285 : i32 to index
    %c0_182 = arith.constant 0 : index
    %309 = vector.load %arg10[%c3_181, %308, %c0_182] : memref<4x64x32xf32, #tpu.memory_space<vmem>>, vector<1x8x32xf32>
    %310 = vector.shape_cast %309 : vector<1x8x32xf32> to vector<8x32xf32>
    %c3_183 = arith.constant 3 : index
    %c0_184 = arith.constant 0 : index
    %c0_185 = arith.constant 0 : index
    %311 = vector.load %arg5[%c3_183, %c0_184, %c0_185] : memref<4x32x32xbf16, #tpu.memory_space<vmem>>, vector<1x32x32xbf16>
    %312 = vector.shape_cast %311 : vector<1x32x32xbf16> to vector<32x32xbf16>
    %cst_186 = arith.constant dense<0.000000e+00> : vector<8x32xf32>
    %313 = tpu.matmul %286, %312, %cst_186 {dimension_numbers = #tpu.dot_dimension_numbers<[1], [0], [0], [1], [0, 0, 1, 1], [], []>} : vector<8x32xbf16>, vector<32x32xbf16>, vector<8x32xf32> -> vector<8x32xf32>
    %314 = arith.addf %310, %313 : vector<8x32xf32>
    %315 = arith.negf %293 : vector<8x32xf32>
    %316 = math.exp %315 : vector<8x32xf32>
    %cst_187 = arith.constant 1.000000e+00 : f32
    %317 = vector.broadcast %cst_187 : f32 to vector<8x32xf32>
    %318 = arith.addf %317, %316 : vector<8x32xf32>
    %319 = arith.divf %317, %318 : vector<8x32xf32>
    %320 = arith.negf %300 : vector<8x32xf32>
    %321 = math.exp %320 : vector<8x32xf32>
    %cst_188 = arith.constant 1.000000e+00 : f32
    %322 = vector.broadcast %cst_188 : f32 to vector<8x32xf32>
    %323 = arith.addf %322, %321 : vector<8x32xf32>
    %324 = arith.divf %322, %323 : vector<8x32xf32>
    %325 = math.tanh %307 : vector<8x32xf32>
    %326 = arith.negf %314 : vector<8x32xf32>
    %327 = math.exp %326 : vector<8x32xf32>
    %cst_189 = arith.constant 1.000000e+00 : f32
    %328 = vector.broadcast %cst_189 : f32 to vector<8x32xf32>
    %329 = arith.addf %328, %327 : vector<8x32xf32>
    %330 = arith.divf %328, %329 : vector<8x32xf32>
    %331 = arith.mulf %324, %275 : vector<8x32xf32>
    %332 = arith.mulf %319, %325 : vector<8x32xf32>
    %333 = arith.addf %331, %332 : vector<8x32xf32>
    %334 = math.tanh %333 : vector<8x32xf32>
    %335 = arith.mulf %330, %334 : vector<8x32xf32>
    %336 = arith.addi %48, %c4_i32 : i32
    %337 = vector.broadcast %336 : i32 to vector<8x1xi32>
    %338 = arith.cmpi eq, %47, %337 : vector<8x1xi32>
    %339 = vector.shape_cast %338 : vector<8x1xi1> to vector<8x1xi1>
    %340 = vector.broadcast %339 : vector<8x1xi1> to vector<8x32xi1>
    %341 = arith.select %340, %335, %283 : vector<8x32xi1>, vector<8x32xf32>
    %c5_i32 = arith.constant 5 : i32
    %c8_i32_190 = arith.constant 8 : i32
    %342 = arith.muli %c5_i32, %c8_i32_190 : i32
    %343 = tpu.assume_multiple %342, 8 : i32
    %344 = arith.truncf %335 : vector<8x32xf32> to vector<8x32xbf16>
    %c0_191 = arith.constant 0 : index
    %345 = arith.index_cast %343 : i32 to index
    %c0_192 = arith.constant 0 : index
    %346 = vector.load %arg10[%c0_191, %345, %c0_192] : memref<4x64x32xf32, #tpu.memory_space<vmem>>, vector<1x8x32xf32>
    %347 = vector.shape_cast %346 : vector<1x8x32xf32> to vector<8x32xf32>
    %c0_193 = arith.constant 0 : index
    %c0_194 = arith.constant 0 : index
    %c0_195 = arith.constant 0 : index
    %348 = vector.load %arg5[%c0_193, %c0_194, %c0_195] : memref<4x32x32xbf16, #tpu.memory_space<vmem>>, vector<1x32x32xbf16>
    %349 = vector.shape_cast %348 : vector<1x32x32xbf16> to vector<32x32xbf16>
    %cst_196 = arith.constant dense<0.000000e+00> : vector<8x32xf32>
    %350 = tpu.matmul %344, %349, %cst_196 {dimension_numbers = #tpu.dot_dimension_numbers<[1], [0], [0], [1], [0, 0, 1, 1], [], []>} : vector<8x32xbf16>, vector<32x32xbf16>, vector<8x32xf32> -> vector<8x32xf32>
    %351 = arith.addf %347, %350 : vector<8x32xf32>
    %c1_197 = arith.constant 1 : index
    %352 = arith.index_cast %343 : i32 to index
    %c0_198 = arith.constant 0 : index
    %353 = vector.load %arg10[%c1_197, %352, %c0_198] : memref<4x64x32xf32, #tpu.memory_space<vmem>>, vector<1x8x32xf32>
    %354 = vector.shape_cast %353 : vector<1x8x32xf32> to vector<8x32xf32>
    %c1_199 = arith.constant 1 : index
    %c0_200 = arith.constant 0 : index
    %c0_201 = arith.constant 0 : index
    %355 = vector.load %arg5[%c1_199, %c0_200, %c0_201] : memref<4x32x32xbf16, #tpu.memory_space<vmem>>, vector<1x32x32xbf16>
    %356 = vector.shape_cast %355 : vector<1x32x32xbf16> to vector<32x32xbf16>
    %cst_202 = arith.constant dense<0.000000e+00> : vector<8x32xf32>
    %357 = tpu.matmul %344, %356, %cst_202 {dimension_numbers = #tpu.dot_dimension_numbers<[1], [0], [0], [1], [0, 0, 1, 1], [], []>} : vector<8x32xbf16>, vector<32x32xbf16>, vector<8x32xf32> -> vector<8x32xf32>
    %358 = arith.addf %354, %357 : vector<8x32xf32>
    %c2_203 = arith.constant 2 : index
    %359 = arith.index_cast %343 : i32 to index
    %c0_204 = arith.constant 0 : index
    %360 = vector.load %arg10[%c2_203, %359, %c0_204] : memref<4x64x32xf32, #tpu.memory_space<vmem>>, vector<1x8x32xf32>
    %361 = vector.shape_cast %360 : vector<1x8x32xf32> to vector<8x32xf32>
    %c2_205 = arith.constant 2 : index
    %c0_206 = arith.constant 0 : index
    %c0_207 = arith.constant 0 : index
    %362 = vector.load %arg5[%c2_205, %c0_206, %c0_207] : memref<4x32x32xbf16, #tpu.memory_space<vmem>>, vector<1x32x32xbf16>
    %363 = vector.shape_cast %362 : vector<1x32x32xbf16> to vector<32x32xbf16>
    %cst_208 = arith.constant dense<0.000000e+00> : vector<8x32xf32>
    %364 = tpu.matmul %344, %363, %cst_208 {dimension_numbers = #tpu.dot_dimension_numbers<[1], [0], [0], [1], [0, 0, 1, 1], [], []>} : vector<8x32xbf16>, vector<32x32xbf16>, vector<8x32xf32> -> vector<8x32xf32>
    %365 = arith.addf %361, %364 : vector<8x32xf32>
    %c3_209 = arith.constant 3 : index
    %366 = arith.index_cast %343 : i32 to index
    %c0_210 = arith.constant 0 : index
    %367 = vector.load %arg10[%c3_209, %366, %c0_210] : memref<4x64x32xf32, #tpu.memory_space<vmem>>, vector<1x8x32xf32>
    %368 = vector.shape_cast %367 : vector<1x8x32xf32> to vector<8x32xf32>
    %c3_211 = arith.constant 3 : index
    %c0_212 = arith.constant 0 : index
    %c0_213 = arith.constant 0 : index
    %369 = vector.load %arg5[%c3_211, %c0_212, %c0_213] : memref<4x32x32xbf16, #tpu.memory_space<vmem>>, vector<1x32x32xbf16>
    %370 = vector.shape_cast %369 : vector<1x32x32xbf16> to vector<32x32xbf16>
    %cst_214 = arith.constant dense<0.000000e+00> : vector<8x32xf32>
    %371 = tpu.matmul %344, %370, %cst_214 {dimension_numbers = #tpu.dot_dimension_numbers<[1], [0], [0], [1], [0, 0, 1, 1], [], []>} : vector<8x32xbf16>, vector<32x32xbf16>, vector<8x32xf32> -> vector<8x32xf32>
    %372 = arith.addf %368, %371 : vector<8x32xf32>
    %373 = arith.negf %351 : vector<8x32xf32>
    %374 = math.exp %373 : vector<8x32xf32>
    %cst_215 = arith.constant 1.000000e+00 : f32
    %375 = vector.broadcast %cst_215 : f32 to vector<8x32xf32>
    %376 = arith.addf %375, %374 : vector<8x32xf32>
    %377 = arith.divf %375, %376 : vector<8x32xf32>
    %378 = arith.negf %358 : vector<8x32xf32>
    %379 = math.exp %378 : vector<8x32xf32>
    %cst_216 = arith.constant 1.000000e+00 : f32
    %380 = vector.broadcast %cst_216 : f32 to vector<8x32xf32>
    %381 = arith.addf %380, %379 : vector<8x32xf32>
    %382 = arith.divf %380, %381 : vector<8x32xf32>
    %383 = math.tanh %365 : vector<8x32xf32>
    %384 = arith.negf %372 : vector<8x32xf32>
    %385 = math.exp %384 : vector<8x32xf32>
    %cst_217 = arith.constant 1.000000e+00 : f32
    %386 = vector.broadcast %cst_217 : f32 to vector<8x32xf32>
    %387 = arith.addf %386, %385 : vector<8x32xf32>
    %388 = arith.divf %386, %387 : vector<8x32xf32>
    %389 = arith.mulf %382, %333 : vector<8x32xf32>
    %390 = arith.mulf %377, %383 : vector<8x32xf32>
    %391 = arith.addf %389, %390 : vector<8x32xf32>
    %392 = math.tanh %391 : vector<8x32xf32>
    %393 = arith.mulf %388, %392 : vector<8x32xf32>
    %394 = arith.addi %48, %c5_i32 : i32
    %395 = vector.broadcast %394 : i32 to vector<8x1xi32>
    %396 = arith.cmpi eq, %47, %395 : vector<8x1xi32>
    %397 = vector.shape_cast %396 : vector<8x1xi1> to vector<8x1xi1>
    %398 = vector.broadcast %397 : vector<8x1xi1> to vector<8x32xi1>
    %399 = arith.select %398, %393, %341 : vector<8x32xi1>, vector<8x32xf32>
    %c6_i32 = arith.constant 6 : i32
    %c8_i32_218 = arith.constant 8 : i32
    %400 = arith.muli %c6_i32, %c8_i32_218 : i32
    %401 = tpu.assume_multiple %400, 8 : i32
    %402 = arith.truncf %393 : vector<8x32xf32> to vector<8x32xbf16>
    %c0_219 = arith.constant 0 : index
    %403 = arith.index_cast %401 : i32 to index
    %c0_220 = arith.constant 0 : index
    %404 = vector.load %arg10[%c0_219, %403, %c0_220] : memref<4x64x32xf32, #tpu.memory_space<vmem>>, vector<1x8x32xf32>
    %405 = vector.shape_cast %404 : vector<1x8x32xf32> to vector<8x32xf32>
    %c0_221 = arith.constant 0 : index
    %c0_222 = arith.constant 0 : index
    %c0_223 = arith.constant 0 : index
    %406 = vector.load %arg5[%c0_221, %c0_222, %c0_223] : memref<4x32x32xbf16, #tpu.memory_space<vmem>>, vector<1x32x32xbf16>
    %407 = vector.shape_cast %406 : vector<1x32x32xbf16> to vector<32x32xbf16>
    %cst_224 = arith.constant dense<0.000000e+00> : vector<8x32xf32>
    %408 = tpu.matmul %402, %407, %cst_224 {dimension_numbers = #tpu.dot_dimension_numbers<[1], [0], [0], [1], [0, 0, 1, 1], [], []>} : vector<8x32xbf16>, vector<32x32xbf16>, vector<8x32xf32> -> vector<8x32xf32>
    %409 = arith.addf %405, %408 : vector<8x32xf32>
    %c1_225 = arith.constant 1 : index
    %410 = arith.index_cast %401 : i32 to index
    %c0_226 = arith.constant 0 : index
    %411 = vector.load %arg10[%c1_225, %410, %c0_226] : memref<4x64x32xf32, #tpu.memory_space<vmem>>, vector<1x8x32xf32>
    %412 = vector.shape_cast %411 : vector<1x8x32xf32> to vector<8x32xf32>
    %c1_227 = arith.constant 1 : index
    %c0_228 = arith.constant 0 : index
    %c0_229 = arith.constant 0 : index
    %413 = vector.load %arg5[%c1_227, %c0_228, %c0_229] : memref<4x32x32xbf16, #tpu.memory_space<vmem>>, vector<1x32x32xbf16>
    %414 = vector.shape_cast %413 : vector<1x32x32xbf16> to vector<32x32xbf16>
    %cst_230 = arith.constant dense<0.000000e+00> : vector<8x32xf32>
    %415 = tpu.matmul %402, %414, %cst_230 {dimension_numbers = #tpu.dot_dimension_numbers<[1], [0], [0], [1], [0, 0, 1, 1], [], []>} : vector<8x32xbf16>, vector<32x32xbf16>, vector<8x32xf32> -> vector<8x32xf32>
    %416 = arith.addf %412, %415 : vector<8x32xf32>
    %c2_231 = arith.constant 2 : index
    %417 = arith.index_cast %401 : i32 to index
    %c0_232 = arith.constant 0 : index
    %418 = vector.load %arg10[%c2_231, %417, %c0_232] : memref<4x64x32xf32, #tpu.memory_space<vmem>>, vector<1x8x32xf32>
    %419 = vector.shape_cast %418 : vector<1x8x32xf32> to vector<8x32xf32>
    %c2_233 = arith.constant 2 : index
    %c0_234 = arith.constant 0 : index
    %c0_235 = arith.constant 0 : index
    %420 = vector.load %arg5[%c2_233, %c0_234, %c0_235] : memref<4x32x32xbf16, #tpu.memory_space<vmem>>, vector<1x32x32xbf16>
    %421 = vector.shape_cast %420 : vector<1x32x32xbf16> to vector<32x32xbf16>
    %cst_236 = arith.constant dense<0.000000e+00> : vector<8x32xf32>
    %422 = tpu.matmul %402, %421, %cst_236 {dimension_numbers = #tpu.dot_dimension_numbers<[1], [0], [0], [1], [0, 0, 1, 1], [], []>} : vector<8x32xbf16>, vector<32x32xbf16>, vector<8x32xf32> -> vector<8x32xf32>
    %423 = arith.addf %419, %422 : vector<8x32xf32>
    %c3_237 = arith.constant 3 : index
    %424 = arith.index_cast %401 : i32 to index
    %c0_238 = arith.constant 0 : index
    %425 = vector.load %arg10[%c3_237, %424, %c0_238] : memref<4x64x32xf32, #tpu.memory_space<vmem>>, vector<1x8x32xf32>
    %426 = vector.shape_cast %425 : vector<1x8x32xf32> to vector<8x32xf32>
    %c3_239 = arith.constant 3 : index
    %c0_240 = arith.constant 0 : index
    %c0_241 = arith.constant 0 : index
    %427 = vector.load %arg5[%c3_239, %c0_240, %c0_241] : memref<4x32x32xbf16, #tpu.memory_space<vmem>>, vector<1x32x32xbf16>
    %428 = vector.shape_cast %427 : vector<1x32x32xbf16> to vector<32x32xbf16>
    %cst_242 = arith.constant dense<0.000000e+00> : vector<8x32xf32>
    %429 = tpu.matmul %402, %428, %cst_242 {dimension_numbers = #tpu.dot_dimension_numbers<[1], [0], [0], [1], [0, 0, 1, 1], [], []>} : vector<8x32xbf16>, vector<32x32xbf16>, vector<8x32xf32> -> vector<8x32xf32>
    %430 = arith.addf %426, %429 : vector<8x32xf32>
    %431 = arith.negf %409 : vector<8x32xf32>
    %432 = math.exp %431 : vector<8x32xf32>
    %cst_243 = arith.constant 1.000000e+00 : f32
    %433 = vector.broadcast %cst_243 : f32 to vector<8x32xf32>
    %434 = arith.addf %433, %432 : vector<8x32xf32>
    %435 = arith.divf %433, %434 : vector<8x32xf32>
    %436 = arith.negf %416 : vector<8x32xf32>
    %437 = math.exp %436 : vector<8x32xf32>
    %cst_244 = arith.constant 1.000000e+00 : f32
    %438 = vector.broadcast %cst_244 : f32 to vector<8x32xf32>
    %439 = arith.addf %438, %437 : vector<8x32xf32>
    %440 = arith.divf %438, %439 : vector<8x32xf32>
    %441 = math.tanh %423 : vector<8x32xf32>
    %442 = arith.negf %430 : vector<8x32xf32>
    %443 = math.exp %442 : vector<8x32xf32>
    %cst_245 = arith.constant 1.000000e+00 : f32
    %444 = vector.broadcast %cst_245 : f32 to vector<8x32xf32>
    %445 = arith.addf %444, %443 : vector<8x32xf32>
    %446 = arith.divf %444, %445 : vector<8x32xf32>
    %447 = arith.mulf %440, %391 : vector<8x32xf32>
    %448 = arith.mulf %435, %441 : vector<8x32xf32>
    %449 = arith.addf %447, %448 : vector<8x32xf32>
    %450 = math.tanh %449 : vector<8x32xf32>
    %451 = arith.mulf %446, %450 : vector<8x32xf32>
    %452 = arith.addi %48, %c6_i32 : i32
    %453 = vector.broadcast %452 : i32 to vector<8x1xi32>
    %454 = arith.cmpi eq, %47, %453 : vector<8x1xi32>
    %455 = vector.shape_cast %454 : vector<8x1xi1> to vector<8x1xi1>
    %456 = vector.broadcast %455 : vector<8x1xi1> to vector<8x32xi1>
    %457 = arith.select %456, %451, %399 : vector<8x32xi1>, vector<8x32xf32>
    %c7_i32 = arith.constant 7 : i32
    %c8_i32_246 = arith.constant 8 : i32
    %458 = arith.muli %c7_i32, %c8_i32_246 : i32
    %459 = tpu.assume_multiple %458, 8 : i32
    %460 = arith.truncf %451 : vector<8x32xf32> to vector<8x32xbf16>
    %c0_247 = arith.constant 0 : index
    %461 = arith.index_cast %459 : i32 to index
    %c0_248 = arith.constant 0 : index
    %462 = vector.load %arg10[%c0_247, %461, %c0_248] : memref<4x64x32xf32, #tpu.memory_space<vmem>>, vector<1x8x32xf32>
    %463 = vector.shape_cast %462 : vector<1x8x32xf32> to vector<8x32xf32>
    %c0_249 = arith.constant 0 : index
    %c0_250 = arith.constant 0 : index
    %c0_251 = arith.constant 0 : index
    %464 = vector.load %arg5[%c0_249, %c0_250, %c0_251] : memref<4x32x32xbf16, #tpu.memory_space<vmem>>, vector<1x32x32xbf16>
    %465 = vector.shape_cast %464 : vector<1x32x32xbf16> to vector<32x32xbf16>
    %cst_252 = arith.constant dense<0.000000e+00> : vector<8x32xf32>
    %466 = tpu.matmul %460, %465, %cst_252 {dimension_numbers = #tpu.dot_dimension_numbers<[1], [0], [0], [1], [0, 0, 1, 1], [], []>} : vector<8x32xbf16>, vector<32x32xbf16>, vector<8x32xf32> -> vector<8x32xf32>
    %467 = arith.addf %463, %466 : vector<8x32xf32>
    %c1_253 = arith.constant 1 : index
    %468 = arith.index_cast %459 : i32 to index
    %c0_254 = arith.constant 0 : index
    %469 = vector.load %arg10[%c1_253, %468, %c0_254] : memref<4x64x32xf32, #tpu.memory_space<vmem>>, vector<1x8x32xf32>
    %470 = vector.shape_cast %469 : vector<1x8x32xf32> to vector<8x32xf32>
    %c1_255 = arith.constant 1 : index
    %c0_256 = arith.constant 0 : index
    %c0_257 = arith.constant 0 : index
    %471 = vector.load %arg5[%c1_255, %c0_256, %c0_257] : memref<4x32x32xbf16, #tpu.memory_space<vmem>>, vector<1x32x32xbf16>
    %472 = vector.shape_cast %471 : vector<1x32x32xbf16> to vector<32x32xbf16>
    %cst_258 = arith.constant dense<0.000000e+00> : vector<8x32xf32>
    %473 = tpu.matmul %460, %472, %cst_258 {dimension_numbers = #tpu.dot_dimension_numbers<[1], [0], [0], [1], [0, 0, 1, 1], [], []>} : vector<8x32xbf16>, vector<32x32xbf16>, vector<8x32xf32> -> vector<8x32xf32>
    %474 = arith.addf %470, %473 : vector<8x32xf32>
    %c2_259 = arith.constant 2 : index
    %475 = arith.index_cast %459 : i32 to index
    %c0_260 = arith.constant 0 : index
    %476 = vector.load %arg10[%c2_259, %475, %c0_260] : memref<4x64x32xf32, #tpu.memory_space<vmem>>, vector<1x8x32xf32>
    %477 = vector.shape_cast %476 : vector<1x8x32xf32> to vector<8x32xf32>
    %c2_261 = arith.constant 2 : index
    %c0_262 = arith.constant 0 : index
    %c0_263 = arith.constant 0 : index
    %478 = vector.load %arg5[%c2_261, %c0_262, %c0_263] : memref<4x32x32xbf16, #tpu.memory_space<vmem>>, vector<1x32x32xbf16>
    %479 = vector.shape_cast %478 : vector<1x32x32xbf16> to vector<32x32xbf16>
    %cst_264 = arith.constant dense<0.000000e+00> : vector<8x32xf32>
    %480 = tpu.matmul %460, %479, %cst_264 {dimension_numbers = #tpu.dot_dimension_numbers<[1], [0], [0], [1], [0, 0, 1, 1], [], []>} : vector<8x32xbf16>, vector<32x32xbf16>, vector<8x32xf32> -> vector<8x32xf32>
    %481 = arith.addf %477, %480 : vector<8x32xf32>
    %c3_265 = arith.constant 3 : index
    %482 = arith.index_cast %459 : i32 to index
    %c0_266 = arith.constant 0 : index
    %483 = vector.load %arg10[%c3_265, %482, %c0_266] : memref<4x64x32xf32, #tpu.memory_space<vmem>>, vector<1x8x32xf32>
    %484 = vector.shape_cast %483 : vector<1x8x32xf32> to vector<8x32xf32>
    %c3_267 = arith.constant 3 : index
    %c0_268 = arith.constant 0 : index
    %c0_269 = arith.constant 0 : index
    %485 = vector.load %arg5[%c3_267, %c0_268, %c0_269] : memref<4x32x32xbf16, #tpu.memory_space<vmem>>, vector<1x32x32xbf16>
    %486 = vector.shape_cast %485 : vector<1x32x32xbf16> to vector<32x32xbf16>
    %cst_270 = arith.constant dense<0.000000e+00> : vector<8x32xf32>
    %487 = tpu.matmul %460, %486, %cst_270 {dimension_numbers = #tpu.dot_dimension_numbers<[1], [0], [0], [1], [0, 0, 1, 1], [], []>} : vector<8x32xbf16>, vector<32x32xbf16>, vector<8x32xf32> -> vector<8x32xf32>
    %488 = arith.addf %484, %487 : vector<8x32xf32>
    %489 = arith.negf %467 : vector<8x32xf32>
    %490 = math.exp %489 : vector<8x32xf32>
    %cst_271 = arith.constant 1.000000e+00 : f32
    %491 = vector.broadcast %cst_271 : f32 to vector<8x32xf32>
    %492 = arith.addf %491, %490 : vector<8x32xf32>
    %493 = arith.divf %491, %492 : vector<8x32xf32>
    %494 = arith.negf %474 : vector<8x32xf32>
    %495 = math.exp %494 : vector<8x32xf32>
    %cst_272 = arith.constant 1.000000e+00 : f32
    %496 = vector.broadcast %cst_272 : f32 to vector<8x32xf32>
    %497 = arith.addf %496, %495 : vector<8x32xf32>
    %498 = arith.divf %496, %497 : vector<8x32xf32>
    %499 = math.tanh %481 : vector<8x32xf32>
    %500 = arith.negf %488 : vector<8x32xf32>
    %501 = math.exp %500 : vector<8x32xf32>
    %cst_273 = arith.constant 1.000000e+00 : f32
    %502 = vector.broadcast %cst_273 : f32 to vector<8x32xf32>
    %503 = arith.addf %502, %501 : vector<8x32xf32>
    %504 = arith.divf %502, %503 : vector<8x32xf32>
    %505 = arith.mulf %498, %449 : vector<8x32xf32>
    %506 = arith.mulf %493, %499 : vector<8x32xf32>
    %507 = arith.addf %505, %506 : vector<8x32xf32>
    %508 = math.tanh %507 : vector<8x32xf32>
    %509 = arith.mulf %504, %508 : vector<8x32xf32>
    %510 = arith.addi %48, %c7_i32 : i32
    %511 = vector.broadcast %510 : i32 to vector<8x1xi32>
    %512 = arith.cmpi eq, %47, %511 : vector<8x1xi32>
    %513 = vector.shape_cast %512 : vector<8x1xi1> to vector<8x1xi1>
    %514 = vector.broadcast %513 : vector<8x1xi1> to vector<8x32xi1>
    %515 = arith.select %514, %509, %457 : vector<8x32xi1>, vector<8x32xf32>
    %c8_i32_274 = arith.constant 8 : i32
    %c0_275 = arith.constant 0 : index
    %c0_276 = arith.constant 0 : index
    %516 = vector.load %arg11[%c0_275, %c0_276] : memref<8x32xf32, #tpu.memory_space<vmem>>, vector<8x32xf32>
    tpu.vector_store %arg11[%c0_275, %c0_276], %509 {strides = array<i32>} : memref<8x32xf32, #tpu.memory_space<vmem>>, vector<8x32xf32>,
    %c0_277 = arith.constant 0 : index
    %c0_278 = arith.constant 0 : index
    %517 = vector.load %arg12[%c0_277, %c0_278] : memref<8x32xf32, #tpu.memory_space<vmem>>, vector<8x32xf32>
    tpu.vector_store %arg12[%c0_277, %c0_278], %507 {strides = array<i32>} : memref<8x32xf32, #tpu.memory_space<vmem>>, vector<8x32xf32>,
    %c0_279 = arith.constant 0 : index
    %c0_280 = arith.constant 0 : index
    %518 = vector.load %arg13[%c0_279, %c0_280] : memref<8x32xf32, #tpu.memory_space<vmem>>, vector<8x32xf32>
    tpu.vector_store %arg13[%c0_279, %c0_280], %515 {strides = array<i32>} : memref<8x32xf32, #tpu.memory_space<vmem>>, vector<8x32xf32>,
    %c0_i32_281 = arith.constant 0 : i32
    %519 = arith.cmpi eq, %arg1, %c0_i32_281 : i32
    %520 = arith.extui %519 : i1 to i32
    %c0_i32_282 = arith.constant 0 : i32
    %521 = arith.cmpi ne, %520, %c0_i32_282 : i32
    scf.if %521 {
      %c0_283 = arith.constant 0 : index
      %c0_284 = arith.constant 0 : index
      %522 = vector.load %arg13[%c0_283, %c0_284] : memref<8x32xf32, #tpu.memory_space<vmem>>, vector<8x32xf32>
      %cst_285 = arith.constant 0.000000e+00 : f32
      %523 = vector.broadcast %cst_285 : f32 to vector<8x32xf32>
      %524 = arith.maximumf %522, %523 : vector<8x32xf32>
      %c0_286 = arith.constant 0 : index
      %c0_287 = arith.constant 0 : index
      %525 = vector.load %arg7[%c0_286, %c0_287] : memref<32x2xf32, #tpu.memory_space<vmem>>, vector<32x2xf32>
      %cst_288 = arith.constant dense<0.000000e+00> : vector<8x2xf32>
      %526 = tpu.matmul %524, %525, %cst_288 {dimension_numbers = #tpu.dot_dimension_numbers<[1], [0], [0], [1], [0, 0, 1, 1], [], []>} : vector<8x32xf32>, vector<32x2xf32>, vector<8x2xf32> -> vector<8x2xf32>
      %c0_289 = arith.constant 0 : index
      %c0_290 = arith.constant 0 : index
      %527 = vector.load %arg8[%c0_289, %c0_290] : memref<1x2xf32, #tpu.memory_space<vmem>>, vector<1x2xf32>
      %528 = vector.broadcast %527 : vector<1x2xf32> to vector<8x2xf32>
      %529 = arith.addf %526, %528 : vector<8x2xf32>
      %530 = vector.extract_strided_slice %529 {offsets = [0, 0], sizes = [8, 1], strides = [1, 1]} : vector<8x2xf32> to vector<8x1xf32>
      %531 = vector.extract_strided_slice %529 {offsets = [0, 1], sizes = [8, 1], strides = [1, 1]} : vector<8x2xf32> to vector<8x1xf32>
      %532 = arith.maximumf %530, %531 : vector<8x1xf32>
      %533 = arith.subf %530, %532 : vector<8x1xf32>
      %534 = math.exp %533 : vector<8x1xf32>
      %535 = arith.subf %531, %532 : vector<8x1xf32>
      %536 = math.exp %535 : vector<8x1xf32>
      %537 = arith.addf %534, %536 : vector<8x1xf32>
      %538 = math.log %537 : vector<8x1xf32>
      %539 = arith.addf %532, %538 : vector<8x1xf32>
      %540 = vector.broadcast %539 : vector<8x1xf32> to vector<8x2xf32>
      %541 = arith.subf %529, %540 : vector<8x2xf32>
      %c0_291 = arith.constant 0 : index
      %c0_292 = arith.constant 0 : index
      %542 = vector.load %arg9[%c0_291, %c0_292] : memref<8x2xf32, #tpu.memory_space<vmem>>, vector<8x2xf32>
      tpu.vector_store %arg9[%c0_291, %c0_292], %541 {strides = array<i32>} : memref<8x2xf32, #tpu.memory_space<vmem>>, vector<8x2xf32>,
    } else {
    }
    return
  }
  func.func @transform_0(%arg0: i32, %arg1: i32) -> (i32, i32, i32, i32) {
    %c0_i32 = arith.constant 0 : i32
    %c0_i32_0 = arith.constant 0 : i32
    %c0_i32_1 = arith.constant 0 : i32
    return %arg0, %arg1, %c0_i32, %c0_i32_0 : i32, i32, i32, i32
  }
  func.func @transform_1(%arg0: i32, %arg1: i32) -> (i32, i32) {
    %c0_i32 = arith.constant 0 : i32
    %c0_i32_0 = arith.constant 0 : i32
    return %arg0, %c0_i32 : i32, i32
  }
  func.func @transform_2(%arg0: i32, %arg1: i32) -> (i32, i32, i32) {
    %c0_i32 = arith.constant 0 : i32
    %c0_i32_0 = arith.constant 0 : i32
    %c0_i32_1 = arith.constant 0 : i32
    %c0_i32_2 = arith.constant 0 : i32
    return %c0_i32, %c0_i32_0, %c0_i32_1 : i32, i32, i32
  }
  func.func @transform_3(%arg0: i32, %arg1: i32) -> (i32, i32, i32) {
    %c0_i32 = arith.constant 0 : i32
    %c0_i32_0 = arith.constant 0 : i32
    %c0_i32_1 = arith.constant 0 : i32
    %c0_i32_2 = arith.constant 0 : i32
    return %c0_i32, %c0_i32_0, %c0_i32_1 : i32, i32, i32
  }
  func.func @transform_4(%arg0: i32, %arg1: i32) -> (i32, i32, i32) {
    %c0_i32 = arith.constant 0 : i32
    %c0_i32_0 = arith.constant 0 : i32
    %c0_i32_1 = arith.constant 0 : i32
    %c0_i32_2 = arith.constant 0 : i32
    return %c0_i32, %c0_i32_0, %c0_i32_1 : i32, i32, i32
  }
  func.func @transform_5(%arg0: i32, %arg1: i32) -> (i32, i32) {
    %c0_i32 = arith.constant 0 : i32
    %c0_i32_0 = arith.constant 0 : i32
    %c0_i32_1 = arith.constant 0 : i32
    return %c0_i32, %c0_i32_0 : i32, i32
  }
  func.func @transform_6(%arg0: i32, %arg1: i32) -> (i32, i32) {
    %c0_i32 = arith.constant 0 : i32
    %c0_i32_0 = arith.constant 0 : i32
    %c0_i32_1 = arith.constant 0 : i32
    return %c0_i32, %c0_i32_0 : i32, i32
  }
  func.func @transform_7(%arg0: i32, %arg1: i32) -> (i32, i32) {
    %c0_i32 = arith.constant 0 : i32
    %c0_i32_0 = arith.constant 0 : i32
    return %arg0, %c0_i32 : i32, i32
  }
}

</mosaic_0001>

<llo_original>
// kernel: tpu_custom_call.1
$region0: #{tpu_custom_call.1}
  #allocation0 [shape = 'u32[]', space=smem, size = 0x4, offset = 0x4, fixed_abs, tag = 'smem constant byte address 0x4 - core index']
  #allocation1 [shape = 'u32[144,128]{1,0:T(1,128)}', space=vmem, size = 0x12000, scoped, tag = 'internal scratch']
  #allocation2 [shape = 'f32[4,64,32]{2,1,0:T(8,128)}', space=vmem, size = 0x20000, scoped, tag = 'scratch operand']
  #allocation3 [shape = 'f32[8,32]{1,0:T(8,128)}', space=vmem, size = 0x1000, scoped, tag = 'scratch operand']
  #allocation4 [shape = 'f32[8,32]{1,0:T(8,128)}', space=vmem, size = 0x1000, scoped, tag = 'scratch operand']
  #allocation5 [shape = 'f32[8,32]{1,0:T(8,128)}', space=vmem, size = 0x1000, scoped, tag = 'scratch operand']
  %s0 = inlined_call_operand.vmem [shape: bf16[1,1,64,16], index: 0, kind: input, shape index: {}]
  %s1 = inlined_call_operand.vmem [shape: s32[8,1], index: 1, kind: input, shape index: {}]
  %s2 = inlined_call_operand.hbm [shape: bf16[4,16,32], index: 2, kind: input, shape index: {}]
  %s3 = inlined_call_operand.vmem [shape: bf16[4,32,32], index: 3, kind: input, shape index: {}]
  %s4 = inlined_call_operand.vmem [shape: f32[4,1,32], index: 4, kind: input, shape index: {}]
  %s5 = inlined_call_operand.vmem [shape: f32[32,2], index: 5, kind: input, shape index: {}]
  %s6 = inlined_call_operand.vmem [shape: f32[1,2], index: 6, kind: input, shape index: {}]
  %s7 = inlined_call_operand.vmem [shape: f32[8,2], index: 7, kind: output, shape index: {}]
  %s8 = sld [smem:[#allocation0]]
  $region50: #{tpu_custom_call.1} parent=0
    _
  %s10 = ssub.s32 1, %s8
  %s11 = scalar_select 0, %s10, %s8
  $region1: #{tpu_custom_call.1} parent=0
    #allocation6 [shape = 'u8[16384]{0}', space=vmem, size = 0x4000, scoped, tag = 'input window, operand 2, single buffered']
    #allocation7 [shape = 's32[1]{0}', space=sflag, size = 0x4, scoped, tag = 'scoped memory for tpu_custom_call.1']
    %12 = vsyncpa [#allocation7], 0
    // Predicated region
    $region2: #{tpu_custom_call.1} parent=1 // pred_check
      _
    $region3: #{tpu_custom_call.1} parent=1 // pred_check_branch
      %14 = sbr.rel (0) target = $region5
    $region4: #{tpu_custom_call.1} parent=1 // pred_region
      _
    $region5: #{tpu_custom_call.1} parent=1 // pred_fallthru
      _
    // Predicated region
    $region6: #{tpu_custom_call.1} parent=1 // pred_check
      _
    $region7: #{tpu_custom_call.1} parent=1 // pred_check_branch
      %16 = sbr.rel (0) target = $region9
    $region8: #{tpu_custom_call.1} parent=1 // pred_region
      _
    $region9: #{tpu_custom_call.1} parent=1 // pred_fallthru
      _
    // Predicated region
    $region10: #{tpu_custom_call.1} parent=1 // pred_check
      _
    $region11: #{tpu_custom_call.1} parent=1 // pred_check_branch
      %18 = sbr.rel (0) target = $region13
    $region12: #{tpu_custom_call.1} parent=1 // pred_region
      %s20 = ssub.s32 512, 512
      %21 = vsyncadd [#allocation7], %s20
      %s22 = sshll.u32 [#allocation6], 4
      %s23 = int_to_ptr.vmem [resolvable:$true] %s22
      %28 = dma.hbm_to_vmem [thread:$0]  %s2, 512, %s23, [#allocation7], 64, 64, 4
    $region13: #{tpu_custom_call.1} parent=1 // pred_fallthru
      _
    // Predicated region
    $region14: #{tpu_custom_call.1} parent=1 // pred_check
      _
    $region15: #{tpu_custom_call.1} parent=1 // pred_check_branch
      %30 = sbr.rel (0) target = $region17
    $region16: #{tpu_custom_call.1} parent=1 // pred_region
      _
    $region17: #{tpu_custom_call.1} parent=1 // pred_fallthru
      _
    // Predicated region
    $region18: #{tpu_custom_call.1} parent=1 // pred_check
      _
    $region19: #{tpu_custom_call.1} parent=1 // pred_check_branch
      %32 = sbr.rel (0) target = $region21
    $region20: #{tpu_custom_call.1} parent=1 // pred_region
      _
    $region21: #{tpu_custom_call.1} parent=1 // pred_fallthru
      _
    // Predicated region
    $region22: #{tpu_custom_call.1} parent=1 // pred_check
      _
    $region23: #{tpu_custom_call.1} parent=1 // pred_check_branch
      %34 = sbr.rel (0) target = $region25
    $region24: #{tpu_custom_call.1} parent=1 // pred_region
      _
    $region25: #{tpu_custom_call.1} parent=1 // pred_fallthru
      _
    // Predicated region
    $region26: #{tpu_custom_call.1} parent=1 // pred_check
      _
    $region27: #{tpu_custom_call.1} parent=1 // pred_check_branch
      %36 = sbr.rel (0) target = $region29
    $region28: #{tpu_custom_call.1} parent=1 // pred_region
      _
    $region29: #{tpu_custom_call.1} parent=1 // pred_fallthru
      _
    // Predicated region
    $region30: #{tpu_custom_call.1} parent=1 // pred_check
      _
    $region31: #{tpu_custom_call.1} parent=1 // pred_check_branch
      %38 = sbr.rel (0) target = $region33
    $region32: #{tpu_custom_call.1} parent=1 // pred_region
      %39 = dma.done [#allocation7], 512
    $region33: #{tpu_custom_call.1} parent=1 // pred_fallthru
      _
    %p41 = scmp.eq.s32.totalorder 0, 0
    // Predicated region
    $region34: #{tpu_custom_call.1} parent=1 // pred_check
      %p42 = pneg %p41
    $region35: #{tpu_custom_call.1} parent=1 // pred_check_branch
      %44 = sbr.rel (%p42) target = $region37
    $region36: #{tpu_custom_call.1} parent=1 // pred_region
      %vm45 = vcmask 261120
      %46 = vst.msk [vmem:[#allocation3] sm:$0xff] %vm45, 0.0
      %47 = vst.msk [vmem:[#allocation4] sm:$0xff] %vm45, 0.0
      %48 = vst.msk [vmem:[#allocation5] sm:$0xff] %vm45, 0.0
    $region37: #{tpu_custom_call.1} parent=1 // pred_fallthru
      _
    %v49 = vld [vmem:[%s0] sm:$0xf]
    %v50 = vld [vmem:[%s0 + $0x4] sm:$0xf]
    %v51 = vld [vmem:[%s0 + $0x8] sm:$0xf]
    %v52 = vld [vmem:[%s0 + $0xc] sm:$0xf]
    %v53 = vld [vmem:[%s0 + $0x10] sm:$0xf]
    %v54 = vld [vmem:[%s0 + $0x14] sm:$0xf]
    %v55 = vld [vmem:[%s0 + $0x18] sm:$0xf]
    %v56 = vld [vmem:[%s0 + $0x1c] sm:$0xf]
    %v57 = vld [vmem:[#allocation6] sm:$0xf]
    %v58 = vld [vmem:[#allocation6 + $0x4] sm:$0xf]
    %v59 = vld [vmem:[%s4] sm:$0x1]
    %v61 = vlaneseq
    %v62 = vshrl.u32 %v61, 7
    %v63 = vsub.s32 0, %v62
    %v64 = vrot.slane %v59, %v63
    %v74 = vunpack.c.l.b16 %v49
    %v75 = vunpack.c.l.b16 %v50
    %v76 = vunpack.c.l.b16 %v51
    %v77 = vunpack.c.l.b16 %v52
    %v78 = vunpack.c.l.b16 %v53
    %v79 = vunpack.c.l.b16 %v54
    %v80 = vunpack.c.l.b16 %v55
    %v81 = vunpack.c.l.b16 %v56
    %v82 = vpack.c.b16 %v75, %v74
    %v83 = vpack.c.b16 %v77, %v76
    %v84 = vpack.c.b16 %v79, %v78
    %v85 = vpack.c.b16 %v81, %v80
    %v88 = vunpack.c.l.b16 %v57
    %v89 = vunpack.c.l.b16 %v58
    %v90 = vpack.c.b16 %v89, %v88
    %vm92 = vcmask 130048
    %v94 = vsel %vm92, %v82, 0
    %v97 = vsel %vm92, %v83, 0
    %v100 = vsel %vm92, %v84, 0
    %v103 = vsel %vm92, %v85, 0
    %105 = vmatprep.subr.bf16.mxu0 0
    %106 = vmatpush1.bf16.msra.mxu0 0
    %107 = vmatprep.subr.bf16.mxu0 0
    %108 = vmatpush1.bf16.msra.mxu0 0
    %109 = vmatprep.subr.bf16.mxu0 0
    %110 = vmatpush1.bf16.msra.mxu0 0
    %111 = vmatprep.subr.bf16.mxu0 0
    %112 = vmatpush1.bf16.msra.mxu0 0
    %113 = vmatprep.subr.bf16.mxu0 0
    %114 = vmatpush1.bf16.msra.mxu0 0
    %115 = vmatprep.subr.bf16.mxu0 0
    %116 = vmatpush1.bf16.msra.mxu0 0
    %117 = vmatprep.subr.bf16.mxu0 0
    %118 = vmatpush1.bf16.msra.mxu0 0
    %119 = vmatprep.subr.bf16.mxu0 0
    %120 = vmatpush1.bf16.msra.mxu0 %v90
    %121 = vmatprep.subr.bf16.mxu0 0
    %122 = vmatpush2.bf16.msra.mxu0 0
    %123 = vmatprep.subr.bf16.mxu0 0
    %124 = vmatpush2.bf16.msra.mxu0 0
    %125 = vmatprep.subr.bf16.mxu0 0
    %126 = vmatpush2.bf16.msra.mxu0 0
    %127 = vmatprep.subr.bf16.mxu0 0
    %128 = vmatpush2.bf16.msra.mxu0 0
    %129 = vmatprep.subr.bf16.mxu0 0
    %130 = vmatpush2.bf16.msra.mxu0 0
    %131 = vmatprep.subr.bf16.mxu0 0
    %132 = vmatpush2.bf16.msra.mxu0 0
    %133 = vmatprep.subr.bf16.mxu0 0
    %134 = vmatpush2.bf16.msra.mxu0 0
    %135 = vmatprep.subr.bf16.mxu0 0
    %136 = vmatpush2.bf16.msra.mxu0 0
    %137 = vmatprep.mubr.bf16.mxu0 0
    %138 = vmatmul.mubr.bf16.gmra.mxu0 %v94
    %v139 = vpop.f32.mrf.mxu0
    %v140 = vadd.f32 %v64, %v139
    %v141 = vpop.f32.mrf.mxu0
    %v142 = vpop.f32.mrf.mxu0
    %v143 = vadd.f32 %v64, %v142
    %v144 = vpop.f32.mrf.mxu0
    %145 = vmatprep.mubr.bf16.mxu0 0
    %146 = vmatmul.mubr.bf16.gmra.mxu0 %v97
    %v147 = vpop.f32.mrf.mxu0
    %v148 = vadd.f32 %v64, %v147
    %v149 = vpop.f32.mrf.mxu0
    %v150 = vpop.f32.mrf.mxu0
    %v151 = vadd.f32 %v64, %v150
    %v152 = vpop.f32.mrf.mxu0
    %153 = vmatprep.mubr.bf16.mxu0 0
    %154 = vmatmul.mubr.bf16.gmra.mxu0 %v100
    %v155 = vpop.f32.mrf.mxu0
    %v156 = vadd.f32 %v64, %v155
    %v157 = vpop.f32.mrf.mxu0
    %v158 = vpop.f32.mrf.mxu0
    %v159 = vadd.f32 %v64, %v158
    %v160 = vpop.f32.mrf.mxu0
    %161 = vmatprep.mubr.bf16.mxu0 0
    %162 = vmatmul.mubr.bf16.gmra.mxu0 %v103
    %v163 = vpop.f32.mrf.mxu0
    %v164 = vadd.f32 %v64, %v163
    %v165 = vpop.f32.mrf.mxu0
    %v166 = vpop.f32.mrf.mxu0
    %v167 = vadd.f32 %v64, %v166
    %v168 = vpop.f32.mrf.mxu0
    %169 = vdwg.mxu0
    %vm170 = vcmask 261120
    %171 = vst.msk [vmem:[#allocation2] sm:$0xff] %vm170, %v140
    %172 = vst.msk [vmem:[#allocation2 + $0x8] sm:$0xff] %vm170, %v143
    %173 = vst.msk [vmem:[#allocation2 + $0x10] sm:$0xff] %vm170, %v148
    %174 = vst.msk [vmem:[#allocation2 + $0x18] sm:$0xff] %vm170, %v151
    %175 = vst.msk [vmem:[#allocation2 + $0x20] sm:$0xff] %vm170, %v156
    %176 = vst.msk [vmem:[#allocation2 + $0x28] sm:$0xff] %vm170, %v159
    %177 = vst.msk [vmem:[#allocation2 + $0x30] sm:$0xff] %vm170, %v164
    %178 = vst.msk [vmem:[#allocation2 + $0x38] sm:$0xff] %vm170, %v167
    %s179 = scalar_lea.vmem [#allocation6], 8
    %v180 = vld [vmem:[%s179] sm:$0xf]
    %v181 = vld [vmem:[%s179 + $0x4] sm:$0xf]
    %s182 = scalar_lea.vmem %s4, 1
    %v183 = vld [vmem:[%s182] sm:$0x1]
    %v185 = vlaneseq
    %v186 = vshrl.u32 %v185, 7
    %v187 = vsub.s32 0, %v186
    %v188 = vrot.slane %v183, %v187
    %v192 = vunpack.c.l.b16 %v180
    %v193 = vunpack.c.l.b16 %v181
    %v194 = vpack.c.b16 %v193, %v192
    %196 = vmatprep.subr.bf16.mxu0 0
    %197 = vmatpush1.bf16.msra.mxu0 0
    %198 = vmatprep.subr.bf16.mxu0 0
    %199 = vmatpush1.bf16.msra.mxu0 0
    %200 = vmatprep.subr.bf16.mxu0 0
    %201 = vmatpush1.bf16.msra.mxu0 0
    %202 = vmatprep.subr.bf16.mxu0 0
    %203 = vmatpush1.bf16.msra.mxu0 0
    %204 = vmatprep.subr.bf16.mxu0 0
    %205 = vmatpush1.bf16.msra.mxu0 0
    %206 = vmatprep.subr.bf16.mxu0 0
    %207 = vmatpush1.bf16.msra.mxu0 0
    %208 = vmatprep.subr.bf16.mxu0 0
    %209 = vmatpush1.bf16.msra.mxu0 0
    %210 = vmatprep.subr.bf16.mxu0 0
    %211 = vmatpush1.bf16.msra.mxu0 %v194
    %212 = vmatprep.subr.bf16.mxu0 0
    %213 = vmatpush2.bf16.msra.mxu0 0
    %214 = vmatprep.subr.bf16.mxu0 0
    %215 = vmatpush2.bf16.msra.mxu0 0
    %216 = vmatprep.subr.bf16.mxu0 0
    %217 = vmatpush2.bf16.msra.mxu0 0
    %218 = vmatprep.subr.bf16.mxu0 0
    %219 = vmatpush2.bf16.msra.mxu0 0
    %220 = vmatprep.subr.bf16.mxu0 0
    %221 = vmatpush2.bf16.msra.mxu0 0
    %222 = vmatprep.subr.bf16.mxu0 0
    %223 = vmatpush2.bf16.msra.mxu0 0
    %224 = vmatprep.subr.bf16.mxu0 0
    %225 = vmatpush2.bf16.msra.mxu0 0
    %226 = vmatprep.subr.bf16.mxu0 0
    %227 = vmatpush2.bf16.msra.mxu0 0
    %228 = vmatprep.mubr.bf16.mxu0 0
    %229 = vmatmul.mubr.bf16.gmra.mxu0 %v94
    %v230 = vpop.f32.mrf.mxu0
    %v231 = vadd.f32 %v188, %v230
    %v232 = vpop.f32.mrf.mxu0
    %v233 = vpop.f32.mrf.mxu0
    %v234 = vadd.f32 %v188, %v233
    %v235 = vpop.f32.mrf.mxu0
    %236 = vmatprep.mubr.bf16.mxu0 0
    %237 = vmatmul.mubr.bf16.gmra.mxu0 %v97
    %v238 = vpop.f32.mrf.mxu0
    %v239 = vadd.f32 %v188, %v238
    %v240 = vpop.f32.mrf.mxu0
    %v241 = vpop.f32.mrf.mxu0
    %v242 = vadd.f32 %v188, %v241
    %v243 = vpop.f32.mrf.mxu0
    %244 = vmatprep.mubr.bf16.mxu0 0
    %245 = vmatmul.mubr.bf16.gmra.mxu0 %v100
    %v246 = vpop.f32.mrf.mxu0
    %v247 = vadd.f32 %v188, %v246
    %v248 = vpop.f32.mrf.mxu0
    %v249 = vpop.f32.mrf.mxu0
    %v250 = vadd.f32 %v188, %v249
    %v251 = vpop.f32.mrf.mxu0
    %252 = vmatprep.mubr.bf16.mxu0 0
    %253 = vmatmul.mubr.bf16.gmra.mxu0 %v103
    %v254 = vpop.f32.mrf.mxu0
    %v255 = vadd.f32 %v188, %v254
    %v256 = vpop.f32.mrf.mxu0
    %v257 = vpop.f32.mrf.mxu0
    %v258 = vadd.f32 %v188, %v257
    %v259 = vpop.f32.mrf.mxu0
    %260 = vdwg.mxu0
    %s261 = scalar_lea.vmem [#allocation2], 64
    %262 = vst.msk [vmem:[%s261] sm:$0xff] %vm170, %v231
    %263 = vst.msk [vmem:[%s261 + $0x8] sm:$0xff] %vm170, %v234
    %264 = vst.msk [vmem:[%s261 + $0x10] sm:$0xff] %vm170, %v239
    %265 = vst.msk [vmem:[%s261 + $0x18] sm:$0xff] %vm170, %v242
    %266 = vst.msk [vmem:[%s261 + $0x20] sm:$0xff] %vm170, %v247
    %267 = vst.msk [vmem:[%s261 + $0x28] sm:$0xff] %vm170, %v250
    %268 = vst.msk [vmem:[%s261 + $0x30] sm:$0xff] %vm170, %v255
    %269 = vst.msk [vmem:[%s261 + $0x38] sm:$0xff] %vm170, %v258
    %s270 = scalar_lea.vmem [#allocation6], 16
    %v271 = vld [vmem:[%s270] sm:$0xf]
    %v272 = vld [vmem:[%s270 + $0x4] sm:$0xf]
    %s273 = scalar_lea.vmem %s4, 2
    %v274 = vld [vmem:[%s273] sm:$0x1]
    %v276 = vlaneseq
    %v277 = vshrl.u32 %v276, 7
    %v278 = vsub.s32 0, %v277
    %v279 = vrot.slane %v274, %v278
    %v283 = vunpack.c.l.b16 %v271
    %v284 = vunpack.c.l.b16 %v272
    %v285 = vpack.c.b16 %v284, %v283
    %287 = vmatprep.subr.bf16.mxu0 0
    %288 = vmatpush1.bf16.msra.mxu0 0
    %289 = vmatprep.subr.bf16.mxu0 0
    %290 = vmatpush1.bf16.msra.mxu0 0
    %291 = vmatprep.subr.bf16.mxu0 0
    %292 = vmatpush1.bf16.msra.mxu0 0
    %293 = vmatprep.subr.bf16.mxu0 0
    %294 = vmatpush1.bf16.msra.mxu0 0
    %295 = vmatprep.subr.bf16.mxu0 0
    %296 = vmatpush1.bf16.msra.mxu0 0
    %297 = vmatprep.subr.bf16.mxu0 0
    %298 = vmatpush1.bf16.msra.mxu0 0
    %299 = vmatprep.subr.bf16.mxu0 0
    %300 = vmatpush1.bf16.msra.mxu0 0
    %301 = vmatprep.subr.bf16.mxu0 0
    %302 = vmatpush1.bf16.msra.mxu0 %v285
    %303 = vmatprep.subr.bf16.mxu0 0
    %304 = vmatpush2.bf16.msra.mxu0 0
    %305 = vmatprep.subr.bf16.mxu0 0
    %306 = vmatpush2.bf16.msra.mxu0 0
    %307 = vmatprep.subr.bf16.mxu0 0
    %308 = vmatpush2.bf16.msra.mxu0 0
    %309 = vmatprep.subr.bf16.mxu0 0
    %310 = vmatpush2.bf16.msra.mxu0 0
    %311 = vmatprep.subr.bf16.mxu0 0
    %312 = vmatpush2.bf16.msra.mxu0 0
    %313 = vmatprep.subr.bf16.mxu0 0
    %314 = vmatpush2.bf16.msra.mxu0 0
    %315 = vmatprep.subr.bf16.mxu0 0
    %316 = vmatpush2.bf16.msra.mxu0 0
    %317 = vmatprep.subr.bf16.mxu0 0
    %318 = vmatpush2.bf16.msra.mxu0 0
    %319 = vmatprep.mubr.bf16.mxu0 0
    %320 = vmatmul.mubr.bf16.gmra.mxu0 %v94
    %v321 = vpop.f32.mrf.mxu0
    %v322 = vadd.f32 %v279, %v321
    %v323 = vpop.f32.mrf.mxu0
    %v324 = vpop.f32.mrf.mxu0
    %v325 = vadd.f32 %v279, %v324
    %v326 = vpop.f32.mrf.mxu0
    %327 = vmatprep.mubr.bf16.mxu0 0
    %328 = vmatmul.mubr.bf16.gmra.mxu0 %v97
    %v329 = vpop.f32.mrf.mxu0
    %v330 = vadd.f32 %v279, %v329
    %v331 = vpop.f32.mrf.mxu0
    %v332 = vpop.f32.mrf.mxu0
    %v333 = vadd.f32 %v279, %v332
    %v334 = vpop.f32.mrf.mxu0
    %335 = vmatprep.mubr.bf16.mxu0 0
    %336 = vmatmul.mubr.bf16.gmra.mxu0 %v100
    %v337 = vpop.f32.mrf.mxu0
    %v338 = vadd.f32 %v279, %v337
    %v339 = vpop.f32.mrf.mxu0
    %v340 = vpop.f32.mrf.mxu0
    %v341 = vadd.f32 %v279, %v340
    %v342 = vpop.f32.mrf.mxu0
    %343 = vmatprep.mubr.bf16.mxu0 0
    %344 = vmatmul.mubr.bf16.gmra.mxu0 %v103
    %v345 = vpop.f32.mrf.mxu0
    %v346 = vadd.f32 %v279, %v345
    %v347 = vpop.f32.mrf.mxu0
    %v348 = vpop.f32.mrf.mxu0
    %v349 = vadd.f32 %v279, %v348
    %v350 = vpop.f32.mrf.mxu0
    %351 = vdwg.mxu0
    %s352 = scalar_lea.vmem [#allocation2], 128
    %353 = vst.msk [vmem:[%s352] sm:$0xff] %vm170, %v322
    %354 = vst.msk [vmem:[%s352 + $0x8] sm:$0xff] %vm170, %v325
    %355 = vst.msk [vmem:[%s352 + $0x10] sm:$0xff] %vm170, %v330
    %356 = vst.msk [vmem:[%s352 + $0x18] sm:$0xff] %vm170, %v333
    %357 = vst.msk [vmem:[%s352 + $0x20] sm:$0xff] %vm170, %v338
    %358 = vst.msk [vmem:[%s352 + $0x28] sm:$0xff] %vm170, %v341
    %359 = vst.msk [vmem:[%s352 + $0x30] sm:$0xff] %vm170, %v346
    %360 = vst.msk [vmem:[%s352 + $0x38] sm:$0xff] %vm170, %v349
    %s361 = scalar_lea.vmem [#allocation6], 24
    %v362 = vld [vmem:[%s361] sm:$0xf]
    %v363 = vld [vmem:[%s361 + $0x4] sm:$0xf]
    %s364 = scalar_lea.vmem %s4, 3
    %v365 = vld [vmem:[%s364] sm:$0x1]
    %v367 = vlaneseq
    %v368 = vshrl.u32 %v367, 7
    %v369 = vsub.s32 0, %v368
    %v370 = vrot.slane %v365, %v369
    %v374 = vunpack.c.l.b16 %v362
    %v375 = vunpack.c.l.b16 %v363
    %v376 = vpack.c.b16 %v375, %v374
    %378 = vmatprep.subr.bf16.mxu0 0
    %379 = vmatpush1.bf16.msra.mxu0 0
    %380 = vmatprep.subr.bf16.mxu0 0
    %381 = vmatpush1.bf16.msra.mxu0 0
    %382 = vmatprep.subr.bf16.mxu0 0
    %383 = vmatpush1.bf16.msra.mxu0 0
    %384 = vmatprep.subr.bf16.mxu0 0
    %385 = vmatpush1.bf16.msra.mxu0 0
    %386 = vmatprep.subr.bf16.mxu0 0
    %387 = vmatpush1.bf16.msra.mxu0 0
    %388 = vmatprep.subr.bf16.mxu0 0
    %389 = vmatpush1.bf16.msra.mxu0 0
    %390 = vmatprep.subr.bf16.mxu0 0
    %391 = vmatpush1.bf16.msra.mxu0 0
    %392 = vmatprep.subr.bf16.mxu0 0
    %393 = vmatpush1.bf16.msra.mxu0 %v376
    %394 = vmatprep.subr.bf16.mxu0 0
    %395 = vmatpush2.bf16.msra.mxu0 0
    %396 = vmatprep.subr.bf16.mxu0 0
    %397 = vmatpush2.bf16.msra.mxu0 0
    %398 = vmatprep.subr.bf16.mxu0 0
    %399 = vmatpush2.bf16.msra.mxu0 0
    %400 = vmatprep.subr.bf16.mxu0 0
    %401 = vmatpush2.bf16.msra.mxu0 0
    %402 = vmatprep.subr.bf16.mxu0 0
    %403 = vmatpush2.bf16.msra.mxu0 0
    %404 = vmatprep.subr.bf16.mxu0 0
    %405 = vmatpush2.bf16.msra.mxu0 0
    %406 = vmatprep.subr.bf16.mxu0 0
    %407 = vmatpush2.bf16.msra.mxu0 0
    %408 = vmatprep.subr.bf16.mxu0 0
    %409 = vmatpush2.bf16.msra.mxu0 0
    %410 = vmatprep.mubr.bf16.mxu0 0
    %411 = vmatmul.mubr.bf16.gmra.mxu0 %v94
    %v412 = vpop.f32.mrf.mxu0
    %v413 = vadd.f32 %v370, %v412
    %v414 = vpop.f32.mrf.mxu0
    %v415 = vpop.f32.mrf.mxu0
    %v416 = vadd.f32 %v370, %v415
    %v417 = vpop.f32.mrf.mxu0
    %418 = vmatprep.mubr.bf16.mxu0 0
    %419 = vmatmul.mubr.bf16.gmra.mxu0 %v97
    %v420 = vpop.f32.mrf.mxu0
    %v421 = vadd.f32 %v370, %v420
    %v422 = vpop.f32.mrf.mxu0
    %v423 = vpop.f32.mrf.mxu0
    %v424 = vadd.f32 %v370, %v423
    %v425 = vpop.f32.mrf.mxu0
    %426 = vmatprep.mubr.bf16.mxu0 0
    %427 = vmatmul.mubr.bf16.gmra.mxu0 %v100
    %v428 = vpop.f32.mrf.mxu0
    %v429 = vadd.f32 %v370, %v428
    %v430 = vpop.f32.mrf.mxu0
    %v431 = vpop.f32.mrf.mxu0
    %v432 = vadd.f32 %v370, %v431
    %v433 = vpop.f32.mrf.mxu0
    %434 = vmatprep.mubr.bf16.mxu0 0
    %435 = vmatmul.mubr.bf16.gmra.mxu0 %v103
    %v436 = vpop.f32.mrf.mxu0
    %v437 = vadd.f32 %v370, %v436
    %v438 = vpop.f32.mrf.mxu0
    %v439 = vpop.f32.mrf.mxu0
    %v440 = vadd.f32 %v370, %v439
    %v441 = vpop.f32.mrf.mxu0
    %442 = vdwg.mxu0
    %s443 = scalar_lea.vmem [#allocation2], 192
    %444 = vst.msk [vmem:[%s443] sm:$0xff] %vm170, %v413
    %445 = vst.msk [vmem:[%s443 + $0x8] sm:$0xff] %vm170, %v416
    %446 = vst.msk [vmem:[%s443 + $0x10] sm:$0xff] %vm170, %v421
    %447 = vst.msk [vmem:[%s443 + $0x18] sm:$0xff] %vm170, %v424
    %448 = vst.msk [vmem:[%s443 + $0x20] sm:$0xff] %vm170, %v429
    %449 = vst.msk [vmem:[%s443 + $0x28] sm:$0xff] %vm170, %v432
    %450 = vst.msk [vmem:[%s443 + $0x30] sm:$0xff] %vm170, %v437
    %451 = vst.msk [vmem:[%s443 + $0x38] sm:$0xff] %vm170, %v440
    %v452 = vld [vmem:[%s1] sm:$0xff]
    %v453 = vsub.s32 %v452, 1
    %s454 = smul.u32 0, 8
    %v455 = vld [vmem:[#allocation3] sm:$0xff]
    %v456 = vld [vmem:[#allocation4] sm:$0xff]
    %v457 = vld [vmem:[#allocation5] sm:$0xff]
    %v458 = vpack.c.bf16 %v455, %v455
    %v459 = vld [vmem:[#allocation2] sm:$0xff]
    %v460 = vld [vmem:[%s3] sm:$0xf]
    %v461 = vld [vmem:[%s3 + $0x4] sm:$0xf]
    %v462 = vld [vmem:[%s3 + $0x8] sm:$0xf]
    %v463 = vld [vmem:[%s3 + $0xc] sm:$0xf]
    %v468 = vunpack.c.l.b16 %v460
    %v469 = vunpack.c.l.b16 %v461
    %v470 = vunpack.c.l.b16 %v462
    %v471 = vunpack.c.l.b16 %v463
    %v472 = vpack.c.b16 %v469, %v468
    %v473 = vpack.c.b16 %v471, %v470
    %v477 = vsel %vm170, %v458, 0
    %479 = vmatprep.subr.bf16.mxu0 0
    %480 = vmatpush1.bf16.msra.mxu0 0
    %481 = vmatprep.subr.bf16.mxu0 0
    %482 = vmatpush1.bf16.msra.mxu0 0
    %483 = vmatprep.subr.bf16.mxu0 0
    %484 = vmatpush1.bf16.msra.mxu0 0
    %485 = vmatprep.subr.bf16.mxu0 0
    %486 = vmatpush1.bf16.msra.mxu0 0
    %487 = vmatprep.subr.bf16.mxu0 0
    %488 = vmatpush1.bf16.msra.mxu0 0
    %489 = vmatprep.subr.bf16.mxu0 0
    %490 = vmatpush1.bf16.msra.mxu0 0
    %491 = vmatprep.subr.bf16.mxu0 0
    %492 = vmatpush1.bf16.msra.mxu0 %v473
    %493 = vmatprep.subr.bf16.mxu0 0
    %494 = vmatpush1.bf16.msra.mxu0 %v472
    %495 = vmatprep.subr.bf16.mxu0 0
    %496 = vmatpush2.bf16.msra.mxu0 0
    %497 = vmatprep.subr.bf16.mxu0 0
    %498 = vmatpush2.bf16.msra.mxu0 0
    %499 = vmatprep.subr.bf16.mxu0 0
    %500 = vmatpush2.bf16.msra.mxu0 0
    %501 = vmatprep.subr.bf16.mxu0 0
    %502 = vmatpush2.bf16.msra.mxu0 0
    %503 = vmatprep.subr.bf16.mxu0 0
    %504 = vmatpush2.bf16.msra.mxu0 0
    %505 = vmatprep.subr.bf16.mxu0 0
    %506 = vmatpush2.bf16.msra.mxu0 0
    %507 = vmatprep.subr.bf16.mxu0 0
    %508 = vmatpush2.bf16.msra.mxu0 0
    %509 = vmatprep.subr.bf16.mxu0 0
    %510 = vmatpush2.bf16.msra.mxu0 0
    %511 = vmatprep.mubr.bf16.mxu0 0
    %512 = vmatmul.mubr.bf16.gmra.mxu0 %v477
    %v513 = vpop.f32.mrf.mxu0
    %v514 = vadd.f32 0.0, %v513
    %v515 = vpop.f32.mrf.mxu0
    %v516 = vpop.f32.mrf.mxu0
    %v517 = vpop.f32.mrf.mxu0
    %518 = vdwg.mxu0
    %v519 = vadd.f32 %v459, %v514
    %s520 = sadd.s32 0, 64
    %s521 = scalar_lea.vmem [#allocation2], %s520
    %v522 = vld [vmem:[%s521] sm:$0xff]
    %s523 = scalar_lea.vmem %s3, 16
    %v524 = vld [vmem:[%s523] sm:$0xf]
    %v525 = vld [vmem:[%s523 + $0x4] sm:$0xf]
    %v526 = vld [vmem:[%s523 + $0x8] sm:$0xf]
    %v527 = vld [vmem:[%s523 + $0xc] sm:$0xf]
    %v532 = vunpack.c.l.b16 %v524
    %v533 = vunpack.c.l.b16 %v525
    %v534 = vunpack.c.l.b16 %v526
    %v535 = vunpack.c.l.b16 %v527
    %v536 = vpack.c.b16 %v533, %v532
    %v537 = vpack.c.b16 %v535, %v534
    %540 = vmatprep.subr.bf16.mxu0 0
    %541 = vmatpush1.bf16.msra.mxu0 0
    %542 = vmatprep.subr.bf16.mxu0 0
    %543 = vmatpush1.bf16.msra.mxu0 0
    %544 = vmatprep.subr.bf16.mxu0 0
    %545 = vmatpush1.bf16.msra.mxu0 0
    %546 = vmatprep.subr.bf16.mxu0 0
    %547 = vmatpush1.bf16.msra.mxu0 0
    %548 = vmatprep.subr.bf16.mxu0 0
    %549 = vmatpush1.bf16.msra.mxu0 0
    %550 = vmatprep.subr.bf16.mxu0 0
    %551 = vmatpush1.bf16.msra.mxu0 0
    %552 = vmatprep.subr.bf16.mxu0 0
    %553 = vmatpush1.bf16.msra.mxu0 %v537
    %554 = vmatprep.subr.bf16.mxu0 0
    %555 = vmatpush1.bf16.msra.mxu0 %v536
    %556 = vmatprep.subr.bf16.mxu0 0
    %557 = vmatpush2.bf16.msra.mxu0 0
    %558 = vmatprep.subr.bf16.mxu0 0
    %559 = vmatpush2.bf16.msra.mxu0 0
    %560 = vmatprep.subr.bf16.mxu0 0
    %561 = vmatpush2.bf16.msra.mxu0 0
    %562 = vmatprep.subr.bf16.mxu0 0
    %563 = vmatpush2.bf16.msra.mxu0 0
    %564 = vmatprep.subr.bf16.mxu0 0
    %565 = vmatpush2.bf16.msra.mxu0 0
    %566 = vmatprep.subr.bf16.mxu0 0
    %567 = vmatpush2.bf16.msra.mxu0 0
    %568 = vmatprep.subr.bf16.mxu0 0
    %569 = vmatpush2.bf16.msra.mxu0 0
    %570 = vmatprep.subr.bf16.mxu0 0
    %571 = vmatpush2.bf16.msra.mxu0 0
    %572 = vmatprep.mubr.bf16.mxu0 0
    %573 = vmatmul.mubr.bf16.gmra.mxu0 %v477
    %v574 = vpop.f32.mrf.mxu0
    %v575 = vadd.f32 0.0, %v574
    %v576 = vpop.f32.mrf.mxu0
    %v577 = vpop.f32.mrf.mxu0
    %v578 = vpop.f32.mrf.mxu0
    %579 = vdwg.mxu0
    %v580 = vadd.f32 %v522, %v575
    %s581 = sadd.s32 0, 128
    %s582 = scalar_lea.vmem [#allocation2], %s581
    %v583 = vld [vmem:[%s582] sm:$0xff]
    %s584 = scalar_lea.vmem %s3, 32
    %v585 = vld [vmem:[%s584] sm:$0xf]
    %v586 = vld [vmem:[%s584 + $0x4] sm:$0xf]
    %v587 = vld [vmem:[%s584 + $0x8] sm:$0xf]
    %v588 = vld [vmem:[%s584 + $0xc] sm:$0xf]
    %v593 = vunpack.c.l.b16 %v585
    %v594 = vunpack.c.l.b16 %v586
    %v595 = vunpack.c.l.b16 %v587
    %v596 = vunpack.c.l.b16 %v588
    %v597 = vpack.c.b16 %v594, %v593
    %v598 = vpack.c.b16 %v596, %v595
    %601 = vmatprep.subr.bf16.mxu0 0
    %602 = vmatpush1.bf16.msra.mxu0 0
    %603 = vmatprep.subr.bf16.mxu0 0
    %604 = vmatpush1.bf16.msra.mxu0 0
    %605 = vmatprep.subr.bf16.mxu0 0
    %606 = vmatpush1.bf16.msra.mxu0 0
    %607 = vmatprep.subr.bf16.mxu0 0
    %608 = vmatpush1.bf16.msra.mxu0 0
    %609 = vmatprep.subr.bf16.mxu0 0
    %610 = vmatpush1.bf16.msra.mxu0 0
    %611 = vmatprep.subr.bf16.mxu0 0
    %612 = vmatpush1.bf16.msra.mxu0 0
    %613 = vmatprep.subr.bf16.mxu0 0
    %614 = vmatpush1.bf16.msra.mxu0 %v598
    %615 = vmatprep.subr.bf16.mxu0 0
    %616 = vmatpush1.bf16.msra.mxu0 %v597
    %617 = vmatprep.subr.bf16.mxu0 0
    %618 = vmatpush2.bf16.msra.mxu0 0
    %619 = vmatprep.subr.bf16.mxu0 0
    %620 = vmatpush2.bf16.msra.mxu0 0
    %621 = vmatprep.subr.bf16.mxu0 0
    %622 = vmatpush2.bf16.msra.mxu0 0
    %623 = vmatprep.subr.bf16.mxu0 0
    %624 = vmatpush2.bf16.msra.mxu0 0
    %625 = vmatprep.subr.bf16.mxu0 0
    %626 = vmatpush2.bf16.msra.mxu0 0
    %627 = vmatprep.subr.bf16.mxu0 0
    %628 = vmatpush2.bf16.msra.mxu0 0
    %629 = vmatprep.subr.bf16.mxu0 0
    %630 = vmatpush2.bf16.msra.mxu0 0
    %631 = vmatprep.subr.bf16.mxu0 0
    %632 = vmatpush2.bf16.msra.mxu0 0
    %633 = vmatprep.mubr.bf16.mxu0 0
    %634 = vmatmul.mubr.bf16.gmra.mxu0 %v477
    %v635 = vpop.f32.mrf.mxu0
    %v636 = vadd.f32 0.0, %v635
    %v637 = vpop.f32.mrf.mxu0
    %v638 = vpop.f32.mrf.mxu0
    %v639 = vpop.f32.mrf.mxu0
    %640 = vdwg.mxu0
    %v641 = vadd.f32 %v583, %v636
    %s642 = sadd.s32 0, 192
    %s643 = scalar_lea.vmem [#allocation2], %s642
    %v644 = vld [vmem:[%s643] sm:$0xff]
    %s645 = scalar_lea.vmem %s3, 48
    %v646 = vld [vmem:[%s645] sm:$0xf]
    %v647 = vld [vmem:[%s645 + $0x4] sm:$0xf]
    %v648 = vld [vmem:[%s645 + $0x8] sm:$0xf]
    %v649 = vld [vmem:[%s645 + $0xc] sm:$0xf]
    %v654 = vunpack.c.l.b16 %v646
    %v655 = vunpack.c.l.b16 %v647
    %v656 = vunpack.c.l.b16 %v648
    %v657 = vunpack.c.l.b16 %v649
    %v658 = vpack.c.b16 %v655, %v654
    %v659 = vpack.c.b16 %v657, %v656
    %662 = vmatprep.subr.bf16.mxu0 0
    %663 = vmatpush1.bf16.msra.mxu0 0
    %664 = vmatprep.subr.bf16.mxu0 0
    %665 = vmatpush1.bf16.msra.mxu0 0
    %666 = vmatprep.subr.bf16.mxu0 0
    %667 = vmatpush1.bf16.msra.mxu0 0
    %668 = vmatprep.subr.bf16.mxu0 0
    %669 = vmatpush1.bf16.msra.mxu0 0
    %670 = vmatprep.subr.bf16.mxu0 0
    %671 = vmatpush1.bf16.msra.mxu0 0
    %672 = vmatprep.subr.bf16.mxu0 0
    %673 = vmatpush1.bf16.msra.mxu0 0
    %674 = vmatprep.subr.bf16.mxu0 0
    %675 = vmatpush1.bf16.msra.mxu0 %v659
    %676 = vmatprep.subr.bf16.mxu0 0
    %677 = vmatpush1.bf16.msra.mxu0 %v658
    %678 = vmatprep.subr.bf16.mxu0 0
    %679 = vmatpush2.bf16.msra.mxu0 0
    %680 = vmatprep.subr.bf16.mxu0 0
    %681 = vmatpush2.bf16.msra.mxu0 0
    %682 = vmatprep.subr.bf16.mxu0 0
    %683 = vmatpush2.bf16.msra.mxu0 0
    %684 = vmatprep.subr.bf16.mxu0 0
    %685 = vmatpush2.bf16.msra.mxu0 0
    %686 = vmatprep.subr.bf16.mxu0 0
    %687 = vmatpush2.bf16.msra.mxu0 0
    %688 = vmatprep.subr.bf16.mxu0 0
    %689 = vmatpush2.bf16.msra.mxu0 0
    %690 = vmatprep.subr.bf16.mxu0 0
    %691 = vmatpush2.bf16.msra.mxu0 0
    %692 = vmatprep.subr.bf16.mxu0 0
    %693 = vmatpush2.bf16.msra.mxu0 0
    %694 = vmatprep.mubr.bf16.mxu0 0
    %695 = vmatmul.mubr.bf16.gmra.mxu0 %v477
    %v696 = vpop.f32.mrf.mxu0
    %v697 = vadd.f32 0.0, %v696
    %v698 = vpop.f32.mrf.mxu0
    %v699 = vpop.f32.mrf.mxu0
    %v700 = vpop.f32.mrf.mxu0
    %701 = vdwg.mxu0
    %v702 = vadd.f32 %v644, %v697
    %v703 = vxor.u32 %v519, 2147483648
    %v704 = vmul.f32 %v703, 1.442695
    %v705 = vpow.pop %v704
    %v706 = vadd.f32 %v705, 1.0
    %v707 = vrcp.pop %v706
    %v708 = vmul.f32 1.0, %v707
    %v709 = vxor.u32 %v580, 2147483648
    %v710 = vmul.f32 %v709, 1.442695
    %v711 = vpow.pop %v710
    %v712 = vadd.f32 %v711, 1.0
    %v713 = vrcp.pop %v712
    %v714 = vmul.f32 1.0, %v713
    %v715 = vtanh.pop %v641
    %v716 = vxor.u32 %v702, 2147483648
    %v717 = vmul.f32 %v716, 1.442695
    %v718 = vpow.pop %v717
    %v719 = vadd.f32 %v718, 1.0
    %v720 = vrcp.pop %v719
    %v721 = vmul.f32 1.0, %v720
    %v722 = vmul.f32 %v714, %v456
    %v723 = vmul.f32 %v708, %v715
    %v724 = vadd.f32 %v722, %v723
    %v725 = vtanh.pop %v724
    %v726 = vmul.f32 %v721, %v725
    %v727 = vstv %s454
    %vm728 = vcmp.eq.s32.totalorder %v453, %v727
    %v729 = vsel %vm728, 1, 0
    %730 = vset.pattern.permute.xlu0 0
    %731 = vperm.xlu0 %730, %v729
    %v732 = vpop.permute.xlu0 %731
    %vm733 = vcmp.eq.s32.totalorder %v732, 1
    %v734 = vsel %vm733, %v726, %v457
    %v735 = vpack.c.bf16 %v726, %v726
    %s736 = scalar_lea.vmem [#allocation2], 8
    %v737 = vld [vmem:[%s736] sm:$0xff]
    %v739 = vsel %vm170, %v735, 0
    %741 = vmatprep.subr.bf16.mxu0 0
    %742 = vmatpush1.bf16.msra.mxu0 0
    %743 = vmatprep.subr.bf16.mxu0 0
    %744 = vmatpush1.bf16.msra.mxu0 0
    %745 = vmatprep.subr.bf16.mxu0 0
    %746 = vmatpush1.bf16.msra.mxu0 0
    %747 = vmatprep.subr.bf16.mxu0 0
    %748 = vmatpush1.bf16.msra.mxu0 0
    %749 = vmatprep.subr.bf16.mxu0 0
    %750 = vmatpush1.bf16.msra.mxu0 0
    %751 = vmatprep.subr.bf16.mxu0 0
    %752 = vmatpush1.bf16.msra.mxu0 0
    %753 = vmatprep.subr.bf16.mxu0 0
    %754 = vmatpush1.bf16.msra.mxu0 %v473
    %755 = vmatprep.subr.bf16.mxu0 0
    %756 = vmatpush1.bf16.msra.mxu0 %v472
    %757 = vmatprep.subr.bf16.mxu0 0
    %758 = vmatpush2.bf16.msra.mxu0 0
    %759 = vmatprep.subr.bf16.mxu0 0
    %760 = vmatpush2.bf16.msra.mxu0 0
    %761 = vmatprep.subr.bf16.mxu0 0
    %762 = vmatpush2.bf16.msra.mxu0 0
    %763 = vmatprep.subr.bf16.mxu0 0
    %764 = vmatpush2.bf16.msra.mxu0 0
    %765 = vmatprep.subr.bf16.mxu0 0
    %766 = vmatpush2.bf16.msra.mxu0 0
    %767 = vmatprep.subr.bf16.mxu0 0
    %768 = vmatpush2.bf16.msra.mxu0 0
    %769 = vmatprep.subr.bf16.mxu0 0
    %770 = vmatpush2.bf16.msra.mxu0 0
    %771 = vmatprep.subr.bf16.mxu0 0
    %772 = vmatpush2.bf16.msra.mxu0 0
    %773 = vmatprep.mubr.bf16.mxu0 0
    %774 = vmatmul.mubr.bf16.gmra.mxu0 %v739
    %v775 = vpop.f32.mrf.mxu0
    %v776 = vadd.f32 0.0, %v775
    %v777 = vpop.f32.mrf.mxu0
    %v778 = vpop.f32.mrf.mxu0
    %v779 = vpop.f32.mrf.mxu0
    %780 = vdwg.mxu0
    %v781 = vadd.f32 %v737, %v776
    %s782 = sadd.s32 8, 64
    %s783 = scalar_lea.vmem [#allocation2], %s782
    %v784 = vld [vmem:[%s783] sm:$0xff]
    %785 = vmatprep.subr.bf16.mxu0 0
    %786 = vmatpush1.bf16.msra.mxu0 0
    %787 = vmatprep.subr.bf16.mxu0 0
    %788 = vmatpush1.bf16.msra.mxu0 0
    %789 = vmatprep.subr.bf16.mxu0 0
    %790 = vmatpush1.bf16.msra.mxu0 0
    %791 = vmatprep.subr.bf16.mxu0 0
    %792 = vmatpush1.bf16.msra.mxu0 0
    %793 = vmatprep.subr.bf16.mxu0 0
    %794 = vmatpush1.bf16.msra.mxu0 0
    %795 = vmatprep.subr.bf16.mxu0 0
    %796 = vmatpush1.bf16.msra.mxu0 0
    %797 = vmatprep.subr.bf16.mxu0 0
    %798 = vmatpush1.bf16.msra.mxu0 %v537
    %799 = vmatprep.subr.bf16.mxu0 0
    %800 = vmatpush1.bf16.msra.mxu0 %v536
    %801 = vmatprep.subr.bf16.mxu0 0
    %802 = vmatpush2.bf16.msra.mxu0 0
    %803 = vmatprep.subr.bf16.mxu0 0
    %804 = vmatpush2.bf16.msra.mxu0 0
    %805 = vmatprep.subr.bf16.mxu0 0
    %806 = vmatpush2.bf16.msra.mxu0 0
    %807 = vmatprep.subr.bf16.mxu0 0
    %808 = vmatpush2.bf16.msra.mxu0 0
    %809 = vmatprep.subr.bf16.mxu0 0
    %810 = vmatpush2.bf16.msra.mxu0 0
    %811 = vmatprep.subr.bf16.mxu0 0
    %812 = vmatpush2.bf16.msra.mxu0 0
    %813 = vmatprep.subr.bf16.mxu0 0
    %814 = vmatpush2.bf16.msra.mxu0 0
    %815 = vmatprep.subr.bf16.mxu0 0
    %816 = vmatpush2.bf16.msra.mxu0 0
    %817 = vmatprep.mubr.bf16.mxu0 0
    %818 = vmatmul.mubr.bf16.gmra.mxu0 %v739
    %v819 = vpop.f32.mrf.mxu0
    %v820 = vadd.f32 0.0, %v819
    %v821 = vpop.f32.mrf.mxu0
    %v822 = vpop.f32.mrf.mxu0
    %v823 = vpop.f32.mrf.mxu0
    %824 = vdwg.mxu0
    %v825 = vadd.f32 %v784, %v820
    %s826 = sadd.s32 8, 128
    %s827 = scalar_lea.vmem [#allocation2], %s826
    %v828 = vld [vmem:[%s827] sm:$0xff]
    %829 = vmatprep.subr.bf16.mxu0 0
    %830 = vmatpush1.bf16.msra.mxu0 0
    %831 = vmatprep.subr.bf16.mxu0 0
    %832 = vmatpush1.bf16.msra.mxu0 0
    %833 = vmatprep.subr.bf16.mxu0 0
    %834 = vmatpush1.bf16.msra.mxu0 0
    %835 = vmatprep.subr.bf16.mxu0 0
    %836 = vmatpush1.bf16.msra.mxu0 0
    %837 = vmatprep.subr.bf16.mxu0 0
    %838 = vmatpush1.bf16.msra.mxu0 0
    %839 = vmatprep.subr.bf16.mxu0 0
    %840 = vmatpush1.bf16.msra.mxu0 0
    %841 = vmatprep.subr.bf16.mxu0 0
    %842 = vmatpush1.bf16.msra.mxu0 %v598
    %843 = vmatprep.subr.bf16.mxu0 0
    %844 = vmatpush1.bf16.msra.mxu0 %v597
    %845 = vmatprep.subr.bf16.mxu0 0
    %846 = vmatpush2.bf16.msra.mxu0 0
    %847 = vmatprep.subr.bf16.mxu0 0
    %848 = vmatpush2.bf16.msra.mxu0 0
    %849 = vmatprep.subr.bf16.mxu0 0
    %850 = vmatpush2.bf16.msra.mxu0 0
    %851 = vmatprep.subr.bf16.mxu0 0
    %852 = vmatpush2.bf16.msra.mxu0 0
    %853 = vmatprep.subr.bf16.mxu0 0
    %854 = vmatpush2.bf16.msra.mxu0 0
    %855 = vmatprep.subr.bf16.mxu0 0
    %856 = vmatpush2.bf16.msra.mxu0 0
    %857 = vmatprep.subr.bf16.mxu0 0
    %858 = vmatpush2.bf16.msra.mxu0 0
    %859 = vmatprep.subr.bf16.mxu0 0
    %860 = vmatpush2.bf16.msra.mxu0 0
    %861 = vmatprep.mubr.bf16.mxu0 0
    %862 = vmatmul.mubr.bf16.gmra.mxu0 %v739
    %v863 = vpop.f32.mrf.mxu0
    %v864 = vadd.f32 0.0, %v863
    %v865 = vpop.f32.mrf.mxu0
    %v866 = vpop.f32.mrf.mxu0
    %v867 = vpop.f32.mrf.mxu0
    %868 = vdwg.mxu0
    %v869 = vadd.f32 %v828, %v864
    %s870 = sadd.s32 8, 192
    %s871 = scalar_lea.vmem [#allocation2], %s870
    %v872 = vld [vmem:[%s871] sm:$0xff]
    %873 = vmatprep.subr.bf16.mxu0 0
    %874 = vmatpush1.bf16.msra.mxu0 0
    %875 = vmatprep.subr.bf16.mxu0 0
    %876 = vmatpush1.bf16.msra.mxu0 0
    %877 = vmatprep.subr.bf16.mxu0 0
    %878 = vmatpush1.bf16.msra.mxu0 0
    %879 = vmatprep.subr.bf16.mxu0 0
    %880 = vmatpush1.bf16.msra.mxu0 0
    %881 = vmatprep.subr.bf16.mxu0 0
    %882 = vmatpush1.bf16.msra.mxu0 0
    %883 = vmatprep.subr.bf16.mxu0 0
    %884 = vmatpush1.bf16.msra.mxu0 0
    %885 = vmatprep.subr.bf16.mxu0 0
    %886 = vmatpush1.bf16.msra.mxu0 %v659
    %887 = vmatprep.subr.bf16.mxu0 0
    %888 = vmatpush1.bf16.msra.mxu0 %v658
    %889 = vmatprep.subr.bf16.mxu0 0
    %890 = vmatpush2.bf16.msra.mxu0 0
    %891 = vmatprep.subr.bf16.mxu0 0
    %892 = vmatpush2.bf16.msra.mxu0 0
    %893 = vmatprep.subr.bf16.mxu0 0
    %894 = vmatpush2.bf16.msra.mxu0 0
    %895 = vmatprep.subr.bf16.mxu0 0
    %896 = vmatpush2.bf16.msra.mxu0 0
    %897 = vmatprep.subr.bf16.mxu0 0
    %898 = vmatpush2.bf16.msra.mxu0 0
    %899 = vmatprep.subr.bf16.mxu0 0
    %900 = vmatpush2.bf16.msra.mxu0 0
    %901 = vmatprep.subr.bf16.mxu0 0
    %902 = vmatpush2.bf16.msra.mxu0 0
    %903 = vmatprep.subr.bf16.mxu0 0
    %904 = vmatpush2.bf16.msra.mxu0 0
    %905 = vmatprep.mubr.bf16.mxu0 0
    %906 = vmatmul.mubr.bf16.gmra.mxu0 %v739
    %v907 = vpop.f32.mrf.mxu0
    %v908 = vadd.f32 0.0, %v907
    %v909 = vpop.f32.mrf.mxu0
    %v910 = vpop.f32.mrf.mxu0
    %v911 = vpop.f32.mrf.mxu0
    %912 = vdwg.mxu0
    %v913 = vadd.f32 %v872, %v908
    %v914 = vxor.u32 %v781, 2147483648
    %v915 = vmul.f32 %v914, 1.442695
    %v916 = vpow.pop %v915
    %v917 = vadd.f32 %v916, 1.0
    %v918 = vrcp.pop %v917
    %v919 = vmul.f32 1.0, %v918
    %v920 = vxor.u32 %v825, 2147483648
    %v921 = vmul.f32 %v920, 1.442695
    %v922 = vpow.pop %v921
    %v923 = vadd.f32 %v922, 1.0
    %v924 = vrcp.pop %v923
    %v925 = vmul.f32 1.0, %v924
    %v926 = vtanh.pop %v869
    %v927 = vxor.u32 %v913, 2147483648
    %v928 = vmul.f32 %v927, 1.442695
    %v929 = vpow.pop %v928
    %v930 = vadd.f32 %v929, 1.0
    %v931 = vrcp.pop %v930
    %v932 = vmul.f32 1.0, %v931
    %v933 = vmul.f32 %v925, %v724
    %v934 = vmul.f32 %v919, %v926
    %v935 = vadd.f32 %v933, %v934
    %v936 = vtanh.pop %v935
    %v937 = vmul.f32 %v932, %v936
    %s938 = sadd.s32 %s454, 1
    %v939 = vstv %s938
    %vm940 = vcmp.eq.s32.totalorder %v453, %v939
    %v941 = vsel %vm940, 1, 0
    %942 = vset.pattern.permute.xlu0 0
    %943 = vperm.xlu0 %942, %v941
    %v944 = vpop.permute.xlu0 %943
    %vm945 = vcmp.eq.s32.totalorder %v944, 1
    %v946 = vsel %vm945, %v937, %v734
    %v947 = vpack.c.bf16 %v937, %v937
    %s948 = scalar_lea.vmem [#allocation2], 16
    %v949 = vld [vmem:[%s948] sm:$0xff]
    %v951 = vsel %vm170, %v947, 0
    %953 = vmatprep.subr.bf16.mxu0 0
    %954 = vmatpush1.bf16.msra.mxu0 0
    %955 = vmatprep.subr.bf16.mxu0 0
    %956 = vmatpush1.bf16.msra.mxu0 0
    %957 = vmatprep.subr.bf16.mxu0 0
    %958 = vmatpush1.bf16.msra.mxu0 0
    %959 = vmatprep.subr.bf16.mxu0 0
    %960 = vmatpush1.bf16.msra.mxu0 0
    %961 = vmatprep.subr.bf16.mxu0 0
    %962 = vmatpush1.bf16.msra.mxu0 0
    %963 = vmatprep.subr.bf16.mxu0 0
    %964 = vmatpush1.bf16.msra.mxu0 0
    %965 = vmatprep.subr.bf16.mxu0 0
    %966 = vmatpush1.bf16.msra.mxu0 %v473
    %967 = vmatprep.subr.bf16.mxu0 0
    %968 = vmatpush1.bf16.msra.mxu0 %v472
    %969 = vmatprep.subr.bf16.mxu0 0
    %970 = vmatpush2.bf16.msra.mxu0 0
    %971 = vmatprep.subr.bf16.mxu0 0
    %972 = vmatpush2.bf16.msra.mxu0 0
    %973 = vmatprep.subr.bf16.mxu0 0
    %974 = vmatpush2.bf16.msra.mxu0 0
    %975 = vmatprep.subr.bf16.mxu0 0
    %976 = vmatpush2.bf16.msra.mxu0 0
    %977 = vmatprep.subr.bf16.mxu0 0
    %978 = vmatpush2.bf16.msra.mxu0 0
    %979 = vmatprep.subr.bf16.mxu0 0
    %980 = vmatpush2.bf16.msra.mxu0 0
    %981 = vmatprep.subr.bf16.mxu0 0
    %982 = vmatpush2.bf16.msra.mxu0 0
    %983 = vmatprep.subr.bf16.mxu0 0
    %984 = vmatpush2.bf16.msra.mxu0 0
    %985 = vmatprep.mubr.bf16.mxu0 0
    %986 = vmatmul.mubr.bf16.gmra.mxu0 %v951
    %v987 = vpop.f32.mrf.mxu0
    %v988 = vadd.f32 0.0, %v987
    %v989 = vpop.f32.mrf.mxu0
    %v990 = vpop.f32.mrf.mxu0
    %v991 = vpop.f32.mrf.mxu0
    %992 = vdwg.mxu0
    %v993 = vadd.f32 %v949, %v988
    %s994 = sadd.s32 16, 64
    %s995 = scalar_lea.vmem [#allocation2], %s994
    %v996 = vld [vmem:[%s995] sm:$0xff]
    %997 = vmatprep.subr.bf16.mxu0 0
    %998 = vmatpush1.bf16.msra.mxu0 0
    %999 = vmatprep.subr.bf16.mxu0 0
    %1000 = vmatpush1.bf16.msra.mxu0 0
    %1001 = vmatprep.subr.bf16.mxu0 0
    %1002 = vmatpush1.bf16.msra.mxu0 0
    %1003 = vmatprep.subr.bf16.mxu0 0
    %1004 = vmatpush1.bf16.msra.mxu0 0
    %1005 = vmatprep.subr.bf16.mxu0 0
    %1006 = vmatpush1.bf16.msra.mxu0 0
    %1007 = vmatprep.subr.bf16.mxu0 0
    %1008 = vmatpush1.bf16.msra.mxu0 0
    %1009 = vmatprep.subr.bf16.mxu0 0
    %1010 = vmatpush1.bf16.msra.mxu0 %v537
    %1011 = vmatprep.subr.bf16.mxu0 0
    %1012 = vmatpush1.bf16.msra.mxu0 %v536
    %1013 = vmatprep.subr.bf16.mxu0 0
    %1014 = vmatpush2.bf16.msra.mxu0 0
    %1015 = vmatprep.subr.bf16.mxu0 0
    %1016 = vmatpush2.bf16.msra.mxu0 0
    %1017 = vmatprep.subr.bf16.mxu0 0
    %1018 = vmatpush2.bf16.msra.mxu0 0
    %1019 = vmatprep.subr.bf16.mxu0 0
    %1020 = vmatpush2.bf16.msra.mxu0 0
    %1021 = vmatprep.subr.bf16.mxu0 0
    %1022 = vmatpush2.bf16.msra.mxu0 0
    %1023 = vmatprep.subr.bf16.mxu0 0
    %1024 = vmatpush2.bf16.msra.mxu0 0
    %1025 = vmatprep.subr.bf16.mxu0 0
    %1026 = vmatpush2.bf16.msra.mxu0 0
    %1027 = vmatprep.subr.bf16.mxu0 0
    %1028 = vmatpush2.bf16.msra.mxu0 0
    %1029 = vmatprep.mubr.bf16.mxu0 0
    %1030 = vmatmul.mubr.bf16.gmra.mxu0 %v951
    %v1031 = vpop.f32.mrf.mxu0
    %v1032 = vadd.f32 0.0, %v1031
    %v1033 = vpop.f32.mrf.mxu0
    %v1034 = vpop.f32.mrf.mxu0
    %v1035 = vpop.f32.mrf.mxu0
    %1036 = vdwg.mxu0
    %v1037 = vadd.f32 %v996, %v1032
    %s1038 = sadd.s32 16, 128
    %s1039 = scalar_lea.vmem [#allocation2], %s1038
    %v1040 = vld [vmem:[%s1039] sm:$0xff]
    %1041 = vmatprep.subr.bf16.mxu0 0
    %1042 = vmatpush1.bf16.msra.mxu0 0
    %1043 = vmatprep.subr.bf16.mxu0 0
    %1044 = vmatpush1.bf16.msra.mxu0 0
    %1045 = vmatprep.subr.bf16.mxu0 0
    %1046 = vmatpush1.bf16.msra.mxu0 0
    %1047 = vmatprep.subr.bf16.mxu0 0
    %1048 = vmatpush1.bf16.msra.mxu0 0
    %1049 = vmatprep.subr.bf16.mxu0 0
    %1050 = vmatpush1.bf16.msra.mxu0 0
    %1051 = vmatprep.subr.bf16.mxu0 0
    %1052 = vmatpush1.bf16.msra.mxu0 0
    %1053 = vmatprep.subr.bf16.mxu0 0
    %1054 = vmatpush1.bf16.msra.mxu0 %v598
    %1055 = vmatprep.subr.bf16.mxu0 0
    %1056 = vmatpush1.bf16.msra.mxu0 %v597
    %1057 = vmatprep.subr.bf16.mxu0 0
    %1058 = vmatpush2.bf16.msra.mxu0 0
    %1059 = vmatprep.subr.bf16.mxu0 0
    %1060 = vmatpush2.bf16.msra.mxu0 0
    %1061 = vmatprep.subr.bf16.mxu0 0
    %1062 = vmatpush2.bf16.msra.mxu0 0
    %1063 = vmatprep.subr.bf16.mxu0 0
    %1064 = vmatpush2.bf16.msra.mxu0 0
    %1065 = vmatprep.subr.bf16.mxu0 0
    %1066 = vmatpush2.bf16.msra.mxu0 0
    %1067 = vmatprep.subr.bf16.mxu0 0
    %1068 = vmatpush2.bf16.msra.mxu0 0
    %1069 = vmatprep.subr.bf16.mxu0 0
    %1070 = vmatpush2.bf16.msra.mxu0 0
    %1071 = vmatprep.subr.bf16.mxu0 0
    %1072 = vmatpush2.bf16.msra.mxu0 0
    %1073 = vmatprep.mubr.bf16.mxu0 0
    %1074 = vmatmul.mubr.bf16.gmra.mxu0 %v951
    %v1075 = vpop.f32.mrf.mxu0
    %v1076 = vadd.f32 0.0, %v1075
    %v1077 = vpop.f32.mrf.mxu0
    %v1078 = vpop.f32.mrf.mxu0
    %v1079 = vpop.f32.mrf.mxu0
    %1080 = vdwg.mxu0
    %v1081 = vadd.f32 %v1040, %v1076
    %s1082 = sadd.s32 16, 192
    %s1083 = scalar_lea.vmem [#allocation2], %s1082
    %v1084 = vld [vmem:[%s1083] sm:$0xff]
    %1085 = vmatprep.subr.bf16.mxu0 0
    %1086 = vmatpush1.bf16.msra.mxu0 0
    %1087 = vmatprep.subr.bf16.mxu0 0
    %1088 = vmatpush1.bf16.msra.mxu0 0
    %1089 = vmatprep.subr.bf16.mxu0 0
    %1090 = vmatpush1.bf16.msra.mxu0 0
    %1091 = vmatprep.subr.bf16.mxu0 0
    %1092 = vmatpush1.bf16.msra.mxu0 0
    %1093 = vmatprep.subr.bf16.mxu0 0
    %1094 = vmatpush1.bf16.msra.mxu0 0
    %1095 = vmatprep.subr.bf16.mxu0 0
    %1096 = vmatpush1.bf16.msra.mxu0 0
    %1097 = vmatprep.subr.bf16.mxu0 0
    %1098 = vmatpush1.bf16.msra.mxu0 %v659
    %1099 = vmatprep.subr.bf16.mxu0 0
    %1100 = vmatpush1.bf16.msra.mxu0 %v658
    %1101 = vmatprep.subr.bf16.mxu0 0
    %1102 = vmatpush2.bf16.msra.mxu0 0
    %1103 = vmatprep.subr.bf16.mxu0 0
    %1104 = vmatpush2.bf16.msra.mxu0 0
    %1105 = vmatprep.subr.bf16.mxu0 0
    %1106 = vmatpush2.bf16.msra.mxu0 0
    %1107 = vmatprep.subr.bf16.mxu0 0
    %1108 = vmatpush2.bf16.msra.mxu0 0
    %1109 = vmatprep.subr.bf16.mxu0 0
    %1110 = vmatpush2.bf16.msra.mxu0 0
    %1111 = vmatprep.subr.bf16.mxu0 0
    %1112 = vmatpush2.bf16.msra.mxu0 0
    %1113 = vmatprep.subr.bf16.mxu0 0
    %1114 = vmatpush2.bf16.msra.mxu0 0
    %1115 = vmatprep.subr.bf16.mxu0 0
    %1116 = vmatpush2.bf16.msra.mxu0 0
    %1117 = vmatprep.mubr.bf16.mxu0 0
    %1118 = vmatmul.mubr.bf16.gmra.mxu0 %v951
    %v1119 = vpop.f32.mrf.mxu0
    %v1120 = vadd.f32 0.0, %v1119
    %v1121 = vpop.f32.mrf.mxu0
    %v1122 = vpop.f32.mrf.mxu0
    %v1123 = vpop.f32.mrf.mxu0
    %1124 = vdwg.mxu0
    %v1125 = vadd.f32 %v1084, %v1120
    %v1126 = vxor.u32 %v993, 2147483648
    %v1127 = vmul.f32 %v1126, 1.442695
    %v1128 = vpow.pop %v1127
    %v1129 = vadd.f32 %v1128, 1.0
    %v1130 = vrcp.pop %v1129
    %v1131 = vmul.f32 1.0, %v1130
    %v1132 = vxor.u32 %v1037, 2147483648
    %v1133 = vmul.f32 %v1132, 1.442695
    %v1134 = vpow.pop %v1133
    %v1135 = vadd.f32 %v1134, 1.0
    %v1136 = vrcp.pop %v1135
    %v1137 = vmul.f32 1.0, %v1136
    %v1138 = vtanh.pop %v1081
    %v1139 = vxor.u32 %v1125, 2147483648
    %v1140 = vmul.f32 %v1139, 1.442695
    %v1141 = vpow.pop %v1140
    %v1142 = vadd.f32 %v1141, 1.0
    %v1143 = vrcp.pop %v1142
    %v1144 = vmul.f32 1.0, %v1143
    %v1145 = vmul.f32 %v1137, %v935
    %v1146 = vmul.f32 %v1131, %v1138
    %v1147 = vadd.f32 %v1145, %v1146
    %v1148 = vtanh.pop %v1147
    %v1149 = vmul.f32 %v1144, %v1148
    %s1150 = sadd.s32 %s454, 2
    %v1151 = vstv %s1150
    %vm1152 = vcmp.eq.s32.totalorder %v453, %v1151
    %v1153 = vsel %vm1152, 1, 0
    %1154 = vset.pattern.permute.xlu0 0
    %1155 = vperm.xlu0 %1154, %v1153
    %v1156 = vpop.permute.xlu0 %1155
    %vm1157 = vcmp.eq.s32.totalorder %v1156, 1
    %v1158 = vsel %vm1157, %v1149, %v946
    %v1159 = vpack.c.bf16 %v1149, %v1149
    %s1160 = scalar_lea.vmem [#allocation2], 24
    %v1161 = vld [vmem:[%s1160] sm:$0xff]
    %v1163 = vsel %vm170, %v1159, 0
    %1165 = vmatprep.subr.bf16.mxu0 0
    %1166 = vmatpush1.bf16.msra.mxu0 0
    %1167 = vmatprep.subr.bf16.mxu0 0
    %1168 = vmatpush1.bf16.msra.mxu0 0
    %1169 = vmatprep.subr.bf16.mxu0 0
    %1170 = vmatpush1.bf16.msra.mxu0 0
    %1171 = vmatprep.subr.bf16.mxu0 0
    %1172 = vmatpush1.bf16.msra.mxu0 0
    %1173 = vmatprep.subr.bf16.mxu0 0
    %1174 = vmatpush1.bf16.msra.mxu0 0
    %1175 = vmatprep.subr.bf16.mxu0 0
    %1176 = vmatpush1.bf16.msra.mxu0 0
    %1177 = vmatprep.subr.bf16.mxu0 0
    %1178 = vmatpush1.bf16.msra.mxu0 %v473
    %1179 = vmatprep.subr.bf16.mxu0 0
    %1180 = vmatpush1.bf16.msra.mxu0 %v472
    %1181 = vmatprep.subr.bf16.mxu0 0
    %1182 = vmatpush2.bf16.msra.mxu0 0
    %1183 = vmatprep.subr.bf16.mxu0 0
    %1184 = vmatpush2.bf16.msra.mxu0 0
    %1185 = vmatprep.subr.bf16.mxu0 0
    %1186 = vmatpush2.bf16.msra.mxu0 0
    %1187 = vmatprep.subr.bf16.mxu0 0
    %1188 = vmatpush2.bf16.msra.mxu0 0
    %1189 = vmatprep.subr.bf16.mxu0 0
    %1190 = vmatpush2.bf16.msra.mxu0 0
    %1191 = vmatprep.subr.bf16.mxu0 0
    %1192 = vmatpush2.bf16.msra.mxu0 0
    %1193 = vmatprep.subr.bf16.mxu0 0
    %1194 = vmatpush2.bf16.msra.mxu0 0
    %1195 = vmatprep.subr.bf16.mxu0 0
    %1196 = vmatpush2.bf16.msra.mxu0 0
    %1197 = vmatprep.mubr.bf16.mxu0 0
    %1198 = vmatmul.mubr.bf16.gmra.mxu0 %v1163
    %v1199 = vpop.f32.mrf.mxu0
    %v1200 = vadd.f32 0.0, %v1199
    %v1201 = vpop.f32.mrf.mxu0
    %v1202 = vpop.f32.mrf.mxu0
    %v1203 = vpop.f32.mrf.mxu0
    %1204 = vdwg.mxu0
    %v1205 = vadd.f32 %v1161, %v1200
    %s1206 = sadd.s32 24, 64
    %s1207 = scalar_lea.vmem [#allocation2], %s1206
    %v1208 = vld [vmem:[%s1207] sm:$0xff]
    %1209 = vmatprep.subr.bf16.mxu0 0
    %1210 = vmatpush1.bf16.msra.mxu0 0
    %1211 = vmatprep.subr.bf16.mxu0 0
    %1212 = vmatpush1.bf16.msra.mxu0 0
    %1213 = vmatprep.subr.bf16.mxu0 0
    %1214 = vmatpush1.bf16.msra.mxu0 0
    %1215 = vmatprep.subr.bf16.mxu0 0
    %1216 = vmatpush1.bf16.msra.mxu0 0
    %1217 = vmatprep.subr.bf16.mxu0 0
    %1218 = vmatpush1.bf16.msra.mxu0 0
    %1219 = vmatprep.subr.bf16.mxu0 0
    %1220 = vmatpush1.bf16.msra.mxu0 0
    %1221 = vmatprep.subr.bf16.mxu0 0
    %1222 = vmatpush1.bf16.msra.mxu0 %v537
    %1223 = vmatprep.subr.bf16.mxu0 0
    %1224 = vmatpush1.bf16.msra.mxu0 %v536
    %1225 = vmatprep.subr.bf16.mxu0 0
    %1226 = vmatpush2.bf16.msra.mxu0 0
    %1227 = vmatprep.subr.bf16.mxu0 0
    %1228 = vmatpush2.bf16.msra.mxu0 0
    %1229 = vmatprep.subr.bf16.mxu0 0
    %1230 = vmatpush2.bf16.msra.mxu0 0
    %1231 = vmatprep.subr.bf16.mxu0 0
    %1232 = vmatpush2.bf16.msra.mxu0 0
    %1233 = vmatprep.subr.bf16.mxu0 0
    %1234 = vmatpush2.bf16.msra.mxu0 0
    %1235 = vmatprep.subr.bf16.mxu0 0
    %1236 = vmatpush2.bf16.msra.mxu0 0
    %1237 = vmatprep.subr.bf16.mxu0 0
    %1238 = vmatpush2.bf16.msra.mxu0 0
    %1239 = vmatprep.subr.bf16.mxu0 0
    %1240 = vmatpush2.bf16.msra.mxu0 0
    %1241 = vmatprep.mubr.bf16.mxu0 0
    %1242 = vmatmul.mubr.bf16.gmra.mxu0 %v1163
    %v1243 = vpop.f32.mrf.mxu0
    %v1244 = vadd.f32 0.0, %v1243
    %v1245 = vpop.f32.mrf.mxu0
    %v1246 = vpop.f32.mrf.mxu0
    %v1247 = vpop.f32.mrf.mxu0
    %1248 = vdwg.mxu0
    %v1249 = vadd.f32 %v1208, %v1244
    %s1250 = sadd.s32 24, 128
    %s1251 = scalar_lea.vmem [#allocation2], %s1250
    %v1252 = vld [vmem:[%s1251] sm:$0xff]
    %1253 = vmatprep.subr.bf16.mxu0 0
    %1254 = vmatpush1.bf16.msra.mxu0 0
    %1255 = vmatprep.subr.bf16.mxu0 0
    %1256 = vmatpush1.bf16.msra.mxu0 0
    %1257 = vmatprep.subr.bf16.mxu0 0
    %1258 = vmatpush1.bf16.msra.mxu0 0
    %1259 = vmatprep.subr.bf16.mxu0 0
    %1260 = vmatpush1.bf16.msra.mxu0 0
    %1261 = vmatprep.subr.bf16.mxu0 0
    %1262 = vmatpush1.bf16.msra.mxu0 0
    %1263 = vmatprep.subr.bf16.mxu0 0
    %1264 = vmatpush1.bf16.msra.mxu0 0
    %1265 = vmatprep.subr.bf16.mxu0 0
    %1266 = vmatpush1.bf16.msra.mxu0 %v598
    %1267 = vmatprep.subr.bf16.mxu0 0
    %1268 = vmatpush1.bf16.msra.mxu0 %v597
    %1269 = vmatprep.subr.bf16.mxu0 0
    %1270 = vmatpush2.bf16.msra.mxu0 0
    %1271 = vmatprep.subr.bf16.mxu0 0
    %1272 = vmatpush2.bf16.msra.mxu0 0
    %1273 = vmatprep.subr.bf16.mxu0 0
    %1274 = vmatpush2.bf16.msra.mxu0 0
    %1275 = vmatprep.subr.bf16.mxu0 0
    %1276 = vmatpush2.bf16.msra.mxu0 0
    %1277 = vmatprep.subr.bf16.mxu0 0
    %1278 = vmatpush2.bf16.msra.mxu0 0
    %1279 = vmatprep.subr.bf16.mxu0 0
    %1280 = vmatpush2.bf16.msra.mxu0 0
    %1281 = vmatprep.subr.bf16.mxu0 0
    %1282 = vmatpush2.bf16.msra.mxu0 0
    %1283 = vmatprep.subr.bf16.mxu0 0
    %1284 = vmatpush2.bf16.msra.mxu0 0
    %1285 = vmatprep.mubr.bf16.mxu0 0
    %1286 = vmatmul.mubr.bf16.gmra.mxu0 %v1163
    %v1287 = vpop.f32.mrf.mxu0
    %v1288 = vadd.f32 0.0, %v1287
    %v1289 = vpop.f32.mrf.mxu0
    %v1290 = vpop.f32.mrf.mxu0
    %v1291 = vpop.f32.mrf.mxu0
    %1292 = vdwg.mxu0
    %v1293 = vadd.f32 %v1252, %v1288
    %s1294 = sadd.s32 24, 192
    %s1295 = scalar_lea.vmem [#allocation2], %s1294
    %v1296 = vld [vmem:[%s1295] sm:$0xff]
    %1297 = vmatprep.subr.bf16.mxu0 0
    %1298 = vmatpush1.bf16.msra.mxu0 0
    %1299 = vmatprep.subr.bf16.mxu0 0
    %1300 = vmatpush1.bf16.msra.mxu0 0
    %1301 = vmatprep.subr.bf16.mxu0 0
    %1302 = vmatpush1.bf16.msra.mxu0 0
    %1303 = vmatprep.subr.bf16.mxu0 0
    %1304 = vmatpush1.bf16.msra.mxu0 0
    %1305 = vmatprep.subr.bf16.mxu0 0
    %1306 = vmatpush1.bf16.msra.mxu0 0
    %1307 = vmatprep.subr.bf16.mxu0 0
    %1308 = vmatpush1.bf16.msra.mxu0 0
    %1309 = vmatprep.subr.bf16.mxu0 0
    %1310 = vmatpush1.bf16.msra.mxu0 %v659
    %1311 = vmatprep.subr.bf16.mxu0 0
    %1312 = vmatpush1.bf16.msra.mxu0 %v658
    %1313 = vmatprep.subr.bf16.mxu0 0
    %1314 = vmatpush2.bf16.msra.mxu0 0
    %1315 = vmatprep.subr.bf16.mxu0 0
    %1316 = vmatpush2.bf16.msra.mxu0 0
    %1317 = vmatprep.subr.bf16.mxu0 0
    %1318 = vmatpush2.bf16.msra.mxu0 0
    %1319 = vmatprep.subr.bf16.mxu0 0
    %1320 = vmatpush2.bf16.msra.mxu0 0
    %1321 = vmatprep.subr.bf16.mxu0 0
    %1322 = vmatpush2.bf16.msra.mxu0 0
    %1323 = vmatprep.subr.bf16.mxu0 0
    %1324 = vmatpush2.bf16.msra.mxu0 0
    %1325 = vmatprep.subr.bf16.mxu0 0
    %1326 = vmatpush2.bf16.msra.mxu0 0
    %1327 = vmatprep.subr.bf16.mxu0 0
    %1328 = vmatpush2.bf16.msra.mxu0 0
    %1329 = vmatprep.mubr.bf16.mxu0 0
    %1330 = vmatmul.mubr.bf16.gmra.mxu0 %v1163
    %v1331 = vpop.f32.mrf.mxu0
    %v1332 = vadd.f32 0.0, %v1331
    %v1333 = vpop.f32.mrf.mxu0
    %v1334 = vpop.f32.mrf.mxu0
    %v1335 = vpop.f32.mrf.mxu0
    %1336 = vdwg.mxu0
    %v1337 = vadd.f32 %v1296, %v1332
    %v1338 = vxor.u32 %v1205, 2147483648
    %v1339 = vmul.f32 %v1338, 1.442695
    %v1340 = vpow.pop %v1339
    %v1341 = vadd.f32 %v1340, 1.0
    %v1342 = vrcp.pop %v1341
    %v1343 = vmul.f32 1.0, %v1342
    %v1344 = vxor.u32 %v1249, 2147483648
    %v1345 = vmul.f32 %v1344, 1.442695
    %v1346 = vpow.pop %v1345
    %v1347 = vadd.f32 %v1346, 1.0
    %v1348 = vrcp.pop %v1347
    %v1349 = vmul.f32 1.0, %v1348
    %v1350 = vtanh.pop %v1293
    %v1351 = vxor.u32 %v1337, 2147483648
    %v1352 = vmul.f32 %v1351, 1.442695
    %v1353 = vpow.pop %v1352
    %v1354 = vadd.f32 %v1353, 1.0
    %v1355 = vrcp.pop %v1354
    %v1356 = vmul.f32 1.0, %v1355
    %v1357 = vmul.f32 %v1349, %v1147
    %v1358 = vmul.f32 %v1343, %v1350
    %v1359 = vadd.f32 %v1357, %v1358
    %v1360 = vtanh.pop %v1359
    %v1361 = vmul.f32 %v1356, %v1360
    %s1362 = sadd.s32 %s454, 3
    %v1363 = vstv %s1362
    %vm1364 = vcmp.eq.s32.totalorder %v453, %v1363
    %v1365 = vsel %vm1364, 1, 0
    %1366 = vset.pattern.permute.xlu0 0
    %1367 = vperm.xlu0 %1366, %v1365
    %v1368 = vpop.permute.xlu0 %1367
    %vm1369 = vcmp.eq.s32.totalorder %v1368, 1
    %v1370 = vsel %vm1369, %v1361, %v1158
    %v1371 = vpack.c.bf16 %v1361, %v1361
    %s1372 = scalar_lea.vmem [#allocation2], 32
    %v1373 = vld [vmem:[%s1372] sm:$0xff]
    %v1375 = vsel %vm170, %v1371, 0
    %1377 = vmatprep.subr.bf16.mxu0 0
    %1378 = vmatpush1.bf16.msra.mxu0 0
    %1379 = vmatprep.subr.bf16.mxu0 0
    %1380 = vmatpush1.bf16.msra.mxu0 0
    %1381 = vmatprep.subr.bf16.mxu0 0
    %1382 = vmatpush1.bf16.msra.mxu0 0
    %1383 = vmatprep.subr.bf16.mxu0 0
    %1384 = vmatpush1.bf16.msra.mxu0 0
    %1385 = vmatprep.subr.bf16.mxu0 0
    %1386 = vmatpush1.bf16.msra.mxu0 0
    %1387 = vmatprep.subr.bf16.mxu0 0
    %1388 = vmatpush1.bf16.msra.mxu0 0
    %1389 = vmatprep.subr.bf16.mxu0 0
    %1390 = vmatpush1.bf16.msra.mxu0 %v473
    %1391 = vmatprep.subr.bf16.mxu0 0
    %1392 = vmatpush1.bf16.msra.mxu0 %v472
    %1393 = vmatprep.subr.bf16.mxu0 0
    %1394 = vmatpush2.bf16.msra.mxu0 0
    %1395 = vmatprep.subr.bf16.mxu0 0
    %1396 = vmatpush2.bf16.msra.mxu0 0
    %1397 = vmatprep.subr.bf16.mxu0 0
    %1398 = vmatpush2.bf16.msra.mxu0 0
    %1399 = vmatprep.subr.bf16.mxu0 0
    %1400 = vmatpush2.bf16.msra.mxu0 0
    %1401 = vmatprep.subr.bf16.mxu0 0
    %1402 = vmatpush2.bf16.msra.mxu0 0
    %1403 = vmatprep.subr.bf16.mxu0 0
    %1404 = vmatpush2.bf16.msra.mxu0 0
    %1405 = vmatprep.subr.bf16.mxu0 0
    %1406 = vmatpush2.bf16.msra.mxu0 0
    %1407 = vmatprep.subr.bf16.mxu0 0
    %1408 = vmatpush2.bf16.msra.mxu0 0
    %1409 = vmatprep.mubr.bf16.mxu0 0
    %1410 = vmatmul.mubr.bf16.gmra.mxu0 %v1375
    %v1411 = vpop.f32.mrf.mxu0
    %v1412 = vadd.f32 0.0, %v1411
    %v1413 = vpop.f32.mrf.mxu0
    %v1414 = vpop.f32.mrf.mxu0
    %v1415 = vpop.f32.mrf.mxu0
    %1416 = vdwg.mxu0
    %v1417 = vadd.f32 %v1373, %v1412
    %s1418 = sadd.s32 32, 64
    %s1419 = scalar_lea.vmem [#allocation2], %s1418
    %v1420 = vld [vmem:[%s1419] sm:$0xff]
    %1421 = vmatprep.subr.bf16.mxu0 0
    %1422 = vmatpush1.bf16.msra.mxu0 0
    %1423 = vmatprep.subr.bf16.mxu0 0
    %1424 = vmatpush1.bf16.msra.mxu0 0
    %1425 = vmatprep.subr.bf16.mxu0 0
    %1426 = vmatpush1.bf16.msra.mxu0 0
    %1427 = vmatprep.subr.bf16.mxu0 0
    %1428 = vmatpush1.bf16.msra.mxu0 0
    %1429 = vmatprep.subr.bf16.mxu0 0
    %1430 = vmatpush1.bf16.msra.mxu0 0
    %1431 = vmatprep.subr.bf16.mxu0 0
    %1432 = vmatpush1.bf16.msra.mxu0 0
    %1433 = vmatprep.subr.bf16.mxu0 0
    %1434 = vmatpush1.bf16.msra.mxu0 %v537
    %1435 = vmatprep.subr.bf16.mxu0 0
    %1436 = vmatpush1.bf16.msra.mxu0 %v536
    %1437 = vmatprep.subr.bf16.mxu0 0
    %1438 = vmatpush2.bf16.msra.mxu0 0
    %1439 = vmatprep.subr.bf16.mxu0 0
    %1440 = vmatpush2.bf16.msra.mxu0 0
    %1441 = vmatprep.subr.bf16.mxu0 0
    %1442 = vmatpush2.bf16.msra.mxu0 0
    %1443 = vmatprep.subr.bf16.mxu0 0
    %1444 = vmatpush2.bf16.msra.mxu0 0
    %1445 = vmatprep.subr.bf16.mxu0 0
    %1446 = vmatpush2.bf16.msra.mxu0 0
    %1447 = vmatprep.subr.bf16.mxu0 0
    %1448 = vmatpush2.bf16.msra.mxu0 0
    %1449 = vmatprep.subr.bf16.mxu0 0
    %1450 = vmatpush2.bf16.msra.mxu0 0
    %1451 = vmatprep.subr.bf16.mxu0 0
    %1452 = vmatpush2.bf16.msra.mxu0 0
    %1453 = vmatprep.mubr.bf16.mxu0 0
    %1454 = vmatmul.mubr.bf16.gmra.mxu0 %v1375
    %v1455 = vpop.f32.mrf.mxu0
    %v1456 = vadd.f32 0.0, %v1455
    %v1457 = vpop.f32.mrf.mxu0
    %v1458 = vpop.f32.mrf.mxu0
    %v1459 = vpop.f32.mrf.mxu0
    %1460 = vdwg.mxu0
    %v1461 = vadd.f32 %v1420, %v1456
    %s1462 = sadd.s32 32, 128
    %s1463 = scalar_lea.vmem [#allocation2], %s1462
    %v1464 = vld [vmem:[%s1463] sm:$0xff]
    %1465 = vmatprep.subr.bf16.mxu0 0
    %1466 = vmatpush1.bf16.msra.mxu0 0
    %1467 = vmatprep.subr.bf16.mxu0 0
    %1468 = vmatpush1.bf16.msra.mxu0 0
    %1469 = vmatprep.subr.bf16.mxu0 0
    %1470 = vmatpush1.bf16.msra.mxu0 0
    %1471 = vmatprep.subr.bf16.mxu0 0
    %1472 = vmatpush1.bf16.msra.mxu0 0
    %1473 = vmatprep.subr.bf16.mxu0 0
    %1474 = vmatpush1.bf16.msra.mxu0 0
    %1475 = vmatprep.subr.bf16.mxu0 0
    %1476 = vmatpush1.bf16.msra.mxu0 0
    %1477 = vmatprep.subr.bf16.mxu0 0
    %1478 = vmatpush1.bf16.msra.mxu0 %v598
    %1479 = vmatprep.subr.bf16.mxu0 0
    %1480 = vmatpush1.bf16.msra.mxu0 %v597
    %1481 = vmatprep.subr.bf16.mxu0 0
    %1482 = vmatpush2.bf16.msra.mxu0 0
    %1483 = vmatprep.subr.bf16.mxu0 0
    %1484 = vmatpush2.bf16.msra.mxu0 0
    %1485 = vmatprep.subr.bf16.mxu0 0
    %1486 = vmatpush2.bf16.msra.mxu0 0
    %1487 = vmatprep.subr.bf16.mxu0 0
    %1488 = vmatpush2.bf16.msra.mxu0 0
    %1489 = vmatprep.subr.bf16.mxu0 0
    %1490 = vmatpush2.bf16.msra.mxu0 0
    %1491 = vmatprep.subr.bf16.mxu0 0
    %1492 = vmatpush2.bf16.msra.mxu0 0
    %1493 = vmatprep.subr.bf16.mxu0 0
    %1494 = vmatpush2.bf16.msra.mxu0 0
    %1495 = vmatprep.subr.bf16.mxu0 0
    %1496 = vmatpush2.bf16.msra.mxu0 0
    %1497 = vmatprep.mubr.bf16.mxu0 0
    %1498 = vmatmul.mubr.bf16.gmra.mxu0 %v1375
    %v1499 = vpop.f32.mrf.mxu0
    %v1500 = vadd.f32 0.0, %v1499
    %v1501 = vpop.f32.mrf.mxu0
    %v1502 = vpop.f32.mrf.mxu0
    %v1503 = vpop.f32.mrf.mxu0
    %1504 = vdwg.mxu0
    %v1505 = vadd.f32 %v1464, %v1500
    %s1506 = sadd.s32 32, 192
    %s1507 = scalar_lea.vmem [#allocation2], %s1506
    %v1508 = vld [vmem:[%s1507] sm:$0xff]
    %1509 = vmatprep.subr.bf16.mxu0 0
    %1510 = vmatpush1.bf16.msra.mxu0 0
    %1511 = vmatprep.subr.bf16.mxu0 0
    %1512 = vmatpush1.bf16.msra.mxu0 0
    %1513 = vmatprep.subr.bf16.mxu0 0
    %1514 = vmatpush1.bf16.msra.mxu0 0
    %1515 = vmatprep.subr.bf16.mxu0 0
    %1516 = vmatpush1.bf16.msra.mxu0 0
    %1517 = vmatprep.subr.bf16.mxu0 0
    %1518 = vmatpush1.bf16.msra.mxu0 0
    %1519 = vmatprep.subr.bf16.mxu0 0
    %1520 = vmatpush1.bf16.msra.mxu0 0
    %1521 = vmatprep.subr.bf16.mxu0 0
    %1522 = vmatpush1.bf16.msra.mxu0 %v659
    %1523 = vmatprep.subr.bf16.mxu0 0
    %1524 = vmatpush1.bf16.msra.mxu0 %v658
    %1525 = vmatprep.subr.bf16.mxu0 0
    %1526 = vmatpush2.bf16.msra.mxu0 0
    %1527 = vmatprep.subr.bf16.mxu0 0
    %1528 = vmatpush2.bf16.msra.mxu0 0
    %1529 = vmatprep.subr.bf16.mxu0 0
    %1530 = vmatpush2.bf16.msra.mxu0 0
    %1531 = vmatprep.subr.bf16.mxu0 0
    %1532 = vmatpush2.bf16.msra.mxu0 0
    %1533 = vmatprep.subr.bf16.mxu0 0
    %1534 = vmatpush2.bf16.msra.mxu0 0
    %1535 = vmatprep.subr.bf16.mxu0 0
    %1536 = vmatpush2.bf16.msra.mxu0 0
    %1537 = vmatprep.subr.bf16.mxu0 0
    %1538 = vmatpush2.bf16.msra.mxu0 0
    %1539 = vmatprep.subr.bf16.mxu0 0
    %1540 = vmatpush2.bf16.msra.mxu0 0
    %1541 = vmatprep.mubr.bf16.mxu0 0
    %1542 = vmatmul.mubr.bf16.gmra.mxu0 %v1375
    %v1543 = vpop.f32.mrf.mxu0
    %v1544 = vadd.f32 0.0, %v1543
    %v1545 = vpop.f32.mrf.mxu0
    %v1546 = vpop.f32.mrf.mxu0
    %v1547 = vpop.f32.mrf.mxu0
    %1548 = vdwg.mxu0
    %v1549 = vadd.f32 %v1508, %v1544
    %v1550 = vxor.u32 %v1417, 2147483648
    %v1551 = vmul.f32 %v1550, 1.442695
    %v1552 = vpow.pop %v1551
    %v1553 = vadd.f32 %v1552, 1.0
    %v1554 = vrcp.pop %v1553
    %v1555 = vmul.f32 1.0, %v1554
    %v1556 = vxor.u32 %v1461, 2147483648
    %v1557 = vmul.f32 %v1556, 1.442695
    %v1558 = vpow.pop %v1557
    %v1559 = vadd.f32 %v1558, 1.0
    %v1560 = vrcp.pop %v1559
    %v1561 = vmul.f32 1.0, %v1560
    %v1562 = vtanh.pop %v1505
    %v1563 = vxor.u32 %v1549, 2147483648
    %v1564 = vmul.f32 %v1563, 1.442695
    %v1565 = vpow.pop %v1564
    %v1566 = vadd.f32 %v1565, 1.0
    %v1567 = vrcp.pop %v1566
    %v1568 = vmul.f32 1.0, %v1567
    %v1569 = vmul.f32 %v1561, %v1359
    %v1570 = vmul.f32 %v1555, %v1562
    %v1571 = vadd.f32 %v1569, %v1570
    %v1572 = vtanh.pop %v1571
    %v1573 = vmul.f32 %v1568, %v1572
    %s1574 = sadd.s32 %s454, 4
    %v1575 = vstv %s1574
    %vm1576 = vcmp.eq.s32.totalorder %v453, %v1575
    %v1577 = vsel %vm1576, 1, 0
    %1578 = vset.pattern.permute.xlu0 0
    %1579 = vperm.xlu0 %1578, %v1577
    %v1580 = vpop.permute.xlu0 %1579
    %vm1581 = vcmp.eq.s32.totalorder %v1580, 1
    %v1582 = vsel %vm1581, %v1573, %v1370
    %v1583 = vpack.c.bf16 %v1573, %v1573
    %s1584 = scalar_lea.vmem [#allocation2], 40
    %v1585 = vld [vmem:[%s1584] sm:$0xff]
    %v1587 = vsel %vm170, %v1583, 0
    %1589 = vmatprep.subr.bf16.mxu0 0
    %1590 = vmatpush1.bf16.msra.mxu0 0
    %1591 = vmatprep.subr.bf16.mxu0 0
    %1592 = vmatpush1.bf16.msra.mxu0 0
    %1593 = vmatprep.subr.bf16.mxu0 0
    %1594 = vmatpush1.bf16.msra.mxu0 0
    %1595 = vmatprep.subr.bf16.mxu0 0
    %1596 = vmatpush1.bf16.msra.mxu0 0
    %1597 = vmatprep.subr.bf16.mxu0 0
    %1598 = vmatpush1.bf16.msra.mxu0 0
    %1599 = vmatprep.subr.bf16.mxu0 0
    %1600 = vmatpush1.bf16.msra.mxu0 0
    %1601 = vmatprep.subr.bf16.mxu0 0
    %1602 = vmatpush1.bf16.msra.mxu0 %v473
    %1603 = vmatprep.subr.bf16.mxu0 0
    %1604 = vmatpush1.bf16.msra.mxu0 %v472
    %1605 = vmatprep.subr.bf16.mxu0 0
    %1606 = vmatpush2.bf16.msra.mxu0 0
    %1607 = vmatprep.subr.bf16.mxu0 0
    %1608 = vmatpush2.bf16.msra.mxu0 0
    %1609 = vmatprep.subr.bf16.mxu0 0
    %1610 = vmatpush2.bf16.msra.mxu0 0
    %1611 = vmatprep.subr.bf16.mxu0 0
    %1612 = vmatpush2.bf16.msra.mxu0 0
    %1613 = vmatprep.subr.bf16.mxu0 0
    %1614 = vmatpush2.bf16.msra.mxu0 0
    %1615 = vmatprep.subr.bf16.mxu0 0
    %1616 = vmatpush2.bf16.msra.mxu0 0
    %1617 = vmatprep.subr.bf16.mxu0 0
    %1618 = vmatpush2.bf16.msra.mxu0 0
    %1619 = vmatprep.subr.bf16.mxu0 0
    %1620 = vmatpush2.bf16.msra.mxu0 0
    %1621 = vmatprep.mubr.bf16.mxu0 0
    %1622 = vmatmul.mubr.bf16.gmra.mxu0 %v1587
    %v1623 = vpop.f32.mrf.mxu0
    %v1624 = vadd.f32 0.0, %v1623
    %v1625 = vpop.f32.mrf.mxu0
    %v1626 = vpop.f32.mrf.mxu0
    %v1627 = vpop.f32.mrf.mxu0
    %1628 = vdwg.mxu0
    %v1629 = vadd.f32 %v1585, %v1624
    %s1630 = sadd.s32 40, 64
    %s1631 = scalar_lea.vmem [#allocation2], %s1630
    %v1632 = vld [vmem:[%s1631] sm:$0xff]
    %1633 = vmatprep.subr.bf16.mxu0 0
    %1634 = vmatpush1.bf16.msra.mxu0 0
    %1635 = vmatprep.subr.bf16.mxu0 0
    %1636 = vmatpush1.bf16.msra.mxu0 0
    %1637 = vmatprep.subr.bf16.mxu0 0
    %1638 = vmatpush1.bf16.msra.mxu0 0
    %1639 = vmatprep.subr.bf16.mxu0 0
    %1640 = vmatpush1.bf16.msra.mxu0 0
    %1641 = vmatprep.subr.bf16.mxu0 0
    %1642 = vmatpush1.bf16.msra.mxu0 0
    %1643 = vmatprep.subr.bf16.mxu0 0
    %1644 = vmatpush1.bf16.msra.mxu0 0
    %1645 = vmatprep.subr.bf16.mxu0 0
    %1646 = vmatpush1.bf16.msra.mxu0 %v537
    %1647 = vmatprep.subr.bf16.mxu0 0
    %1648 = vmatpush1.bf16.msra.mxu0 %v536
    %1649 = vmatprep.subr.bf16.mxu0 0
    %1650 = vmatpush2.bf16.msra.mxu0 0
    %1651 = vmatprep.subr.bf16.mxu0 0
    %1652 = vmatpush2.bf16.msra.mxu0 0
    %1653 = vmatprep.subr.bf16.mxu0 0
    %1654 = vmatpush2.bf16.msra.mxu0 0
    %1655 = vmatprep.subr.bf16.mxu0 0
    %1656 = vmatpush2.bf16.msra.mxu0 0
    %1657 = vmatprep.subr.bf16.mxu0 0
    %1658 = vmatpush2.bf16.msra.mxu0 0
    %1659 = vmatprep.subr.bf16.mxu0 0
    %1660 = vmatpush2.bf16.msra.mxu0 0
    %1661 = vmatprep.subr.bf16.mxu0 0
    %1662 = vmatpush2.bf16.msra.mxu0 0
    %1663 = vmatprep.subr.bf16.mxu0 0
    %1664 = vmatpush2.bf16.msra.mxu0 0
    %1665 = vmatprep.mubr.bf16.mxu0 0
    %1666 = vmatmul.mubr.bf16.gmra.mxu0 %v1587
    %v1667 = vpop.f32.mrf.mxu0
    %v1668 = vadd.f32 0.0, %v1667
    %v1669 = vpop.f32.mrf.mxu0
    %v1670 = vpop.f32.mrf.mxu0
    %v1671 = vpop.f32.mrf.mxu0
    %1672 = vdwg.mxu0
    %v1673 = vadd.f32 %v1632, %v1668
    %s1674 = sadd.s32 40, 128
    %s1675 = scalar_lea.vmem [#allocation2], %s1674
    %v1676 = vld [vmem:[%s1675] sm:$0xff]
    %1677 = vmatprep.subr.bf16.mxu0 0
    %1678 = vmatpush1.bf16.msra.mxu0 0
    %1679 = vmatprep.subr.bf16.mxu0 0
    %1680 = vmatpush1.bf16.msra.mxu0 0
    %1681 = vmatprep.subr.bf16.mxu0 0
    %1682 = vmatpush1.bf16.msra.mxu0 0
    %1683 = vmatprep.subr.bf16.mxu0 0
    %1684 = vmatpush1.bf16.msra.mxu0 0
    %1685 = vmatprep.subr.bf16.mxu0 0
    %1686 = vmatpush1.bf16.msra.mxu0 0
    %1687 = vmatprep.subr.bf16.mxu0 0
    %1688 = vmatpush1.bf16.msra.mxu0 0
    %1689 = vmatprep.subr.bf16.mxu0 0
    %1690 = vmatpush1.bf16.msra.mxu0 %v598
    %1691 = vmatprep.subr.bf16.mxu0 0
    %1692 = vmatpush1.bf16.msra.mxu0 %v597
    %1693 = vmatprep.subr.bf16.mxu0 0
    %1694 = vmatpush2.bf16.msra.mxu0 0
    %1695 = vmatprep.subr.bf16.mxu0 0
    %1696 = vmatpush2.bf16.msra.mxu0 0
    %1697 = vmatprep.subr.bf16.mxu0 0
    %1698 = vmatpush2.bf16.msra.mxu0 0
    %1699 = vmatprep.subr.bf16.mxu0 0
    %1700 = vmatpush2.bf16.msra.mxu0 0
    %1701 = vmatprep.subr.bf16.mxu0 0
    %1702 = vmatpush2.bf16.msra.mxu0 0
    %1703 = vmatprep.subr.bf16.mxu0 0
    %1704 = vmatpush2.bf16.msra.mxu0 0
    %1705 = vmatprep.subr.bf16.mxu0 0
    %1706 = vmatpush2.bf16.msra.mxu0 0
    %1707 = vmatprep.subr.bf16.mxu0 0
    %1708 = vmatpush2.bf16.msra.mxu0 0
    %1709 = vmatprep.mubr.bf16.mxu0 0
    %1710 = vmatmul.mubr.bf16.gmra.mxu0 %v1587
    %v1711 = vpop.f32.mrf.mxu0
    %v1712 = vadd.f32 0.0, %v1711
    %v1713 = vpop.f32.mrf.mxu0
    %v1714 = vpop.f32.mrf.mxu0
    %v1715 = vpop.f32.mrf.mxu0
    %1716 = vdwg.mxu0
    %v1717 = vadd.f32 %v1676, %v1712
    %s1718 = sadd.s32 40, 192
    %s1719 = scalar_lea.vmem [#allocation2], %s1718
    %v1720 = vld [vmem:[%s1719] sm:$0xff]
    %1721 = vmatprep.subr.bf16.mxu0 0
    %1722 = vmatpush1.bf16.msra.mxu0 0
    %1723 = vmatprep.subr.bf16.mxu0 0
    %1724 = vmatpush1.bf16.msra.mxu0 0
    %1725 = vmatprep.subr.bf16.mxu0 0
    %1726 = vmatpush1.bf16.msra.mxu0 0
    %1727 = vmatprep.subr.bf16.mxu0 0
    %1728 = vmatpush1.bf16.msra.mxu0 0
    %1729 = vmatprep.subr.bf16.mxu0 0
    %1730 = vmatpush1.bf16.msra.mxu0 0
    %1731 = vmatprep.subr.bf16.mxu0 0
    %1732 = vmatpush1.bf16.msra.mxu0 0
    %1733 = vmatprep.subr.bf16.mxu0 0
    %1734 = vmatpush1.bf16.msra.mxu0 %v659
    %1735 = vmatprep.subr.bf16.mxu0 0
    %1736 = vmatpush1.bf16.msra.mxu0 %v658
    %1737 = vmatprep.subr.bf16.mxu0 0
    %1738 = vmatpush2.bf16.msra.mxu0 0
    %1739 = vmatprep.subr.bf16.mxu0 0
    %1740 = vmatpush2.bf16.msra.mxu0 0
    %1741 = vmatprep.subr.bf16.mxu0 0
    %1742 = vmatpush2.bf16.msra.mxu0 0
    %1743 = vmatprep.subr.bf16.mxu0 0
    %1744 = vmatpush2.bf16.msra.mxu0 0
    %1745 = vmatprep.subr.bf16.mxu0 0
    %1746 = vmatpush2.bf16.msra.mxu0 0
    %1747 = vmatprep.subr.bf16.mxu0 0
    %1748 = vmatpush2.bf16.msra.mxu0 0
    %1749 = vmatprep.subr.bf16.mxu0 0
    %1750 = vmatpush2.bf16.msra.mxu0 0
    %1751 = vmatprep.subr.bf16.mxu0 0
    %1752 = vmatpush2.bf16.msra.mxu0 0
    %1753 = vmatprep.mubr.bf16.mxu0 0
    %1754 = vmatmul.mubr.bf16.gmra.mxu0 %v1587
    %v1755 = vpop.f32.mrf.mxu0
    %v1756 = vadd.f32 0.0, %v1755
    %v1757 = vpop.f32.mrf.mxu0
    %v1758 = vpop.f32.mrf.mxu0
    %v1759 = vpop.f32.mrf.mxu0
    %1760 = vdwg.mxu0
    %v1761 = vadd.f32 %v1720, %v1756
    %v1762 = vxor.u32 %v1629, 2147483648
    %v1763 = vmul.f32 %v1762, 1.442695
    %v1764 = vpow.pop %v1763
    %v1765 = vadd.f32 %v1764, 1.0
    %v1766 = vrcp.pop %v1765
    %v1767 = vmul.f32 1.0, %v1766
    %v1768 = vxor.u32 %v1673, 2147483648
    %v1769 = vmul.f32 %v1768, 1.442695
    %v1770 = vpow.pop %v1769
    %v1771 = vadd.f32 %v1770, 1.0
    %v1772 = vrcp.pop %v1771
    %v1773 = vmul.f32 1.0, %v1772
    %v1774 = vtanh.pop %v1717
    %v1775 = vxor.u32 %v1761, 2147483648
    %v1776 = vmul.f32 %v1775, 1.442695
    %v1777 = vpow.pop %v1776
    %v1778 = vadd.f32 %v1777, 1.0
    %v1779 = vrcp.pop %v1778
    %v1780 = vmul.f32 1.0, %v1779
    %v1781 = vmul.f32 %v1773, %v1571
    %v1782 = vmul.f32 %v1767, %v1774
    %v1783 = vadd.f32 %v1781, %v1782
    %v1784 = vtanh.pop %v1783
    %v1785 = vmul.f32 %v1780, %v1784
    %s1786 = sadd.s32 %s454, 5
    %v1787 = vstv %s1786
    %vm1788 = vcmp.eq.s32.totalorder %v453, %v1787
    %v1789 = vsel %vm1788, 1, 0
    %1790 = vset.pattern.permute.xlu0 0
    %1791 = vperm.xlu0 %1790, %v1789
    %v1792 = vpop.permute.xlu0 %1791
    %vm1793 = vcmp.eq.s32.totalorder %v1792, 1
    %v1794 = vsel %vm1793, %v1785, %v1582
    %v1795 = vpack.c.bf16 %v1785, %v1785
    %s1796 = scalar_lea.vmem [#allocation2], 48
    %v1797 = vld [vmem:[%s1796] sm:$0xff]
    %v1799 = vsel %vm170, %v1795, 0
    %1801 = vmatprep.subr.bf16.mxu0 0
    %1802 = vmatpush1.bf16.msra.mxu0 0
    %1803 = vmatprep.subr.bf16.mxu0 0
    %1804 = vmatpush1.bf16.msra.mxu0 0
    %1805 = vmatprep.subr.bf16.mxu0 0
    %1806 = vmatpush1.bf16.msra.mxu0 0
    %1807 = vmatprep.subr.bf16.mxu0 0
    %1808 = vmatpush1.bf16.msra.mxu0 0
    %1809 = vmatprep.subr.bf16.mxu0 0
    %1810 = vmatpush1.bf16.msra.mxu0 0
    %1811 = vmatprep.subr.bf16.mxu0 0
    %1812 = vmatpush1.bf16.msra.mxu0 0
    %1813 = vmatprep.subr.bf16.mxu0 0
    %1814 = vmatpush1.bf16.msra.mxu0 %v473
    %1815 = vmatprep.subr.bf16.mxu0 0
    %1816 = vmatpush1.bf16.msra.mxu0 %v472
    %1817 = vmatprep.subr.bf16.mxu0 0
    %1818 = vmatpush2.bf16.msra.mxu0 0
    %1819 = vmatprep.subr.bf16.mxu0 0
    %1820 = vmatpush2.bf16.msra.mxu0 0
    %1821 = vmatprep.subr.bf16.mxu0 0
    %1822 = vmatpush2.bf16.msra.mxu0 0
    %1823 = vmatprep.subr.bf16.mxu0 0
    %1824 = vmatpush2.bf16.msra.mxu0 0
    %1825 = vmatprep.subr.bf16.mxu0 0
    %1826 = vmatpush2.bf16.msra.mxu0 0
    %1827 = vmatprep.subr.bf16.mxu0 0
    %1828 = vmatpush2.bf16.msra.mxu0 0
    %1829 = vmatprep.subr.bf16.mxu0 0
    %1830 = vmatpush2.bf16.msra.mxu0 0
    %1831 = vmatprep.subr.bf16.mxu0 0
    %1832 = vmatpush2.bf16.msra.mxu0 0
    %1833 = vmatprep.mubr.bf16.mxu0 0
    %1834 = vmatmul.mubr.bf16.gmra.mxu0 %v1799
    %v1835 = vpop.f32.mrf.mxu0
    %v1836 = vadd.f32 0.0, %v1835
    %v1837 = vpop.f32.mrf.mxu0
    %v1838 = vpop.f32.mrf.mxu0
    %v1839 = vpop.f32.mrf.mxu0
    %1840 = vdwg.mxu0
    %v1841 = vadd.f32 %v1797, %v1836
    %s1842 = sadd.s32 48, 64
    %s1843 = scalar_lea.vmem [#allocation2], %s1842
    %v1844 = vld [vmem:[%s1843] sm:$0xff]
    %1845 = vmatprep.subr.bf16.mxu0 0
    %1846 = vmatpush1.bf16.msra.mxu0 0
    %1847 = vmatprep.subr.bf16.mxu0 0
    %1848 = vmatpush1.bf16.msra.mxu0 0
    %1849 = vmatprep.subr.bf16.mxu0 0
    %1850 = vmatpush1.bf16.msra.mxu0 0
    %1851 = vmatprep.subr.bf16.mxu0 0
    %1852 = vmatpush1.bf16.msra.mxu0 0
    %1853 = vmatprep.subr.bf16.mxu0 0
    %1854 = vmatpush1.bf16.msra.mxu0 0
    %1855 = vmatprep.subr.bf16.mxu0 0
    %1856 = vmatpush1.bf16.msra.mxu0 0
    %1857 = vmatprep.subr.bf16.mxu0 0
    %1858 = vmatpush1.bf16.msra.mxu0 %v537
    %1859 = vmatprep.subr.bf16.mxu0 0
    %1860 = vmatpush1.bf16.msra.mxu0 %v536
    %1861 = vmatprep.subr.bf16.mxu0 0
    %1862 = vmatpush2.bf16.msra.mxu0 0
    %1863 = vmatprep.subr.bf16.mxu0 0
    %1864 = vmatpush2.bf16.msra.mxu0 0
    %1865 = vmatprep.subr.bf16.mxu0 0
    %1866 = vmatpush2.bf16.msra.mxu0 0
    %1867 = vmatprep.subr.bf16.mxu0 0
    %1868 = vmatpush2.bf16.msra.mxu0 0
    %1869 = vmatprep.subr.bf16.mxu0 0
    %1870 = vmatpush2.bf16.msra.mxu0 0
    %1871 = vmatprep.subr.bf16.mxu0 0
    %1872 = vmatpush2.bf16.msra.mxu0 0
    %1873 = vmatprep.subr.bf16.mxu0 0
    %1874 = vmatpush2.bf16.msra.mxu0 0
    %1875 = vmatprep.subr.bf16.mxu0 0
    %1876 = vmatpush2.bf16.msra.mxu0 0
    %1877 = vmatprep.mubr.bf16.mxu0 0
    %1878 = vmatmul.mubr.bf16.gmra.mxu0 %v1799
    %v1879 = vpop.f32.mrf.mxu0
    %v1880 = vadd.f32 0.0, %v1879
    %v1881 = vpop.f32.mrf.mxu0
    %v1882 = vpop.f32.mrf.mxu0
    %v1883 = vpop.f32.mrf.mxu0
    %1884 = vdwg.mxu0
    %v1885 = vadd.f32 %v1844, %v1880
    %s1886 = sadd.s32 48, 128
    %s1887 = scalar_lea.vmem [#allocation2], %s1886
    %v1888 = vld [vmem:[%s1887] sm:$0xff]
    %1889 = vmatprep.subr.bf16.mxu0 0
    %1890 = vmatpush1.bf16.msra.mxu0 0
    %1891 = vmatprep.subr.bf16.mxu0 0
    %1892 = vmatpush1.bf16.msra.mxu0 0
    %1893 = vmatprep.subr.bf16.mxu0 0
    %1894 = vmatpush1.bf16.msra.mxu0 0
    %1895 = vmatprep.subr.bf16.mxu0 0
    %1896 = vmatpush1.bf16.msra.mxu0 0
    %1897 = vmatprep.subr.bf16.mxu0 0
    %1898 = vmatpush1.bf16.msra.mxu0 0
    %1899 = vmatprep.subr.bf16.mxu0 0
    %1900 = vmatpush1.bf16.msra.mxu0 0
    %1901 = vmatprep.subr.bf16.mxu0 0
    %1902 = vmatpush1.bf16.msra.mxu0 %v598
    %1903 = vmatprep.subr.bf16.mxu0 0
    %1904 = vmatpush1.bf16.msra.mxu0 %v597
    %1905 = vmatprep.subr.bf16.mxu0 0
    %1906 = vmatpush2.bf16.msra.mxu0 0
    %1907 = vmatprep.subr.bf16.mxu0 0
    %1908 = vmatpush2.bf16.msra.mxu0 0
    %1909 = vmatprep.subr.bf16.mxu0 0
    %1910 = vmatpush2.bf16.msra.mxu0 0
    %1911 = vmatprep.subr.bf16.mxu0 0
    %1912 = vmatpush2.bf16.msra.mxu0 0
    %1913 = vmatprep.subr.bf16.mxu0 0
    %1914 = vmatpush2.bf16.msra.mxu0 0
    %1915 = vmatprep.subr.bf16.mxu0 0
    %1916 = vmatpush2.bf16.msra.mxu0 0
    %1917 = vmatprep.subr.bf16.mxu0 0
    %1918 = vmatpush2.bf16.msra.mxu0 0
    %1919 = vmatprep.subr.bf16.mxu0 0
    %1920 = vmatpush2.bf16.msra.mxu0 0
    %1921 = vmatprep.mubr.bf16.mxu0 0
    %1922 = vmatmul.mubr.bf16.gmra.mxu0 %v1799
    %v1923 = vpop.f32.mrf.mxu0
    %v1924 = vadd.f32 0.0, %v1923
    %v1925 = vpop.f32.mrf.mxu0
    %v1926 = vpop.f32.mrf.mxu0
    %v1927 = vpop.f32.mrf.mxu0
    %1928 = vdwg.mxu0
    %v1929 = vadd.f32 %v1888, %v1924
    %s1930 = sadd.s32 48, 192
    %s1931 = scalar_lea.vmem [#allocation2], %s1930
    %v1932 = vld [vmem:[%s1931] sm:$0xff]
    %1933 = vmatprep.subr.bf16.mxu0 0
    %1934 = vmatpush1.bf16.msra.mxu0 0
    %1935 = vmatprep.subr.bf16.mxu0 0
    %1936 = vmatpush1.bf16.msra.mxu0 0
    %1937 = vmatprep.subr.bf16.mxu0 0
    %1938 = vmatpush1.bf16.msra.mxu0 0
    %1939 = vmatprep.subr.bf16.mxu0 0
    %1940 = vmatpush1.bf16.msra.mxu0 0
    %1941 = vmatprep.subr.bf16.mxu0 0
    %1942 = vmatpush1.bf16.msra.mxu0 0
    %1943 = vmatprep.subr.bf16.mxu0 0
    %1944 = vmatpush1.bf16.msra.mxu0 0
    %1945 = vmatprep.subr.bf16.mxu0 0
    %1946 = vmatpush1.bf16.msra.mxu0 %v659
    %1947 = vmatprep.subr.bf16.mxu0 0
    %1948 = vmatpush1.bf16.msra.mxu0 %v658
    %1949 = vmatprep.subr.bf16.mxu0 0
    %1950 = vmatpush2.bf16.msra.mxu0 0
    %1951 = vmatprep.subr.bf16.mxu0 0
    %1952 = vmatpush2.bf16.msra.mxu0 0
    %1953 = vmatprep.subr.bf16.mxu0 0
    %1954 = vmatpush2.bf16.msra.mxu0 0
    %1955 = vmatprep.subr.bf16.mxu0 0
    %1956 = vmatpush2.bf16.msra.mxu0 0
    %1957 = vmatprep.subr.bf16.mxu0 0
    %1958 = vmatpush2.bf16.msra.mxu0 0
    %1959 = vmatprep.subr.bf16.mxu0 0
    %1960 = vmatpush2.bf16.msra.mxu0 0
    %1961 = vmatprep.subr.bf16.mxu0 0
    %1962 = vmatpush2.bf16.msra.mxu0 0
    %1963 = vmatprep.subr.bf16.mxu0 0
    %1964 = vmatpush2.bf16.msra.mxu0 0
    %1965 = vmatprep.mubr.bf16.mxu0 0
    %1966 = vmatmul.mubr.bf16.gmra.mxu0 %v1799
    %v1967 = vpop.f32.mrf.mxu0
    %v1968 = vadd.f32 0.0, %v1967
    %v1969 = vpop.f32.mrf.mxu0
    %v1970 = vpop.f32.mrf.mxu0
    %v1971 = vpop.f32.mrf.mxu0
    %1972 = vdwg.mxu0
    %v1973 = vadd.f32 %v1932, %v1968
    %v1974 = vxor.u32 %v1841, 2147483648
    %v1975 = vmul.f32 %v1974, 1.442695
    %v1976 = vpow.pop %v1975
    %v1977 = vadd.f32 %v1976, 1.0
    %v1978 = vrcp.pop %v1977
    %v1979 = vmul.f32 1.0, %v1978
    %v1980 = vxor.u32 %v1885, 2147483648
    %v1981 = vmul.f32 %v1980, 1.442695
    %v1982 = vpow.pop %v1981
    %v1983 = vadd.f32 %v1982, 1.0
    %v1984 = vrcp.pop %v1983
    %v1985 = vmul.f32 1.0, %v1984
    %v1986 = vtanh.pop %v1929
    %v1987 = vxor.u32 %v1973, 2147483648
    %v1988 = vmul.f32 %v1987, 1.442695
    %v1989 = vpow.pop %v1988
    %v1990 = vadd.f32 %v1989, 1.0
    %v1991 = vrcp.pop %v1990
    %v1992 = vmul.f32 1.0, %v1991
    %v1993 = vmul.f32 %v1985, %v1783
    %v1994 = vmul.f32 %v1979, %v1986
    %v1995 = vadd.f32 %v1993, %v1994
    %v1996 = vtanh.pop %v1995
    %v1997 = vmul.f32 %v1992, %v1996
    %s1998 = sadd.s32 %s454, 6
    %v1999 = vstv %s1998
    %vm2000 = vcmp.eq.s32.totalorder %v453, %v1999
    %v2001 = vsel %vm2000, 1, 0
    %2002 = vset.pattern.permute.xlu0 0
    %2003 = vperm.xlu0 %2002, %v2001
    %v2004 = vpop.permute.xlu0 %2003
    %vm2005 = vcmp.eq.s32.totalorder %v2004, 1
    %v2006 = vsel %vm2005, %v1997, %v1794
    %v2007 = vpack.c.bf16 %v1997, %v1997
    %s2008 = scalar_lea.vmem [#allocation2], 56
    %v2009 = vld [vmem:[%s2008] sm:$0xff]
    %v2011 = vsel %vm170, %v2007, 0
    %2013 = vmatprep.subr.bf16.mxu0 0
    %2014 = vmatpush1.bf16.msra.mxu0 0
    %2015 = vmatprep.subr.bf16.mxu0 0
    %2016 = vmatpush1.bf16.msra.mxu0 0
    %2017 = vmatprep.subr.bf16.mxu0 0
    %2018 = vmatpush1.bf16.msra.mxu0 0
    %2019 = vmatprep.subr.bf16.mxu0 0
    %2020 = vmatpush1.bf16.msra.mxu0 0
    %2021 = vmatprep.subr.bf16.mxu0 0
    %2022 = vmatpush1.bf16.msra.mxu0 0
    %2023 = vmatprep.subr.bf16.mxu0 0
    %2024 = vmatpush1.bf16.msra.mxu0 0
    %2025 = vmatprep.subr.bf16.mxu0 0
    %2026 = vmatpush1.bf16.msra.mxu0 %v473
    %2027 = vmatprep.subr.bf16.mxu0 0
    %2028 = vmatpush1.bf16.msra.mxu0 %v472
    %2029 = vmatprep.subr.bf16.mxu0 0
    %2030 = vmatpush2.bf16.msra.mxu0 0
    %2031 = vmatprep.subr.bf16.mxu0 0
    %2032 = vmatpush2.bf16.msra.mxu0 0
    %2033 = vmatprep.subr.bf16.mxu0 0
    %2034 = vmatpush2.bf16.msra.mxu0 0
    %2035 = vmatprep.subr.bf16.mxu0 0
    %2036 = vmatpush2.bf16.msra.mxu0 0
    %2037 = vmatprep.subr.bf16.mxu0 0
    %2038 = vmatpush2.bf16.msra.mxu0 0
    %2039 = vmatprep.subr.bf16.mxu0 0
    %2040 = vmatpush2.bf16.msra.mxu0 0
    %2041 = vmatprep.subr.bf16.mxu0 0
    %2042 = vmatpush2.bf16.msra.mxu0 0
    %2043 = vmatprep.subr.bf16.mxu0 0
    %2044 = vmatpush2.bf16.msra.mxu0 0
    %2045 = vmatprep.mubr.bf16.mxu0 0
    %2046 = vmatmul.mubr.bf16.gmra.mxu0 %v2011
    %v2047 = vpop.f32.mrf.mxu0
    %v2048 = vadd.f32 0.0, %v2047
    %v2049 = vpop.f32.mrf.mxu0
    %v2050 = vpop.f32.mrf.mxu0
    %v2051 = vpop.f32.mrf.mxu0
    %2052 = vdwg.mxu0
    %v2053 = vadd.f32 %v2009, %v2048
    %s2054 = sadd.s32 56, 64
    %s2055 = scalar_lea.vmem [#allocation2], %s2054
    %v2056 = vld [vmem:[%s2055] sm:$0xff]
    %2057 = vmatprep.subr.bf16.mxu0 0
    %2058 = vmatpush1.bf16.msra.mxu0 0
    %2059 = vmatprep.subr.bf16.mxu0 0
    %2060 = vmatpush1.bf16.msra.mxu0 0
    %2061 = vmatprep.subr.bf16.mxu0 0
    %2062 = vmatpush1.bf16.msra.mxu0 0
    %2063 = vmatprep.subr.bf16.mxu0 0
    %2064 = vmatpush1.bf16.msra.mxu0 0
    %2065 = vmatprep.subr.bf16.mxu0 0
    %2066 = vmatpush1.bf16.msra.mxu0 0
    %2067 = vmatprep.subr.bf16.mxu0 0
    %2068 = vmatpush1.bf16.msra.mxu0 0
    %2069 = vmatprep.subr.bf16.mxu0 0
    %2070 = vmatpush1.bf16.msra.mxu0 %v537
    %2071 = vmatprep.subr.bf16.mxu0 0
    %2072 = vmatpush1.bf16.msra.mxu0 %v536
    %2073 = vmatprep.subr.bf16.mxu0 0
    %2074 = vmatpush2.bf16.msra.mxu0 0
    %2075 = vmatprep.subr.bf16.mxu0 0
    %2076 = vmatpush2.bf16.msra.mxu0 0
    %2077 = vmatprep.subr.bf16.mxu0 0
    %2078 = vmatpush2.bf16.msra.mxu0 0
    %2079 = vmatprep.subr.bf16.mxu0 0
    %2080 = vmatpush2.bf16.msra.mxu0 0
    %2081 = vmatprep.subr.bf16.mxu0 0
    %2082 = vmatpush2.bf16.msra.mxu0 0
    %2083 = vmatprep.subr.bf16.mxu0 0
    %2084 = vmatpush2.bf16.msra.mxu0 0
    %2085 = vmatprep.subr.bf16.mxu0 0
    %2086 = vmatpush2.bf16.msra.mxu0 0
    %2087 = vmatprep.subr.bf16.mxu0 0
    %2088 = vmatpush2.bf16.msra.mxu0 0
    %2089 = vmatprep.mubr.bf16.mxu0 0
    %2090 = vmatmul.mubr.bf16.gmra.mxu0 %v2011
    %v2091 = vpop.f32.mrf.mxu0
    %v2092 = vadd.f32 0.0, %v2091
    %v2093 = vpop.f32.mrf.mxu0
    %v2094 = vpop.f32.mrf.mxu0
    %v2095 = vpop.f32.mrf.mxu0
    %2096 = vdwg.mxu0
    %v2097 = vadd.f32 %v2056, %v2092
    %s2098 = sadd.s32 56, 128
    %s2099 = scalar_lea.vmem [#allocation2], %s2098
    %v2100 = vld [vmem:[%s2099] sm:$0xff]
    %2101 = vmatprep.subr.bf16.mxu0 0
    %2102 = vmatpush1.bf16.msra.mxu0 0
    %2103 = vmatprep.subr.bf16.mxu0 0
    %2104 = vmatpush1.bf16.msra.mxu0 0
    %2105 = vmatprep.subr.bf16.mxu0 0
    %2106 = vmatpush1.bf16.msra.mxu0 0
    %2107 = vmatprep.subr.bf16.mxu0 0
    %2108 = vmatpush1.bf16.msra.mxu0 0
    %2109 = vmatprep.subr.bf16.mxu0 0
    %2110 = vmatpush1.bf16.msra.mxu0 0
    %2111 = vmatprep.subr.bf16.mxu0 0
    %2112 = vmatpush1.bf16.msra.mxu0 0
    %2113 = vmatprep.subr.bf16.mxu0 0
    %2114 = vmatpush1.bf16.msra.mxu0 %v598
    %2115 = vmatprep.subr.bf16.mxu0 0
    %2116 = vmatpush1.bf16.msra.mxu0 %v597
    %2117 = vmatprep.subr.bf16.mxu0 0
    %2118 = vmatpush2.bf16.msra.mxu0 0
    %2119 = vmatprep.subr.bf16.mxu0 0
    %2120 = vmatpush2.bf16.msra.mxu0 0
    %2121 = vmatprep.subr.bf16.mxu0 0
    %2122 = vmatpush2.bf16.msra.mxu0 0
    %2123 = vmatprep.subr.bf16.mxu0 0
    %2124 = vmatpush2.bf16.msra.mxu0 0
    %2125 = vmatprep.subr.bf16.mxu0 0
    %2126 = vmatpush2.bf16.msra.mxu0 0
    %2127 = vmatprep.subr.bf16.mxu0 0
    %2128 = vmatpush2.bf16.msra.mxu0 0
    %2129 = vmatprep.subr.bf16.mxu0 0
    %2130 = vmatpush2.bf16.msra.mxu0 0
    %2131 = vmatprep.subr.bf16.mxu0 0
    %2132 = vmatpush2.bf16.msra.mxu0 0
    %2133 = vmatprep.mubr.bf16.mxu0 0
    %2134 = vmatmul.mubr.bf16.gmra.mxu0 %v2011
    %v2135 = vpop.f32.mrf.mxu0
    %v2136 = vadd.f32 0.0, %v2135
    %v2137 = vpop.f32.mrf.mxu0
    %v2138 = vpop.f32.mrf.mxu0
    %v2139 = vpop.f32.mrf.mxu0
    %2140 = vdwg.mxu0
    %v2141 = vadd.f32 %v2100, %v2136
    %s2142 = sadd.s32 56, 192
    %s2143 = scalar_lea.vmem [#allocation2], %s2142
    %v2144 = vld [vmem:[%s2143] sm:$0xff]
    %2145 = vmatprep.subr.bf16.mxu0 0
    %2146 = vmatpush1.bf16.msra.mxu0 0
    %2147 = vmatprep.subr.bf16.mxu0 0
    %2148 = vmatpush1.bf16.msra.mxu0 0
    %2149 = vmatprep.subr.bf16.mxu0 0
    %2150 = vmatpush1.bf16.msra.mxu0 0
    %2151 = vmatprep.subr.bf16.mxu0 0
    %2152 = vmatpush1.bf16.msra.mxu0 0
    %2153 = vmatprep.subr.bf16.mxu0 0
    %2154 = vmatpush1.bf16.msra.mxu0 0
    %2155 = vmatprep.subr.bf16.mxu0 0
    %2156 = vmatpush1.bf16.msra.mxu0 0
    %2157 = vmatprep.subr.bf16.mxu0 0
    %2158 = vmatpush1.bf16.msra.mxu0 %v659
    %2159 = vmatprep.subr.bf16.mxu0 0
    %2160 = vmatpush1.bf16.msra.mxu0 %v658
    %2161 = vmatprep.subr.bf16.mxu0 0
    %2162 = vmatpush2.bf16.msra.mxu0 0
    %2163 = vmatprep.subr.bf16.mxu0 0
    %2164 = vmatpush2.bf16.msra.mxu0 0
    %2165 = vmatprep.subr.bf16.mxu0 0
    %2166 = vmatpush2.bf16.msra.mxu0 0
    %2167 = vmatprep.subr.bf16.mxu0 0
    %2168 = vmatpush2.bf16.msra.mxu0 0
    %2169 = vmatprep.subr.bf16.mxu0 0
    %2170 = vmatpush2.bf16.msra.mxu0 0
    %2171 = vmatprep.subr.bf16.mxu0 0
    %2172 = vmatpush2.bf16.msra.mxu0 0
    %2173 = vmatprep.subr.bf16.mxu0 0
    %2174 = vmatpush2.bf16.msra.mxu0 0
    %2175 = vmatprep.subr.bf16.mxu0 0
    %2176 = vmatpush2.bf16.msra.mxu0 0
    %2177 = vmatprep.mubr.bf16.mxu0 0
    %2178 = vmatmul.mubr.bf16.gmra.mxu0 %v2011
    %v2179 = vpop.f32.mrf.mxu0
    %v2180 = vadd.f32 0.0, %v2179
    %v2181 = vpop.f32.mrf.mxu0
    %v2182 = vpop.f32.mrf.mxu0
    %v2183 = vpop.f32.mrf.mxu0
    %2184 = vdwg.mxu0
    %v2185 = vadd.f32 %v2144, %v2180
    %v2186 = vxor.u32 %v2053, 2147483648
    %v2187 = vmul.f32 %v2186, 1.442695
    %v2188 = vpow.pop %v2187
    %v2189 = vadd.f32 %v2188, 1.0
    %v2190 = vrcp.pop %v2189
    %v2191 = vmul.f32 1.0, %v2190
    %v2192 = vxor.u32 %v2097, 2147483648
    %v2193 = vmul.f32 %v2192, 1.442695
    %v2194 = vpow.pop %v2193
    %v2195 = vadd.f32 %v2194, 1.0
    %v2196 = vrcp.pop %v2195
    %v2197 = vmul.f32 1.0, %v2196
    %v2198 = vtanh.pop %v2141
    %v2199 = vxor.u32 %v2185, 2147483648
    %v2200 = vmul.f32 %v2199, 1.442695
    %v2201 = vpow.pop %v2200
    %v2202 = vadd.f32 %v2201, 1.0
    %v2203 = vrcp.pop %v2202
    %v2204 = vmul.f32 1.0, %v2203
    %v2205 = vmul.f32 %v2197, %v1995
    %v2206 = vmul.f32 %v2191, %v2198
    %v2207 = vadd.f32 %v2205, %v2206
    %v2208 = vtanh.pop %v2207
    %v2209 = vmul.f32 %v2204, %v2208
    %s2210 = sadd.s32 %s454, 7
    %v2211 = vstv %s2210
    %vm2212 = vcmp.eq.s32.totalorder %v453, %v2211
    %v2213 = vsel %vm2212, 1, 0
    %2214 = vset.pattern.permute.xlu0 0
    %2215 = vperm.xlu0 %2214, %v2213
    %v2216 = vpop.permute.xlu0 %2215
    %vm2217 = vcmp.eq.s32.totalorder %v2216, 1
    %v2218 = vsel %vm2217, %v2209, %v2006
    %2219 = vst.msk [vmem:[#allocation3] sm:$0xff] %vm170, %v2209
    %2220 = vst.msk [vmem:[#allocation4] sm:$0xff] %vm170, %v2207
    %2221 = vst.msk [vmem:[#allocation5] sm:$0xff] %vm170, %v2218
    // Predicated region
    $region38: #{tpu_custom_call.1} parent=1 // pred_check
      %p2222 = pneg %p41
    $region39: #{tpu_custom_call.1} parent=1 // pred_check_branch
      %2224 = sbr.rel (%p2222) target = $region41
    $region40: #{tpu_custom_call.1} parent=1 // pred_region
      %v2225 = vld [vmem:[#allocation5] sm:$0xff]
      %v2226 = vmax.f32 %v2225, 0.0
      %v2227 = vld [vmem:[%s5] sm:$0xff]
      %v2228 = vld [vmem:[%s5 + $0x8] sm:$0xff]
      %v2229 = vld [vmem:[%s5 + $0x10] sm:$0xff]
      %v2230 = vld [vmem:[%s5 + $0x18] sm:$0xff]
      %v2231 = vld [vmem:[%s6] sm:$0x1]
      %v2233 = vlaneseq
      %v2234 = vshrl.u32 %v2233, 7
      %v2235 = vsub.s32 0, %v2234
      %v2236 = vrot.slane %v2231, %v2235
      %v2239 = vsel %vm170, %v2226, 0
      %2241 = vmatprep.subr.mxu0 0.0
      %2242 = vmatpush1.msra.mxu0 0.0
      %2243 = vmatprep.subr.mxu0 0.0
      %2244 = vmatpush1.msra.mxu0 0.0
      %2245 = vmatprep.subr.mxu0 0.0
      %2246 = vmatpush1.msra.mxu0 0.0
      %2247 = vmatprep.subr.mxu0 0.0
      %2248 = vmatpush1.msra.mxu0 0.0
      %2249 = vmatprep.subr.mxu0 0.0
      %2250 = vmatpush1.msra.mxu0 0.0
      %2251 = vmatprep.subr.mxu0 0.0
      %2252 = vmatpush1.msra.mxu0 0.0
      %2253 = vmatprep.subr.mxu0 0.0
      %2254 = vmatpush1.msra.mxu0 0.0
      %2255 = vmatprep.subr.mxu0 0.0
      %2256 = vmatpush1.msra.mxu0 0.0
      %2257 = vmatprep.subr.mxu0 0.0
      %2258 = vmatpush1.msra.mxu0 0.0
      %2259 = vmatprep.subr.mxu0 0.0
      %2260 = vmatpush1.msra.mxu0 0.0
      %2261 = vmatprep.subr.mxu0 0.0
      %2262 = vmatpush1.msra.mxu0 0.0
      %2263 = vmatprep.subr.mxu0 0.0
      %2264 = vmatpush1.msra.mxu0 0.0
      %2265 = vmatprep.subr.mxu0 0.0
      %2266 = vmatpush1.msra.mxu0 %v2230
      %2267 = vmatprep.subr.mxu0 0.0
      %2268 = vmatpush1.msra.mxu0 %v2229
      %2269 = vmatprep.subr.mxu0 0.0
      %2270 = vmatpush1.msra.mxu0 %v2228
      %2271 = vmatprep.subr.mxu0 0.0
      %2272 = vmatpush1.msra.mxu0 %v2227
      %2273 = vmatprep.subr.mxu0 0.0
      %2274 = vmatpush2.msra.mxu0 0.0
      %2275 = vmatprep.subr.mxu0 0.0
      %2276 = vmatpush2.msra.mxu0 0.0
      %2277 = vmatprep.subr.mxu0 0.0
      %2278 = vmatpush2.msra.mxu0 0.0
      %2279 = vmatprep.subr.mxu0 0.0
      %2280 = vmatpush2.msra.mxu0 0.0
      %2281 = vmatprep.subr.mxu0 0.0
      %2282 = vmatpush2.msra.mxu0 0.0
      %2283 = vmatprep.subr.mxu0 0.0
      %2284 = vmatpush2.msra.mxu0 0.0
      %2285 = vmatprep.subr.mxu0 0.0
      %2286 = vmatpush2.msra.mxu0 0.0
      %2287 = vmatprep.subr.mxu0 0.0
      %2288 = vmatpush2.msra.mxu0 0.0
      %2289 = vmatprep.subr.mxu0 0.0
      %2290 = vmatpush2.msra.mxu0 0.0
      %2291 = vmatprep.subr.mxu0 0.0
      %2292 = vmatpush2.msra.mxu0 0.0
      %2293 = vmatprep.subr.mxu0 0.0
      %2294 = vmatpush2.msra.mxu0 0.0
      %2295 = vmatprep.subr.mxu0 0.0
      %2296 = vmatpush2.msra.mxu0 0.0
      %2297 = vmatprep.subr.mxu0 0.0
      %2298 = vmatpush2.msra.mxu0 0.0
      %2299 = vmatprep.subr.mxu0 0.0
      %2300 = vmatpush2.msra.mxu0 0.0
      %2301 = vmatprep.subr.mxu0 0.0
      %2302 = vmatpush2.msra.mxu0 0.0
      %2303 = vmatprep.subr.mxu0 0.0
      %2304 = vmatpush2.msra.mxu0 0.0
      %2305 = vmatprep.mubr.f32.mxu0 0.0
      %2306 = vmatmul.mubr.f32.gmra.mxu0 %v2239
      %v2307 = vpop.f32.mrf.mxu0
      %v2308 = vadd.f32 %v2236, %v2307
      %v2309 = vpop.f32.mrf.mxu0
      %2310 = vdwg.mxu0
      %2312 = vrot.lane.b32.xlu0 %v2308, 127
      %v2313 = vpop.permute.xlu0 %2312
      %v2315 = vmax.f32 %v2308, %v2313
      %v2316 = vsub.f32 %v2308, %v2315
      %v2317 = vmul.f32 %v2316, 1.442695
      %v2318 = vpow.pop %v2317
      %2320 = vrot.lane.b32.xlu0 %v2315, 1
      %v2321 = vpop.permute.xlu0 %2320
      %v2323 = vsub.f32 %v2308, %v2321
      %v2324 = vmul.f32 %v2323, 1.442695
      %v2325 = vpow.pop %v2324
      %2327 = vrot.lane.b32.xlu0 %v2325, 127
      %v2328 = vpop.permute.xlu0 %2327
      %v2330 = vadd.f32 %v2318, %v2328
      %v2331 = vlog2.pop %v2330
      %v2332 = vmul.f32 %v2331, 0.6931472
      %v2333 = vadd.f32 %v2315, %v2332
      %2335 = vset.pattern.permute.xlu0 0
      %2336 = vperm.xlu0 %2335, %v2333
      %v2337 = vpop.permute.xlu0 %2336
      %v2339 = vsub.f32 %v2308, %v2337
      %vm2340 = vcmask 15360
      %2341 = vst.msk [vmem:[%s7] sm:$0xff] %vm2340, %v2339
    $region41: #{tpu_custom_call.1} parent=1 // pred_fallthru
      _
    // Predicated region
    $region42: #{tpu_custom_call.1} parent=1 // pred_check
      _
    $region43: #{tpu_custom_call.1} parent=1 // pred_check_branch
      %2343 = sbr.rel (0) target = $region45
    $region44: #{tpu_custom_call.1} parent=1 // pred_region
      _
    $region45: #{tpu_custom_call.1} parent=1 // pred_fallthru
      _
    // Predicated region
    $region46: #{tpu_custom_call.1} parent=1 // pred_check
      _
    $region47: #{tpu_custom_call.1} parent=1 // pred_check_branch
      %2345 = sbr.rel (0) target = $region49
    $region48: #{tpu_custom_call.1} parent=1 // pred_region
      _
    $region49: #{tpu_custom_call.1} parent=1 // pred_fallthru
      _
    %2346 = vsyncpa [#allocation7], 1

</llo_original>
